<compile_context>
chip_gen: v7x
topology: tpu7x:2x2x1
jax: 0.10.0
libtpu: 0.0.40
codegen_flags: <defaults>
</compile_context>

<pallas_src>
import functools

import jax
import jax.numpy as jnp
from jax.experimental import pallas as pl
from jax.experimental.pallas import tpu as pltpu

_LANES = 128
_EPS = 1e-5
# tile_m = 1024 lanes per grid step: with Kpad<=256 bf16 + f32 acc this is
# < ~2 MiB double-buffered, comfortably inside scoped VMEM on v5e/v6e/v7x.
_TILE_M = 1024
_COMPILER_PARAMS = pltpu.CompilerParams(
    dimension_semantics=("parallel",),          # megacore sharding on v7x
    vmem_limit_bytes=48 * 1024 * 1024,          # > default scoped limit, < v7x physical
)


def _round_up(x, m):
    return (x + m - 1) // m * m


# ---------------------------------------------------------------------------
# Pass A kernel: GEMM (conv as transposed im2col) + bias + per-tile BN partials
# ---------------------------------------------------------------------------
def _gemm_stats_kernel(w_ref, b_ref, p_ref, acc_ref, sum_ref, sq_ref):
    # w_ref:  (Cpad, Kpad)   bf16   (resident)
    # b_ref:  (Cpad, 1)      f32    (resident)
    # p_ref:  (Kpad, tile_m) bf16   (streamed)
    # acc_ref:(Cpad, tile_m) f32    pre-BN activations (lane-dense)
    # sum_ref/sq_ref: (1, Cpad, 128) f32 per-tile per-channel partial sums
    acc = jnp.dot(w_ref[...], p_ref[...], preferred_element_type=jnp.float32)
    acc = acc + b_ref[...]                       # conv bias (lane broadcast)
    acc_ref[...] = acc

    cpad = acc.shape[0]
    s = jnp.sum(acc, axis=1, keepdims=True)      # lane-axis reduce -> (Cpad, 1)
    q = jnp.sum(acc * acc, axis=1, keepdims=True)
    sum_ref[0] = jnp.broadcast_to(s, (cpad, _LANES))
    sq_ref[0] = jnp.broadcast_to(q, (cpad, _LANES))


def _call_gemm_stats(wt, b_p, pt, tile_m):
    cpad, kpad = wt.shape
    _, mpad = pt.shape
    nt = mpad // tile_m
    grid_spec = pltpu.PrefetchScalarGridSpec(
        num_scalar_prefetch=0,
        grid=(nt,),
        in_specs=[
            pl.BlockSpec((cpad, kpad), lambda i: (0, 0)),      # weights
            pl.BlockSpec((cpad, 1), lambda i: (0, 0)),         # bias
            pl.BlockSpec((kpad, tile_m), lambda i: (0, i)),    # patchesT tile
        ],
        out_specs=(
            pl.BlockSpec((cpad, tile_m), lambda i: (0, i)),    # pre-BN acts
            pl.BlockSpec((1, cpad, _LANES), lambda i: (i, 0, 0)),
            pl.BlockSpec((1, cpad, _LANES), lambda i: (i, 0, 0)),
        ),
    )
    return pl.pallas_call(
        _gemm_stats_kernel,
        out_shape=(
            jax.ShapeDtypeStruct((cpad, mpad), jnp.float32),
            jax.ShapeDtypeStruct((nt, cpad, _LANES), jnp.float32),
            jax.ShapeDtypeStruct((nt, cpad, _LANES), jnp.float32),
        ),
        grid_spec=grid_spec,
        compiler_params=_COMPILER_PARAMS,
    )(wt, b_p, pt)


# ---------------------------------------------------------------------------
# Pass B kernel: apply BatchNorm scale/shift + ReLU (lane-dense)
# ---------------------------------------------------------------------------
def _bn_relu_kernel(scale_ref, shift_ref, acc_ref, o_ref):
    # scale/shift: (Cpad, 1) f32   acc: (Cpad, tile_m) f32
    y = acc_ref[...] * scale_ref[...] + shift_ref[...]
    o_ref[...] = jnp.maximum(y, 0.0).astype(o_ref.dtype)


def _call_bn_relu(acc, scale, shift, tile_m, out_dtype):
    cpad, mpad = acc.shape
    nt = mpad // tile_m
    grid_spec = pltpu.PrefetchScalarGridSpec(
        num_scalar_prefetch=0,
        grid=(nt,),
        in_specs=[
            pl.BlockSpec((cpad, 1), lambda i: (0, 0)),
            pl.BlockSpec((cpad, 1), lambda i: (0, 0)),
            pl.BlockSpec((cpad, tile_m), lambda i: (0, i)),
        ],
        out_specs=pl.BlockSpec((cpad, tile_m), lambda i: (0, i)),
    )
    return pl.pallas_call(
        _bn_relu_kernel,
        out_shape=jax.ShapeDtypeStruct((cpad, mpad), out_dtype),
        grid_spec=grid_spec,
        compiler_params=_COMPILER_PARAMS,
    )(scale, shift, acc)


# ---------------------------------------------------------------------------
# Glue: transposed im2col, weight repack, global BN stats (plain JAX)
# ---------------------------------------------------------------------------
def _conv3d_bn_relu(x_ncdhw, w_oidhw, b, gamma, beta, k, stride, out_dtype):
    n, cin, d, h, w = x_ncdhw.shape
    cout = w_oidhw.shape[0]
    pad = k // 2                                       # int(kernel_size / 2)
    do = (d + 2 * pad - k) // stride + 1
    ho = (h + 2 * pad - k) // stride + 1
    wo = (w + 2 * pad - k) // stride + 1
    m = n * do * ho * wo
    kk = k * k * k * cin

    cpad = _round_up(cout, 8)                          # sublane multiple
    kpad = _round_up(kk, _LANES)                       # MXU-aligned contraction
    tile_m = min(_TILE_M, _round_up(m, _LANES))
    mpad = _round_up(m, tile_m)

    # ---- transposed im2col: rows = (tap, cin), cols = (n, do, ho, wo) -----
    xb = x_ncdhw.astype(jnp.bfloat16)
    xp = jnp.pad(xb, ((0, 0), (0, 0), (pad, pad), (pad, pad), (pad, pad)))
    cols = []
    for kd in range(k):
        for kh in range(k):
            for kw in range(k):
                cols.append(
                    xp[:, :,
                       kd:kd + stride * do:stride,
                       kh:kh + stride * ho:stride,
                       kw:kw + stride * wo:stride])
    pt = jnp.stack(cols, axis=0)                       # (k^3, N, Cin, Do, Ho, Wo)
    pt = jnp.transpose(pt, (0, 2, 1, 3, 4, 5))         # (k^3, Cin, N, Do, Ho, Wo)
    pt = pt.reshape(kk, m)
    pt = jnp.pad(pt, ((0, kpad - kk), (0, mpad - m)))  # zero-pad K and M

    # ---- weights / per-channel params, padded -----------------------------
    # (Cout, Cin, kd, kh, kw) -> (Cout, kd, kh, kw, Cin) -> (Cout, K)
    wt = jnp.transpose(w_oidhw, (0, 2, 3, 4, 1)).reshape(cout, kk)
    wt = jnp.pad(wt, ((0, cpad - cout), (0, kpad - kk))).astype(jnp.bfloat16)
    b_p = jnp.pad(b.astype(jnp.float32), (0, cpad - cout)).reshape(cpad, 1)
    g_p = jnp.pad(gamma.astype(jnp.float32), (0, cpad - cout))
    be_p = jnp.pad(beta.astype(jnp.float32), (0, cpad - cout))

    # ---- pass A: GEMM + bias + per-tile partial sums ----------------------
    acc, tsum, tsq = _call_gemm_stats(wt, b_p, pt, tile_m)

    # ---- global BN stats (training mode, biased variance, eps=1e-5) -------
    ch_sum = jnp.sum(tsum[:, :, 0], axis=0)            # (Cpad,)
    ch_sq = jnp.sum(tsq[:, :, 0], axis=0)
    # Zero-padded M columns contribute exactly `bias` per column; remove them.
    n_pad_cols = mpad - m
    bvec = b_p[:, 0]
    ch_sum = ch_sum - n_pad_cols * bvec
    ch_sq = ch_sq - n_pad_cols * bvec * bvec
    mean = ch_sum / m
    var = jnp.maximum(ch_sq / m - mean * mean, 0.0)
    scale = g_p * jax.lax.rsqrt(var + _EPS)            # (Cpad,)
    shift = be_p - mean * scale

    # ---- pass B: scale/shift/ReLU ------------------------------------------
    y = _call_bn_relu(acc, scale.reshape(cpad, 1), shift.reshape(cpad, 1),
                      tile_m, out_dtype)

    # slice padding off BEFORE reshaping back to NCDHW
    y = y[:cout, :m].reshape(cout, n, do, ho, wo)
    return jnp.transpose(y, (1, 0, 2, 3, 4))           # (N, Cout, Do, Ho, Wo)


@functools.partial(jax.jit, static_argnames=("kernel_size", "stride"))
def double_conv_forward(x_ncdhw, params, kernel_size=3, stride=1):
    """Equivalent of DoubleConv.forward for NCDHW float32 input."""
    w1, b1, g1, be1, w2, b2, g2, be2 = params
    # inter-conv activation in bf16 (halves HBM traffic of conv2's im2col)
    y = _conv3d_bn_relu(x_ncdhw, w1, b1, g1, be1, kernel_size, stride,
                        out_dtype=jnp.bfloat16)
    y = _conv3d_bn_relu(y, w2, b2, g2, be2, 3, 1, out_dtype=jnp.float32)
    return y


# ---------------------------------------------------------------------------
# Pure-JAX reference (lax conv, NCDHW, f32) for the sanity check
# ---------------------------------------------------------------------------
def _reference(x, params, kernel_size=3, stride=1):
    w1, b1, g1, be1, w2, b2, g2, be2 = params
    dn = ("NCDHW", "OIDHW", "NCDHW")

    def conv(x, w, b, k, s):
        p = k // 2
        y = jax.lax.conv_general_dilated(
            x, w, window_strides=(s, s, s),
            padding=((p, p), (p, p), (p, p)),
            dimension_numbers=dn, precision=jax.lax.Precision.HIGHEST)
        return y + b[None, :, None, None, None]

    def bn_relu(y, g, be):
        mean = jnp.mean(y, axis=(0, 2, 3, 4), keepdims=True)
        var = jnp.mean((y - mean) ** 2, axis=(0, 2, 3, 4), keepdims=True)
        yhat = (y - mean) * jax.lax.rsqrt(var + _EPS)
        return jnp.maximum(yhat * g[None, :, None, None, None]
                           + be[None, :, None, None, None], 0.0)

    y = bn_relu(conv(x, w1, b1, kernel_size, stride), g1, be1)
    return bn_relu(conv(y, w2, b2, 3, 1), g2, be2)


if __name__ == "__main__":
    in_ch, out_ch = 4, 8
    n, d, h, w = 2, 16, 16, 16

    key = jax.random.PRNGKey(0)
    k1, k2, k3, k4, k5 = jax.random.split(key, 5)

    # Deterministic parameter init (module __init__ shapes).
    w1 = 0.1 * jax.random.normal(k1, (out_ch, in_ch, 3, 3, 3), jnp.float32)
    b1 = 0.1 * jax.random.normal(k2, (out_ch,), jnp.float32)
    g1 = jnp.ones((out_ch,), jnp.float32)           # BatchNorm weight init = 1
    be1 = jnp.zeros((out_ch,), jnp.float32)         # BatchNorm bias  init = 0
    w2 = 0.1 * jax.random.normal(k3, (out_ch, out_ch, 3, 3, 3), jnp.float32)
    b2 = 0.1 * jax.random.normal(k4, (out_ch,), jnp.float32)
    g2 = jnp.ones((out_ch,), jnp.float32)
    be2 = jnp.zeros((out_ch,), jnp.float32)
    params = (w1, b1, g1, be1, w2, b2, g2, be2)

    x = jax.random.normal(k5, (n, in_ch, d, h, w), jnp.float32)   # NCDHW

    out = double_conv_forward(x, params)
    out = jax.block_until_ready(out)
    assert out.shape == (n, out_ch, d, h, w), out.shape

    ref = jax.block_until_ready(_reference(x, params))
    max_diff = float(jnp.max(jnp.abs(out - ref)))
    mean_diff = float(jnp.mean(jnp.abs(out - ref)))
    # bf16 MXU operands with f32 accumulation: per-element error ~O(1e-3);
    # thresholds chosen accordingly (f32-only path would be ~1e-5).
    assert max_diff < 5e-2, f"max mismatch vs reference: {max_diff}"
    assert mean_diff < 1e-2, f"mean mismatch vs reference: {mean_diff}"

    print("KERNEL_OK")
</pallas_src>

<mosaic_0001>
module attributes {stable_mosaic.version = 11 : i64} {
  func.func @_gemm_stats_kernel(%arg0: i32, %arg1: memref<8x128xbf16, #tpu.memory_space<vmem>>, %arg2: memref<8x1xf32, #tpu.memory_space<vmem>>, %arg3: memref<128x1024xbf16, #tpu.memory_space<vmem>>, %arg4: memref<8x1024xf32, #tpu.memory_space<vmem>>, %arg5: memref<1x8x128xf32, #tpu.memory_space<vmem>>, %arg6: memref<1x8x128xf32, #tpu.memory_space<vmem>>) attributes {dimension_semantics = [#tpu.dimension_semantics<parallel>], iteration_bounds = array<i64: 8>, scalar_prefetch = 0 : i64, scratch_operands = 0 : i64, tpu.core_type = #tpu.core_type<tc>, window_params = [{pipeline_mode = #tpu.pipeline_mode<synchronous>, transform_indices = @transform_0, window_bounds = array<i64: 8, 128>}, {pipeline_mode = #tpu.pipeline_mode<synchronous>, transform_indices = @transform_1, window_bounds = array<i64: 8, 1>}, {transform_indices = @transform_2, window_bounds = array<i64: 128, 1024>}, {transform_indices = @transform_3, window_bounds = array<i64: 8, 1024>}, {transform_indices = @transform_4, window_bounds = array<i64: 1, 8, 128>}, {transform_indices = @transform_5, window_bounds = array<i64: 1, 8, 128>}]} {
    %c0 = arith.constant 0 : index
    %c0_0 = arith.constant 0 : index
    %0 = vector.load %arg1[%c0, %c0_0] : memref<8x128xbf16, #tpu.memory_space<vmem>>, vector<8x128xbf16>
    %c0_1 = arith.constant 0 : index
    %c0_2 = arith.constant 0 : index
    %1 = vector.load %arg3[%c0_1, %c0_2] : memref<128x1024xbf16, #tpu.memory_space<vmem>>, vector<128x1024xbf16>
    %cst = arith.constant dense<0.000000e+00> : vector<8x1024xf32>
    %2 = tpu.matmul %0, %1, %cst {dimension_numbers = #tpu.dot_dimension_numbers<[1], [0], [0], [1], [0, 0, 1, 1], [], []>} : vector<8x128xbf16>, vector<128x1024xbf16>, vector<8x1024xf32> -> vector<8x1024xf32>
    %c0_3 = arith.constant 0 : index
    %c0_4 = arith.constant 0 : index
    %3 = vector.load %arg2[%c0_3, %c0_4] : memref<8x1xf32, #tpu.memory_space<vmem>>, vector<8x1xf32>
    %4 = vector.broadcast %3 : vector<8x1xf32> to vector<8x1024xf32>
    %5 = arith.addf %2, %4 : vector<8x1024xf32>
    %c0_5 = arith.constant 0 : index
    %c0_6 = arith.constant 0 : index
    %6 = vector.load %arg4[%c0_5, %c0_6] : memref<8x1024xf32, #tpu.memory_space<vmem>>, vector<8x1024xf32>
    tpu.vector_store %arg4[%c0_5, %c0_6], %5 {strides = array<i32>} : memref<8x1024xf32, #tpu.memory_space<vmem>>, vector<8x1024xf32>,
    %cst_7 = arith.constant dense<0.000000e+00> : vector<8xf32>
    %7 = vector.multi_reduction <add>, %5, %cst_7 [1] : vector<8x1024xf32> to vector<8xf32>
    %8 = vector.shape_cast %7 : vector<8xf32> to vector<8x1xf32>
    %9 = arith.mulf %5, %5 : vector<8x1024xf32>
    %cst_8 = arith.constant dense<0.000000e+00> : vector<8xf32>
    %10 = vector.multi_reduction <add>, %9, %cst_8 [1] : vector<8x1024xf32> to vector<8xf32>
    %11 = vector.shape_cast %10 : vector<8xf32> to vector<8x1xf32>
    %12 = vector.shape_cast %8 : vector<8x1xf32> to vector<8x1xf32>
    %13 = vector.broadcast %12 : vector<8x1xf32> to vector<8x128xf32>
    %c0_9 = arith.constant 0 : index
    %c0_10 = arith.constant 0 : index
    %c0_11 = arith.constant 0 : index
    %14 = vector.load %arg5[%c0_9, %c0_10, %c0_11] : memref<1x8x128xf32, #tpu.memory_space<vmem>>, vector<1x8x128xf32>
    %15 = vector.shape_cast %14 : vector<1x8x128xf32> to vector<8x128xf32>
    %16 = vector.shape_cast %13 : vector<8x128xf32> to vector<1x8x128xf32>
    tpu.vector_store %arg5[%c0_9, %c0_10, %c0_11], %16 {strides = array<i32>} : memref<1x8x128xf32, #tpu.memory_space<vmem>>, vector<1x8x128xf32>,
    %17 = vector.shape_cast %11 : vector<8x1xf32> to vector<8x1xf32>
    %18 = vector.broadcast %17 : vector<8x1xf32> to vector<8x128xf32>
    %c0_12 = arith.constant 0 : index
    %c0_13 = arith.constant 0 : index
    %c0_14 = arith.constant 0 : index
    %19 = vector.load %arg6[%c0_12, %c0_13, %c0_14] : memref<1x8x128xf32, #tpu.memory_space<vmem>>, vector<1x8x128xf32>
    %20 = vector.shape_cast %19 : vector<1x8x128xf32> to vector<8x128xf32>
    %21 = vector.shape_cast %18 : vector<8x128xf32> to vector<1x8x128xf32>
    tpu.vector_store %arg6[%c0_12, %c0_13, %c0_14], %21 {strides = array<i32>} : memref<1x8x128xf32, #tpu.memory_space<vmem>>, vector<1x8x128xf32>,
    return
  }
  func.func @transform_0(%arg0: i32) -> (i32, i32) {
    %c0_i32 = arith.constant 0 : i32
    %c0_i32_0 = arith.constant 0 : i32
    %c0_i32_1 = arith.constant 0 : i32
    return %c0_i32, %c0_i32_0 : i32, i32
  }
  func.func @transform_1(%arg0: i32) -> (i32, i32) {
    %c0_i32 = arith.constant 0 : i32
    %c0_i32_0 = arith.constant 0 : i32
    %c0_i32_1 = arith.constant 0 : i32
    return %c0_i32, %c0_i32_0 : i32, i32
  }
  func.func @transform_2(%arg0: i32) -> (i32, i32) {
    %c0_i32 = arith.constant 0 : i32
    %c0_i32_0 = arith.constant 0 : i32
    return %c0_i32, %arg0 : i32, i32
  }
  func.func @transform_3(%arg0: i32) -> (i32, i32) {
    %c0_i32 = arith.constant 0 : i32
    %c0_i32_0 = arith.constant 0 : i32
    return %c0_i32, %arg0 : i32, i32
  }
  func.func @transform_4(%arg0: i32) -> (i32, i32, i32) {
    %c0_i32 = arith.constant 0 : i32
    %c0_i32_0 = arith.constant 0 : i32
    %c0_i32_1 = arith.constant 0 : i32
    return %arg0, %c0_i32, %c0_i32_0 : i32, i32, i32
  }
  func.func @transform_5(%arg0: i32) -> (i32, i32, i32) {
    %c0_i32 = arith.constant 0 : i32
    %c0_i32_0 = arith.constant 0 : i32
    %c0_i32_1 = arith.constant 0 : i32
    return %arg0, %c0_i32, %c0_i32_0 : i32, i32, i32
  }
}

module attributes {stable_mosaic.version = 11 : i64} {
  func.func @_bn_relu_kernel(%arg0: i32, %arg1: memref<8x1xf32, #tpu.memory_space<vmem>>, %arg2: memref<8x1xf32, #tpu.memory_space<vmem>>, %arg3: memref<8x1024xf32, #tpu.memory_space<vmem>>, %arg4: memref<8x1024xbf16, #tpu.memory_space<vmem>>) attributes {dimension_semantics = [#tpu.dimension_semantics<parallel>], iteration_bounds = array<i64: 8>, scalar_prefetch = 0 : i64, scratch_operands = 0 : i64, tpu.core_type = #tpu.core_type<tc>, window_params = [{pipeline_mode = #tpu.pipeline_mode<synchronous>, transform_indices = @transform_0, window_bounds = array<i64: 8, 1>}, {pipeline_mode = #tpu.pipeline_mode<synchronous>, transform_indices = @transform_1, window_bounds = array<i64: 8, 1>}, {transform_indices = @transform_2, window_bounds = array<i64: 8, 1024>}, {transform_indices = @transform_3, window_bounds = array<i64: 8, 1024>}]} {
    %c0 = arith.constant 0 : index
    %c0_0 = arith.constant 0 : index
    %0 = vector.load %arg3[%c0, %c0_0] : memref<8x1024xf32, #tpu.memory_space<vmem>>, vector<8x1024xf32>
    %c0_1 = arith.constant 0 : index
    %c0_2 = arith.constant 0 : index
    %1 = vector.load %arg1[%c0_1, %c0_2] : memref<8x1xf32, #tpu.memory_space<vmem>>, vector<8x1xf32>
    %2 = vector.broadcast %1 : vector<8x1xf32> to vector<8x1024xf32>
    %3 = arith.mulf %0, %2 : vector<8x1024xf32>
    %c0_3 = arith.constant 0 : index
    %c0_4 = arith.constant 0 : index
    %4 = vector.load %arg2[%c0_3, %c0_4] : memref<8x1xf32, #tpu.memory_space<vmem>>, vector<8x1xf32>
    %5 = vector.broadcast %4 : vector<8x1xf32> to vector<8x1024xf32>
    %6 = arith.addf %3, %5 : vector<8x1024xf32>
    %cst = arith.constant 0.000000e+00 : f32
    %7 = vector.broadcast %cst : f32 to vector<8x1024xf32>
    %8 = arith.maximumf %6, %7 : vector<8x1024xf32>
    %9 = arith.truncf %8 : vector<8x1024xf32> to vector<8x1024xbf16>
    %c0_5 = arith.constant 0 : index
    %c0_6 = arith.constant 0 : index
    %10 = vector.load %arg4[%c0_5, %c0_6] : memref<8x1024xbf16, #tpu.memory_space<vmem>>, vector<8x1024xbf16>
    tpu.vector_store %arg4[%c0_5, %c0_6], %9 {strides = array<i32>} : memref<8x1024xbf16, #tpu.memory_space<vmem>>, vector<8x1024xbf16>,
    return
  }
  func.func @transform_0(%arg0: i32) -> (i32, i32) {
    %c0_i32 = arith.constant 0 : i32
    %c0_i32_0 = arith.constant 0 : i32
    %c0_i32_1 = arith.constant 0 : i32
    return %c0_i32, %c0_i32_0 : i32, i32
  }
  func.func @transform_1(%arg0: i32) -> (i32, i32) {
    %c0_i32 = arith.constant 0 : i32
    %c0_i32_0 = arith.constant 0 : i32
    %c0_i32_1 = arith.constant 0 : i32
    return %c0_i32, %c0_i32_0 : i32, i32
  }
  func.func @transform_2(%arg0: i32) -> (i32, i32) {
    %c0_i32 = arith.constant 0 : i32
    %c0_i32_0 = arith.constant 0 : i32
    return %c0_i32, %arg0 : i32, i32
  }
  func.func @transform_3(%arg0: i32) -> (i32, i32) {
    %c0_i32 = arith.constant 0 : i32
    %c0_i32_0 = arith.constant 0 : i32
    return %c0_i32, %arg0 : i32, i32
  }
}

module attributes {stable_mosaic.version = 11 : i64} {
  func.func @_gemm_stats_kernel(%arg0: i32, %arg1: memref<8x256xbf16, #tpu.memory_space<vmem>>, %arg2: memref<8x1xf32, #tpu.memory_space<vmem>>, %arg3: memref<256x1024xbf16, #tpu.memory_space<vmem>>, %arg4: memref<8x1024xf32, #tpu.memory_space<vmem>>, %arg5: memref<1x8x128xf32, #tpu.memory_space<vmem>>, %arg6: memref<1x8x128xf32, #tpu.memory_space<vmem>>) attributes {dimension_semantics = [#tpu.dimension_semantics<parallel>], iteration_bounds = array<i64: 8>, scalar_prefetch = 0 : i64, scratch_operands = 0 : i64, tpu.core_type = #tpu.core_type<tc>, window_params = [{pipeline_mode = #tpu.pipeline_mode<synchronous>, transform_indices = @transform_0, window_bounds = array<i64: 8, 256>}, {pipeline_mode = #tpu.pipeline_mode<synchronous>, transform_indices = @transform_1, window_bounds = array<i64: 8, 1>}, {transform_indices = @transform_2, window_bounds = array<i64: 256, 1024>}, {transform_indices = @transform_3, window_bounds = array<i64: 8, 1024>}, {transform_indices = @transform_4, window_bounds = array<i64: 1, 8, 128>}, {transform_indices = @transform_5, window_bounds = array<i64: 1, 8, 128>}]} {
    %c0 = arith.constant 0 : index
    %c0_0 = arith.constant 0 : index
    %0 = vector.load %arg1[%c0, %c0_0] : memref<8x256xbf16, #tpu.memory_space<vmem>>, vector<8x256xbf16>
    %c0_1 = arith.constant 0 : index
    %c0_2 = arith.constant 0 : index
    %1 = vector.load %arg3[%c0_1, %c0_2] : memref<256x1024xbf16, #tpu.memory_space<vmem>>, vector<256x1024xbf16>
    %cst = arith.constant dense<0.000000e+00> : vector<8x1024xf32>
    %2 = tpu.matmul %0, %1, %cst {dimension_numbers = #tpu.dot_dimension_numbers<[1], [0], [0], [1], [0, 0, 1, 1], [], []>} : vector<8x256xbf16>, vector<256x1024xbf16>, vector<8x1024xf32> -> vector<8x1024xf32>
    %c0_3 = arith.constant 0 : index
    %c0_4 = arith.constant 0 : index
    %3 = vector.load %arg2[%c0_3, %c0_4] : memref<8x1xf32, #tpu.memory_space<vmem>>, vector<8x1xf32>
    %4 = vector.broadcast %3 : vector<8x1xf32> to vector<8x1024xf32>
    %5 = arith.addf %2, %4 : vector<8x1024xf32>
    %c0_5 = arith.constant 0 : index
    %c0_6 = arith.constant 0 : index
    %6 = vector.load %arg4[%c0_5, %c0_6] : memref<8x1024xf32, #tpu.memory_space<vmem>>, vector<8x1024xf32>
    tpu.vector_store %arg4[%c0_5, %c0_6], %5 {strides = array<i32>} : memref<8x1024xf32, #tpu.memory_space<vmem>>, vector<8x1024xf32>,
    %cst_7 = arith.constant dense<0.000000e+00> : vector<8xf32>
    %7 = vector.multi_reduction <add>, %5, %cst_7 [1] : vector<8x1024xf32> to vector<8xf32>
    %8 = vector.shape_cast %7 : vector<8xf32> to vector<8x1xf32>
    %9 = arith.mulf %5, %5 : vector<8x1024xf32>
    %cst_8 = arith.constant dense<0.000000e+00> : vector<8xf32>
    %10 = vector.multi_reduction <add>, %9, %cst_8 [1] : vector<8x1024xf32> to vector<8xf32>
    %11 = vector.shape_cast %10 : vector<8xf32> to vector<8x1xf32>
    %12 = vector.shape_cast %8 : vector<8x1xf32> to vector<8x1xf32>
    %13 = vector.broadcast %12 : vector<8x1xf32> to vector<8x128xf32>
    %c0_9 = arith.constant 0 : index
    %c0_10 = arith.constant 0 : index
    %c0_11 = arith.constant 0 : index
    %14 = vector.load %arg5[%c0_9, %c0_10, %c0_11] : memref<1x8x128xf32, #tpu.memory_space<vmem>>, vector<1x8x128xf32>
    %15 = vector.shape_cast %14 : vector<1x8x128xf32> to vector<8x128xf32>
    %16 = vector.shape_cast %13 : vector<8x128xf32> to vector<1x8x128xf32>
    tpu.vector_store %arg5[%c0_9, %c0_10, %c0_11], %16 {strides = array<i32>} : memref<1x8x128xf32, #tpu.memory_space<vmem>>, vector<1x8x128xf32>,
    %17 = vector.shape_cast %11 : vector<8x1xf32> to vector<8x1xf32>
    %18 = vector.broadcast %17 : vector<8x1xf32> to vector<8x128xf32>
    %c0_12 = arith.constant 0 : index
    %c0_13 = arith.constant 0 : index
    %c0_14 = arith.constant 0 : index
    %19 = vector.load %arg6[%c0_12, %c0_13, %c0_14] : memref<1x8x128xf32, #tpu.memory_space<vmem>>, vector<1x8x128xf32>
    %20 = vector.shape_cast %19 : vector<1x8x128xf32> to vector<8x128xf32>
    %21 = vector.shape_cast %18 : vector<8x128xf32> to vector<1x8x128xf32>
    tpu.vector_store %arg6[%c0_12, %c0_13, %c0_14], %21 {strides = array<i32>} : memref<1x8x128xf32, #tpu.memory_space<vmem>>, vector<1x8x128xf32>,
    return
  }
  func.func @transform_0(%arg0: i32) -> (i32, i32) {
    %c0_i32 = arith.constant 0 : i32
    %c0_i32_0 = arith.constant 0 : i32
    %c0_i32_1 = arith.constant 0 : i32
    return %c0_i32, %c0_i32_0 : i32, i32
  }
  func.func @transform_1(%arg0: i32) -> (i32, i32) {
    %c0_i32 = arith.constant 0 : i32
    %c0_i32_0 = arith.constant 0 : i32
    %c0_i32_1 = arith.constant 0 : i32
    return %c0_i32, %c0_i32_0 : i32, i32
  }
  func.func @transform_2(%arg0: i32) -> (i32, i32) {
    %c0_i32 = arith.constant 0 : i32
    %c0_i32_0 = arith.constant 0 : i32
    return %c0_i32, %arg0 : i32, i32
  }
  func.func @transform_3(%arg0: i32) -> (i32, i32) {
    %c0_i32 = arith.constant 0 : i32
    %c0_i32_0 = arith.constant 0 : i32
    return %c0_i32, %arg0 : i32, i32
  }
  func.func @transform_4(%arg0: i32) -> (i32, i32, i32) {
    %c0_i32 = arith.constant 0 : i32
    %c0_i32_0 = arith.constant 0 : i32
    %c0_i32_1 = arith.constant 0 : i32
    return %arg0, %c0_i32, %c0_i32_0 : i32, i32, i32
  }
  func.func @transform_5(%arg0: i32) -> (i32, i32, i32) {
    %c0_i32 = arith.constant 0 : i32
    %c0_i32_0 = arith.constant 0 : i32
    %c0_i32_1 = arith.constant 0 : i32
    return %arg0, %c0_i32, %c0_i32_0 : i32, i32, i32
  }
}

module attributes {stable_mosaic.version = 11 : i64} {
  func.func @_bn_relu_kernel(%arg0: i32, %arg1: memref<8x1xf32, #tpu.memory_space<vmem>>, %arg2: memref<8x1xf32, #tpu.memory_space<vmem>>, %arg3: memref<8x1024xf32, #tpu.memory_space<vmem>>, %arg4: memref<8x1024xf32, #tpu.memory_space<vmem>>) attributes {dimension_semantics = [#tpu.dimension_semantics<parallel>], iteration_bounds = array<i64: 8>, scalar_prefetch = 0 : i64, scratch_operands = 0 : i64, tpu.core_type = #tpu.core_type<tc>, window_params = [{pipeline_mode = #tpu.pipeline_mode<synchronous>, transform_indices = @transform_0, window_bounds = array<i64: 8, 1>}, {pipeline_mode = #tpu.pipeline_mode<synchronous>, transform_indices = @transform_1, window_bounds = array<i64: 8, 1>}, {transform_indices = @transform_2, window_bounds = array<i64: 8, 1024>}, {transform_indices = @transform_3, window_bounds = array<i64: 8, 1024>}]} {
    %c0 = arith.constant 0 : index
    %c0_0 = arith.constant 0 : index
    %0 = vector.load %arg3[%c0, %c0_0] : memref<8x1024xf32, #tpu.memory_space<vmem>>, vector<8x1024xf32>
    %c0_1 = arith.constant 0 : index
    %c0_2 = arith.constant 0 : index
    %1 = vector.load %arg1[%c0_1, %c0_2] : memref<8x1xf32, #tpu.memory_space<vmem>>, vector<8x1xf32>
    %2 = vector.broadcast %1 : vector<8x1xf32> to vector<8x1024xf32>
    %3 = arith.mulf %0, %2 : vector<8x1024xf32>
    %c0_3 = arith.constant 0 : index
    %c0_4 = arith.constant 0 : index
    %4 = vector.load %arg2[%c0_3, %c0_4] : memref<8x1xf32, #tpu.memory_space<vmem>>, vector<8x1xf32>
    %5 = vector.broadcast %4 : vector<8x1xf32> to vector<8x1024xf32>
    %6 = arith.addf %3, %5 : vector<8x1024xf32>
    %cst = arith.constant 0.000000e+00 : f32
    %7 = vector.broadcast %cst : f32 to vector<8x1024xf32>
    %8 = arith.maximumf %6, %7 : vector<8x1024xf32>
    %c0_5 = arith.constant 0 : index
    %c0_6 = arith.constant 0 : index
    %9 = vector.load %arg4[%c0_5, %c0_6] : memref<8x1024xf32, #tpu.memory_space<vmem>>, vector<8x1024xf32>
    tpu.vector_store %arg4[%c0_5, %c0_6], %8 {strides = array<i32>} : memref<8x1024xf32, #tpu.memory_space<vmem>>, vector<8x1024xf32>,
    return
  }
  func.func @transform_0(%arg0: i32) -> (i32, i32) {
    %c0_i32 = arith.constant 0 : i32
    %c0_i32_0 = arith.constant 0 : i32
    %c0_i32_1 = arith.constant 0 : i32
    return %c0_i32, %c0_i32_0 : i32, i32
  }
  func.func @transform_1(%arg0: i32) -> (i32, i32) {
    %c0_i32 = arith.constant 0 : i32
    %c0_i32_0 = arith.constant 0 : i32
    %c0_i32_1 = arith.constant 0 : i32
    return %c0_i32, %c0_i32_0 : i32, i32
  }
  func.func @transform_2(%arg0: i32) -> (i32, i32) {
    %c0_i32 = arith.constant 0 : i32
    %c0_i32_0 = arith.constant 0 : i32
    return %c0_i32, %arg0 : i32, i32
  }
  func.func @transform_3(%arg0: i32) -> (i32, i32) {
    %c0_i32 = arith.constant 0 : i32
    %c0_i32_0 = arith.constant 0 : i32
    return %c0_i32, %arg0 : i32, i32
  }
}

</mosaic_0001>

<llo_original>
// kernel: double_conv_forward.4
$region0: #{double_conv_forward.4}
  #allocation0 [shape = 'u32[]', space=smem, size = 0x4, offset = 0x4, fixed_abs, tag = 'smem constant byte address 0x4 - core index']
  #allocation1 [shape = 'u32[144,128]{1,0:T(1,128)}', space=vmem, size = 0x12000, scoped, tag = 'internal scratch']
  %s0 = inlined_call_operand.vmem [shape: bf16[8,128], index: 0, kind: input, shape index: {}]
  %s1 = inlined_call_operand.vmem [shape: f32[8,1], index: 1, kind: input, shape index: {}]
  %s2 = inlined_call_operand.vmem [shape: bf16[128,8192], index: 2, kind: input, shape index: {}]
  %s3 = inlined_call_operand.vmem [shape: f32[8,8192], index: 3, kind: output, shape index: {0}]
  %s4 = inlined_call_operand.vmem [shape: f32[8,8,128], index: 4, kind: output, shape index: {1}]
  %s5 = inlined_call_operand.vmem [shape: f32[8,8,128], index: 5, kind: output, shape index: {2}]
  %6 = xla_tuple %s3, %s4, %s5
  %s7 = sld [smem:[#allocation0]]
  $region84: #{double_conv_forward.4} parent=0
    _
  %s9 = ssub.s32 1, %s7
  %s10 = scalar_select 0, %s9, %s7
  $region1: #{double_conv_forward.4} parent=0
    #allocation2 [shape = 'u8[524288]{0}', space=vmem, size = 0x80000, scoped, tag = 'input window, operand 2']
    loop: start=0, step=1, limit=10
    $region2: #{double_conv_forward.4} parent=1 // loop_pre_header
      _
    $region3: #{double_conv_forward.4} parent=1 // loop_header
      %s12 = sphi 0, %s16
      %p13 = scmp.ge.s32.totalorder %s12, 10
      %s20 = sphi 0, %s20
      %s22 = sphi 0, %s20
      %s23 = sphi 0, %s22
      %s37 = sphi 0, %s23
      %s41 = sphi 0, %s41
      %s43 = sphi 0, %s41
      %s44 = sphi 0, %s43
      %s58 = sphi 0, %s44
      %s64 = sphi 0, %s66
      %s67 = sphi 0, %s64
      %s68 = sphi 0, %s67
      %s84 = sphi 0, %s68
      %s90 = sphi 0, %s92
      %s93 = sphi 0, %s90
      %s94 = sphi 0, %s93
      %s110 = sphi 0, %s94
      %s116 = sphi 0, %s118
      %s119 = sphi 0, %s116
      %s120 = sphi 0, %s119
      %s136 = sphi 0, %s120
      %s142 = sphi 0, %s144
      %s145 = sphi 0, %s142
      %s146 = sphi 0, %s145
      %s162 = sphi 0, %s146
    $region4: #{double_conv_forward.4} parent=1 // loop_header_branch
      %15 = sbr.rel (%p13) target = $region8
    $region5: #{double_conv_forward.4} parent=1 // loop_body
      %s17 = ssub.s32 %s12, 1
      %s18 = ssub.s32 %s12, 2
      %s19 = sadd.s32 %s12, 1
      %s21 = sadd.s32 %s20, 1
      %p24 = scmp.eq.s32.totalorder %s12, 7
      %p25 = scmp.ne.s32.totalorder %s20, %s22
      %p26 = scmp.eq.s32.totalorder %s12, 0
      %p27 = por %p25, %p26
      %p28 = scmp.ne.s32.totalorder %s20, %s22
      %p29 = scmp.eq.s32.totalorder %s17, 7
      %p30 = por %p28, %p29
      %p31 = scmp.ne.s32.totalorder %s22, %s23
      %p32 = scmp.eq.s32.totalorder %s17, 0
      %p33 = por %p31, %p32
      %p34 = scmp.ne.s32.totalorder %s22, %s23
      %p35 = scmp.eq.s32.totalorder %s18, 7
      %p36 = por %p34, %p35
      %p38 = scmp.ne.s32.totalorder %s23, %s37
      %p39 = scmp.eq.s32.totalorder %s18, 0
      %p40 = por %p38, %p39
      %s42 = sadd.s32 %s41, 1
      %p45 = scmp.eq.s32.totalorder %s12, 7
      %p46 = scmp.ne.s32.totalorder %s41, %s43
      %p47 = scmp.eq.s32.totalorder %s12, 0
      %p48 = por %p46, %p47
      %p49 = scmp.ne.s32.totalorder %s41, %s43
      %p50 = scmp.eq.s32.totalorder %s17, 7
      %p51 = por %p49, %p50
      %p52 = scmp.ne.s32.totalorder %s43, %s44
      %p53 = scmp.eq.s32.totalorder %s17, 0
      %p54 = por %p52, %p53
      %p55 = scmp.ne.s32.totalorder %s43, %s44
      %p56 = scmp.eq.s32.totalorder %s18, 7
      %p57 = por %p55, %p56
      %p59 = scmp.ne.s32.totalorder %s44, %s58
      %p60 = scmp.eq.s32.totalorder %s18, 0
      %p61 = por %p59, %p60
      %s62 = ssub.s32 %s12, %s19
      %p63 = scmp.eq.s32.totalorder %s62, 0
      %s65 = sadd.s32 %s64, 1
      %s66 = scalar_select %p63, %s64, %s65
      %p69 = pneg %p63
      %p70 = scmp.eq.s32.totalorder %s12, 7
      %p71 = por %p69, %p70
      %p72 = scmp.ne.s32.totalorder %s64, %s67
      %p73 = scmp.eq.s32.totalorder %s12, 0
      %p74 = por %p72, %p73
      %p75 = scmp.ne.s32.totalorder %s64, %s67
      %p76 = scmp.eq.s32.totalorder %s17, 7
      %p77 = por %p75, %p76
      %p78 = scmp.ne.s32.totalorder %s67, %s68
      %p79 = scmp.eq.s32.totalorder %s17, 0
      %p80 = por %p78, %p79
      %p81 = scmp.ne.s32.totalorder %s67, %s68
      %p82 = scmp.eq.s32.totalorder %s18, 7
      %p83 = por %p81, %p82
      %p85 = scmp.ne.s32.totalorder %s68, %s84
      %p86 = scmp.eq.s32.totalorder %s18, 0
      %p87 = por %p85, %p86
      %s88 = ssub.s32 %s12, %s19
      %p89 = scmp.eq.s32.totalorder %s88, 0
      %s91 = sadd.s32 %s90, 1
      %s92 = scalar_select %p89, %s90, %s91
      %p95 = pneg %p89
      %p96 = scmp.eq.s32.totalorder %s12, 7
      %p97 = por %p95, %p96
      %p98 = scmp.ne.s32.totalorder %s90, %s93
      %p99 = scmp.eq.s32.totalorder %s12, 0
      %p100 = por %p98, %p99
      %p101 = scmp.ne.s32.totalorder %s90, %s93
      %p102 = scmp.eq.s32.totalorder %s17, 7
      %p103 = por %p101, %p102
      %p104 = scmp.ne.s32.totalorder %s93, %s94
      %p105 = scmp.eq.s32.totalorder %s17, 0
      %p106 = por %p104, %p105
      %p107 = scmp.ne.s32.totalorder %s93, %s94
      %p108 = scmp.eq.s32.totalorder %s18, 7
      %p109 = por %p107, %p108
      %p111 = scmp.ne.s32.totalorder %s94, %s110
      %p112 = scmp.eq.s32.totalorder %s18, 0
      %p113 = por %p111, %p112
      %s114 = ssub.s32 %s12, %s19
      %p115 = scmp.eq.s32.totalorder %s114, 0
      %s117 = sadd.s32 %s116, 1
      %s118 = scalar_select %p115, %s116, %s117
      %p121 = pneg %p115
      %p122 = scmp.eq.s32.totalorder %s12, 7
      %p123 = por %p121, %p122
      %p124 = scmp.ne.s32.totalorder %s116, %s119
      %p125 = scmp.eq.s32.totalorder %s12, 0
      %p126 = por %p124, %p125
      %p127 = scmp.ne.s32.totalorder %s116, %s119
      %p128 = scmp.eq.s32.totalorder %s17, 7
      %p129 = por %p127, %p128
      %p130 = scmp.ne.s32.totalorder %s119, %s120
      %p131 = scmp.eq.s32.totalorder %s17, 0
      %p132 = por %p130, %p131
      %p133 = scmp.ne.s32.totalorder %s119, %s120
      %p134 = scmp.eq.s32.totalorder %s18, 7
      %p135 = por %p133, %p134
      %p137 = scmp.ne.s32.totalorder %s120, %s136
      %p138 = scmp.eq.s32.totalorder %s18, 0
      %p139 = por %p137, %p138
      %s140 = ssub.s32 %s12, %s19
      %p141 = scmp.eq.s32.totalorder %s140, 0
      %s143 = sadd.s32 %s142, 1
      %s144 = scalar_select %p141, %s142, %s143
      %p147 = pneg %p141
      %p148 = scmp.eq.s32.totalorder %s12, 7
      %p149 = por %p147, %p148
      %p150 = scmp.ne.s32.totalorder %s142, %s145
      %p151 = scmp.eq.s32.totalorder %s12, 0
      %p152 = por %p150, %p151
      %p153 = scmp.ne.s32.totalorder %s142, %s145
      %p154 = scmp.eq.s32.totalorder %s17, 7
      %p155 = por %p153, %p154
      %p156 = scmp.ne.s32.totalorder %s145, %s146
      %p157 = scmp.eq.s32.totalorder %s17, 0
      %p158 = por %p156, %p157
      %p159 = scmp.ne.s32.totalorder %s145, %s146
      %p160 = scmp.eq.s32.totalorder %s18, 7
      %p161 = por %p159, %p160
      %p163 = scmp.ne.s32.totalorder %s146, %s162
      %p164 = scmp.eq.s32.totalorder %s18, 0
      %p165 = por %p163, %p164
      %p166 = scmp.le.s32.totalorder 1, %s12
      %p167 = scmp.lt.s32.totalorder %s12, 9
      %p168 = pnand %p166, %p167
      %p169 = pneg %p168
      // Predicated region
      $region9: #{double_conv_forward.4} parent=5 // pred_check
        _
      $region10: #{double_conv_forward.4} parent=5 // pred_check_branch
        %171 = sbr.rel (%p168) target = $region12
      $region11: #{double_conv_forward.4} parent=5 // pred_region
        %s172 = ssub.s32 %s12, 1
        // Predicated region
        $region13: #{double_conv_forward.4} parent=11 // pred_check
          %p173 = pneg %p33
        $region14: #{double_conv_forward.4} parent=11 // pred_check_branch
          %175 = sbr.rel (%p173) target = $region16
        $region15: #{double_conv_forward.4} parent=11 // pred_region
          _
        $region16: #{double_conv_forward.4} parent=11 // pred_fallthru
          _
        // Predicated region
        $region17: #{double_conv_forward.4} parent=11 // pred_check
          %p176 = pneg %p54
        $region18: #{double_conv_forward.4} parent=11 // pred_check_branch
          %178 = sbr.rel (%p176) target = $region20
        $region19: #{double_conv_forward.4} parent=11 // pred_region
          _
        $region20: #{double_conv_forward.4} parent=11 // pred_fallthru
          _
      $region12: #{double_conv_forward.4} parent=5 // pred_fallthru
        _
      %p179 = scmp.lt.s32.totalorder %s12, 8
      // Predicated region
      $region21: #{double_conv_forward.4} parent=5 // pred_check
        %p180 = pneg %p179
      $region22: #{double_conv_forward.4} parent=5 // pred_check_branch
        %182 = sbr.rel (%p180) target = $region24
      $region23: #{double_conv_forward.4} parent=5 // pred_region
        // Predicated region
        $region25: #{double_conv_forward.4} parent=23 // pred_check
          %p183 = pneg %p74
        $region26: #{double_conv_forward.4} parent=23 // pred_check_branch
          %185 = sbr.rel (%p183) target = $region28
        $region27: #{double_conv_forward.4} parent=23 // pred_region
          %s186 = sand.u32 %s64, 1
          %s187 = sand.u32 %s64, 1
          %s188 = smul.addr %s187, 512
          %s189 = scalar_lea.vmem [#allocation2], %s188
          %s190 = smul.u32 8, %s12
          %s191 = smul.addr %s190, 4
          %s192 = scalar_lea.vmem %s2, %s191
          // Predicated region
          $region29: #{double_conv_forward.4} parent=27 // pred_check
            _
          $region30: #{double_conv_forward.4} parent=27 // pred_check_branch
            %194 = sbr.rel (0) target = $region32
          $region31: #{double_conv_forward.4} parent=27 // pred_region
            // Predicated region
            $region33: #{double_conv_forward.4} parent=31 // pred_check
              _
            $region34: #{double_conv_forward.4} parent=31 // pred_check_branch
              %196 = sbr.rel (0) target = $region36
            $region35: #{double_conv_forward.4} parent=31 // pred_region
              loop: start=0, step=1, limit=1
              $region37: #{double_conv_forward.4} parent=35 // loop_pre_header
                _
              $region38: #{double_conv_forward.4} parent=35 // loop_header
                %s198 = sphi 0, %s202
                %p199 = scmp.ge.s32.totalorder %s198, 1
                %s203 = sphi %s192, %s192
                %s204 = sphi %s189, %s189
              $region39: #{double_conv_forward.4} parent=35 // loop_header_branch
                %201 = sbr.rel (%p199) target = $region43
              $region40: #{double_conv_forward.4} parent=35 // loop_body
                %v205 = vld [vmem:[%s203] sm:$0xff]
                %206 = vst [vmem:[%s204] sm:$0xff] %v205
                %v207 = vld [vmem:[%s203 + $0x8] sm:$0xff]
                %208 = vst [vmem:[%s204 + $0x8] sm:$0xff] %v207
                %v209 = vld [vmem:[%s203 + $0x10] sm:$0xff]
                %210 = vst [vmem:[%s204 + $0x10] sm:$0xff] %v209
                %v211 = vld [vmem:[%s203 + $0x18] sm:$0xff]
                %212 = vst [vmem:[%s204 + $0x18] sm:$0xff] %v211
                %v213 = vld [vmem:[%s203 + $0x100] sm:$0xff]
                %214 = vst [vmem:[%s204 + $0x20] sm:$0xff] %v213
                %v215 = vld [vmem:[%s203 + $0x108] sm:$0xff]
                %216 = vst [vmem:[%s204 + $0x28] sm:$0xff] %v215
                %v217 = vld [vmem:[%s203 + $0x110] sm:$0xff]
                %218 = vst [vmem:[%s204 + $0x30] sm:$0xff] %v217
                %v219 = vld [vmem:[%s203 + $0x118] sm:$0xff]
                %220 = vst [vmem:[%s204 + $0x38] sm:$0xff] %v219
                %v221 = vld [vmem:[%s203 + $0x200] sm:$0xff]
                %222 = vst [vmem:[%s204 + $0x40] sm:$0xff] %v221
                %v223 = vld [vmem:[%s203 + $0x208] sm:$0xff]
                %224 = vst [vmem:[%s204 + $0x48] sm:$0xff] %v223
                %v225 = vld [vmem:[%s203 + $0x210] sm:$0xff]
                %226 = vst [vmem:[%s204 + $0x50] sm:$0xff] %v225
                %v227 = vld [vmem:[%s203 + $0x218] sm:$0xff]
                %228 = vst [vmem:[%s204 + $0x58] sm:$0xff] %v227
                %v229 = vld [vmem:[%s203 + $0x300] sm:$0xff]
                %230 = vst [vmem:[%s204 + $0x60] sm:$0xff] %v229
                %v231 = vld [vmem:[%s203 + $0x308] sm:$0xff]
                %232 = vst [vmem:[%s204 + $0x68] sm:$0xff] %v231
                %v233 = vld [vmem:[%s203 + $0x310] sm:$0xff]
                %234 = vst [vmem:[%s204 + $0x70] sm:$0xff] %v233
                %v235 = vld [vmem:[%s203 + $0x318] sm:$0xff]
                %236 = vst [vmem:[%s204 + $0x78] sm:$0xff] %v235
                %v237 = vld [vmem:[%s203 + $0x400] sm:$0xff]
                %238 = vst [vmem:[%s204 + $0x80] sm:$0xff] %v237
                %v239 = vld [vmem:[%s203 + $0x408] sm:$0xff]
                %240 = vst [vmem:[%s204 + $0x88] sm:$0xff] %v239
                %v241 = vld [vmem:[%s203 + $0x410] sm:$0xff]
                %242 = vst [vmem:[%s204 + $0x90] sm:$0xff] %v241
                %v243 = vld [vmem:[%s203 + $0x418] sm:$0xff]
                %244 = vst [vmem:[%s204 + $0x98] sm:$0xff] %v243
                %v245 = vld [vmem:[%s203 + $0x500] sm:$0xff]
                %246 = vst [vmem:[%s204 + $0xa0] sm:$0xff] %v245
                %v247 = vld [vmem:[%s203 + $0x508] sm:$0xff]
                %248 = vst [vmem:[%s204 + $0xa8] sm:$0xff] %v247
                %v249 = vld [vmem:[%s203 + $0x510] sm:$0xff]
                %250 = vst [vmem:[%s204 + $0xb0] sm:$0xff] %v249
                %v251 = vld [vmem:[%s203 + $0x518] sm:$0xff]
                %252 = vst [vmem:[%s204 + $0xb8] sm:$0xff] %v251
                %v253 = vld [vmem:[%s203 + $0x600] sm:$0xff]
                %254 = vst [vmem:[%s204 + $0xc0] sm:$0xff] %v253
                %v255 = vld [vmem:[%s203 + $0x608] sm:$0xff]
                %256 = vst [vmem:[%s204 + $0xc8] sm:$0xff] %v255
                %v257 = vld [vmem:[%s203 + $0x610] sm:$0xff]
                %258 = vst [vmem:[%s204 + $0xd0] sm:$0xff] %v257
                %v259 = vld [vmem:[%s203 + $0x618] sm:$0xff]
                %260 = vst [vmem:[%s204 + $0xd8] sm:$0xff] %v259
                %v261 = vld [vmem:[%s203 + $0x700] sm:$0xff]
                %262 = vst [vmem:[%s204 + $0xe0] sm:$0xff] %v261
                %v263 = vld [vmem:[%s203 + $0x708] sm:$0xff]
                %264 = vst [vmem:[%s204 + $0xe8] sm:$0xff] %v263
                %v265 = vld [vmem:[%s203 + $0x710] sm:$0xff]
                %266 = vst [vmem:[%s204 + $0xf0] sm:$0xff] %v265
                %v267 = vld [vmem:[%s203 + $0x718] sm:$0xff]
                %268 = vst [vmem:[%s204 + $0xf8] sm:$0xff] %v267
                %v269 = vld [vmem:[%s203 + $0x800] sm:$0xff]
                %270 = vst [vmem:[%s204 + $0x100] sm:$0xff] %v269
                %v271 = vld [vmem:[%s203 + $0x808] sm:$0xff]
                %272 = vst [vmem:[%s204 + $0x108] sm:$0xff] %v271
                %v273 = vld [vmem:[%s203 + $0x810] sm:$0xff]
                %274 = vst [vmem:[%s204 + $0x110] sm:$0xff] %v273
                %v275 = vld [vmem:[%s203 + $0x818] sm:$0xff]
                %276 = vst [vmem:[%s204 + $0x118] sm:$0xff] %v275
                %v277 = vld [vmem:[%s203 + $0x900] sm:$0xff]
                %278 = vst [vmem:[%s204 + $0x120] sm:$0xff] %v277
                %v279 = vld [vmem:[%s203 + $0x908] sm:$0xff]
                %280 = vst [vmem:[%s204 + $0x128] sm:$0xff] %v279
                %v281 = vld [vmem:[%s203 + $0x910] sm:$0xff]
                %282 = vst [vmem:[%s204 + $0x130] sm:$0xff] %v281
                %v283 = vld [vmem:[%s203 + $0x918] sm:$0xff]
                %284 = vst [vmem:[%s204 + $0x138] sm:$0xff] %v283
                %v285 = vld [vmem:[%s203 + $0xa00] sm:$0xff]
                %286 = vst [vmem:[%s204 + $0x140] sm:$0xff] %v285
                %v287 = vld [vmem:[%s203 + $0xa08] sm:$0xff]
                %288 = vst [vmem:[%s204 + $0x148] sm:$0xff] %v287
                %v289 = vld [vmem:[%s203 + $0xa10] sm:$0xff]
                %290 = vst [vmem:[%s204 + $0x150] sm:$0xff] %v289
                %v291 = vld [vmem:[%s203 + $0xa18] sm:$0xff]
                %292 = vst [vmem:[%s204 + $0x158] sm:$0xff] %v291
                %v293 = vld [vmem:[%s203 + $0xb00] sm:$0xff]
                %294 = vst [vmem:[%s204 + $0x160] sm:$0xff] %v293
                %v295 = vld [vmem:[%s203 + $0xb08] sm:$0xff]
                %296 = vst [vmem:[%s204 + $0x168] sm:$0xff] %v295
                %v297 = vld [vmem:[%s203 + $0xb10] sm:$0xff]
                %298 = vst [vmem:[%s204 + $0x170] sm:$0xff] %v297
                %v299 = vld [vmem:[%s203 + $0xb18] sm:$0xff]
                %300 = vst [vmem:[%s204 + $0x178] sm:$0xff] %v299
                %v301 = vld [vmem:[%s203 + $0xc00] sm:$0xff]
                %302 = vst [vmem:[%s204 + $0x180] sm:$0xff] %v301
                %v303 = vld [vmem:[%s203 + $0xc08] sm:$0xff]
                %304 = vst [vmem:[%s204 + $0x188] sm:$0xff] %v303
                %v305 = vld [vmem:[%s203 + $0xc10] sm:$0xff]
                %306 = vst [vmem:[%s204 + $0x190] sm:$0xff] %v305
                %v307 = vld [vmem:[%s203 + $0xc18] sm:$0xff]
                %308 = vst [vmem:[%s204 + $0x198] sm:$0xff] %v307
                %v309 = vld [vmem:[%s203 + $0xd00] sm:$0xff]
                %310 = vst [vmem:[%s204 + $0x1a0] sm:$0xff] %v309
                %v311 = vld [vmem:[%s203 + $0xd08] sm:$0xff]
                %312 = vst [vmem:[%s204 + $0x1a8] sm:$0xff] %v311
                %v313 = vld [vmem:[%s203 + $0xd10] sm:$0xff]
                %314 = vst [vmem:[%s204 + $0x1b0] sm:$0xff] %v313
                %v315 = vld [vmem:[%s203 + $0xd18] sm:$0xff]
                %316 = vst [vmem:[%s204 + $0x1b8] sm:$0xff] %v315
                %v317 = vld [vmem:[%s203 + $0xe00] sm:$0xff]
                %318 = vst [vmem:[%s204 + $0x1c0] sm:$0xff] %v317
                %v319 = vld [vmem:[%s203 + $0xe08] sm:$0xff]
                %320 = vst [vmem:[%s204 + $0x1c8] sm:$0xff] %v319
                %v321 = vld [vmem:[%s203 + $0xe10] sm:$0xff]
                %322 = vst [vmem:[%s204 + $0x1d0] sm:$0xff] %v321
                %v323 = vld [vmem:[%s203 + $0xe18] sm:$0xff]
                %324 = vst [vmem:[%s204 + $0x1d8] sm:$0xff] %v323
                %v325 = vld [vmem:[%s203 + $0xf00] sm:$0xff]
                %326 = vst [vmem:[%s204 + $0x1e0] sm:$0xff] %v325
                %v327 = vld [vmem:[%s203 + $0xf08] sm:$0xff]
                %328 = vst [vmem:[%s204 + $0x1e8] sm:$0xff] %v327
                %v329 = vld [vmem:[%s203 + $0xf10] sm:$0xff]
                %330 = vst [vmem:[%s204 + $0x1f0] sm:$0xff] %v329
                %v331 = vld [vmem:[%s203 + $0xf18] sm:$0xff]
                %332 = vst [vmem:[%s204 + $0x1f8] sm:$0xff] %v331
              $region41: #{double_conv_forward.4} parent=35 // loop_footer
                %s202 = sadd.s32 1, %s198
              $region42: #{double_conv_forward.4} parent=35 // loop_footer_branch
                %197 = sbr.rel target = $region38
              $region43: #{double_conv_forward.4} parent=35 // loop_exit
                _
            $region36: #{double_conv_forward.4} parent=31 // pred_fallthru
              _
            // Predicated region
            $region44: #{double_conv_forward.4} parent=31 // pred_check
              _
            $region45: #{double_conv_forward.4} parent=31 // pred_check_branch
              %334 = sbr.rel target = $region47
            $region46: #{double_conv_forward.4} parent=31 // pred_region
              _
            $region47: #{double_conv_forward.4} parent=31 // pred_fallthru
              _
          $region32: #{double_conv_forward.4} parent=27 // pred_fallthru
            _
          %335 = vnop
        $region28: #{double_conv_forward.4} parent=23 // pred_fallthru
          _
      $region24: #{double_conv_forward.4} parent=5 // pred_fallthru
        _
      %p336 = scmp.le.s32.totalorder 1, %s12
      %p337 = scmp.lt.s32.totalorder %s12, 9
      %p338 = pnand %p336, %p337
      %p339 = pneg %p338
      // Predicated region
      $region48: #{double_conv_forward.4} parent=5 // pred_check
        _
      $region49: #{double_conv_forward.4} parent=5 // pred_check_branch
        %341 = sbr.rel (%p338) target = $region51
      $region50: #{double_conv_forward.4} parent=5 // pred_region
        %s342 = ssub.s32 %s12, 1
        %s343 = sand.u32 %s67, 1
        %s344 = sand.u32 %s67, 1
        %s345 = smul.addr %s344, 512
        %s346 = scalar_lea.vmem [#allocation2], %s345
        // Predicated region
        $region52: #{double_conv_forward.4} parent=50 // pred_check
          %p347 = pneg %p80
        $region53: #{double_conv_forward.4} parent=50 // pred_check_branch
          %349 = sbr.rel (%p347) target = $region55
        $region54: #{double_conv_forward.4} parent=50 // pred_region
          _
        $region55: #{double_conv_forward.4} parent=50 // pred_fallthru
          _
        %p350 = pneg %p33
        %p351 = pneg %p30
        %p352 = pneg %p54
        %p353 = pneg %p51
        %s354 = sand.u32 %s67, 1
        %s355 = sand.u32 %s67, 1
        %s356 = smul.addr %s355, 512
        %s357 = scalar_lea.vmem [#allocation2], %s356
        %p358 = pneg %p80
        %p359 = pneg %p77
        %p360 = pneg %p106
        %p361 = pneg %p103
        %s362 = smul.u32 8, %s17
        %p363 = scmp.lt.s32.totalorder %s362, 63
        %s364 = scalar_select %p363, %s362, 63
        %s365 = smul.addr %s364, 8
        %s366 = scalar_lea.vmem %s3, %s365
        %p367 = pneg %p132
        %p368 = pneg %p129
        %p369 = scmp.lt.s32.totalorder %s17, 7
        %s370 = scalar_select %p369, %s17, 7
        %s371 = smul.addr %s370, 8
        %s372 = scalar_lea.vmem %s4, %s371
        %p373 = pneg %p158
        %p374 = pneg %p155
        %p375 = scmp.lt.s32.totalorder %s17, 7
        %s376 = scalar_select %p375, %s17, 7
        %s377 = smul.addr %s376, 8
        %s378 = scalar_lea.vmem %s5, %s377
        %s379 = smul.u32 8, %s17
        %s380 = smul.u32 8, %s17
        %p381 = scmp.lt.s32.totalorder %s380, 63
        %s382 = scalar_select %p381, %s380, 63
        %s383 = smul.addr %s382, 8
        %s384 = scalar_lea.vmem %s3, %s383
        %s385 = smul.u32 8, %s17
        %p386 = scmp.lt.s32.totalorder %s17, 7
        %s387 = scalar_select %p386, %s17, 7
        %s388 = smul.addr %s387, 8
        %s389 = scalar_lea.vmem %s4, %s388
        %p390 = scmp.lt.s32.totalorder %s17, 7
        %s391 = scalar_select %p390, %s17, 7
        %s392 = smul.addr %s391, 8
        %s393 = scalar_lea.vmem %s5, %s392
        %v395 = vld [vmem:[%s0] sm:$0xf]
        %v396 = vld [vmem:[%s346] sm:$0xff]
        %v397 = vld [vmem:[%s346 + $0x8] sm:$0xff]
        %v398 = vld [vmem:[%s346 + $0x10] sm:$0xff]
        %v399 = vld [vmem:[%s346 + $0x18] sm:$0xff]
        %v400 = vld [vmem:[%s346 + $0x20] sm:$0xff]
        %v401 = vld [vmem:[%s346 + $0x28] sm:$0xff]
        %v402 = vld [vmem:[%s346 + $0x30] sm:$0xff]
        %v403 = vld [vmem:[%s346 + $0x38] sm:$0xff]
        %v404 = vld [vmem:[%s346 + $0x40] sm:$0xff]
        %v405 = vld [vmem:[%s346 + $0x48] sm:$0xff]
        %v406 = vld [vmem:[%s346 + $0x50] sm:$0xff]
        %v407 = vld [vmem:[%s346 + $0x58] sm:$0xff]
        %v408 = vld [vmem:[%s346 + $0x60] sm:$0xff]
        %v409 = vld [vmem:[%s346 + $0x68] sm:$0xff]
        %v410 = vld [vmem:[%s346 + $0x70] sm:$0xff]
        %v411 = vld [vmem:[%s346 + $0x78] sm:$0xff]
        %v412 = vld [vmem:[%s346 + $0x80] sm:$0xff]
        %v413 = vld [vmem:[%s346 + $0x88] sm:$0xff]
        %v414 = vld [vmem:[%s346 + $0x90] sm:$0xff]
        %v415 = vld [vmem:[%s346 + $0x98] sm:$0xff]
        %v416 = vld [vmem:[%s346 + $0xa0] sm:$0xff]
        %v417 = vld [vmem:[%s346 + $0xa8] sm:$0xff]
        %v418 = vld [vmem:[%s346 + $0xb0] sm:$0xff]
        %v419 = vld [vmem:[%s346 + $0xb8] sm:$0xff]
        %v420 = vld [vmem:[%s346 + $0xc0] sm:$0xff]
        %v421 = vld [vmem:[%s346 + $0xc8] sm:$0xff]
        %v422 = vld [vmem:[%s346 + $0xd0] sm:$0xff]
        %v423 = vld [vmem:[%s346 + $0xd8] sm:$0xff]
        %v424 = vld [vmem:[%s346 + $0xe0] sm:$0xff]
        %v425 = vld [vmem:[%s346 + $0xe8] sm:$0xff]
        %v426 = vld [vmem:[%s346 + $0xf0] sm:$0xff]
        %v427 = vld [vmem:[%s346 + $0xf8] sm:$0xff]
        %v428 = vld [vmem:[%s346 + $0x100] sm:$0xff]
        %v429 = vld [vmem:[%s346 + $0x108] sm:$0xff]
        %v430 = vld [vmem:[%s346 + $0x110] sm:$0xff]
        %v431 = vld [vmem:[%s346 + $0x118] sm:$0xff]
        %v432 = vld [vmem:[%s346 + $0x120] sm:$0xff]
        %v433 = vld [vmem:[%s346 + $0x128] sm:$0xff]
        %v434 = vld [vmem:[%s346 + $0x130] sm:$0xff]
        %v435 = vld [vmem:[%s346 + $0x138] sm:$0xff]
        %v436 = vld [vmem:[%s346 + $0x140] sm:$0xff]
        %v437 = vld [vmem:[%s346 + $0x148] sm:$0xff]
        %v438 = vld [vmem:[%s346 + $0x150] sm:$0xff]
        %v439 = vld [vmem:[%s346 + $0x158] sm:$0xff]
        %v440 = vld [vmem:[%s346 + $0x160] sm:$0xff]
        %v441 = vld [vmem:[%s346 + $0x168] sm:$0xff]
        %v442 = vld [vmem:[%s346 + $0x170] sm:$0xff]
        %v443 = vld [vmem:[%s346 + $0x178] sm:$0xff]
        %v444 = vld [vmem:[%s346 + $0x180] sm:$0xff]
        %v445 = vld [vmem:[%s346 + $0x188] sm:$0xff]
        %v446 = vld [vmem:[%s346 + $0x190] sm:$0xff]
        %v447 = vld [vmem:[%s346 + $0x198] sm:$0xff]
        %v448 = vld [vmem:[%s346 + $0x1a0] sm:$0xff]
        %v449 = vld [vmem:[%s346 + $0x1a8] sm:$0xff]
        %v450 = vld [vmem:[%s346 + $0x1b0] sm:$0xff]
        %v451 = vld [vmem:[%s346 + $0x1b8] sm:$0xff]
        %v452 = vld [vmem:[%s346 + $0x1c0] sm:$0xff]
        %v453 = vld [vmem:[%s346 + $0x1c8] sm:$0xff]
        %v454 = vld [vmem:[%s346 + $0x1d0] sm:$0xff]
        %v455 = vld [vmem:[%s346 + $0x1d8] sm:$0xff]
        %v456 = vld [vmem:[%s346 + $0x1e0] sm:$0xff]
        %v457 = vld [vmem:[%s346 + $0x1e8] sm:$0xff]
        %v458 = vld [vmem:[%s346 + $0x1f0] sm:$0xff]
        %v459 = vld [vmem:[%s346 + $0x1f8] sm:$0xff]
        %v460 = vld [vmem:[%s1] sm:$0xff]
        %462 = vset.pattern.permute.xlu0 0
        %463 = vperm.xlu0 %462, %v460
        %v464 = vpop.permute.xlu0 %463
        %v530 = vunpack.c.l.b16 %v396
        %v531 = vunpack.c.h.b16 %v396
        %v532 = vunpack.c.l.b16 %v397
        %v533 = vunpack.c.h.b16 %v397
        %v534 = vunpack.c.l.b16 %v398
        %v535 = vunpack.c.h.b16 %v398
        %v536 = vunpack.c.l.b16 %v399
        %v537 = vunpack.c.h.b16 %v399
        %v538 = vunpack.c.l.b16 %v400
        %v539 = vunpack.c.h.b16 %v400
        %v540 = vunpack.c.l.b16 %v401
        %v541 = vunpack.c.h.b16 %v401
        %v542 = vunpack.c.l.b16 %v402
        %v543 = vunpack.c.h.b16 %v402
        %v544 = vunpack.c.l.b16 %v403
        %v545 = vunpack.c.h.b16 %v403
        %v546 = vunpack.c.l.b16 %v404
        %v547 = vunpack.c.h.b16 %v404
        %v548 = vunpack.c.l.b16 %v405
        %v549 = vunpack.c.h.b16 %v405
        %v550 = vunpack.c.l.b16 %v406
        %v551 = vunpack.c.h.b16 %v406
        %v552 = vunpack.c.l.b16 %v407
        %v553 = vunpack.c.h.b16 %v407
        %v554 = vunpack.c.l.b16 %v408
        %v555 = vunpack.c.h.b16 %v408
        %v556 = vunpack.c.l.b16 %v409
        %v557 = vunpack.c.h.b16 %v409
        %v558 = vunpack.c.l.b16 %v410
        %v559 = vunpack.c.h.b16 %v410
        %v560 = vunpack.c.l.b16 %v411
        %v561 = vunpack.c.h.b16 %v411
        %v562 = vunpack.c.l.b16 %v412
        %v563 = vunpack.c.h.b16 %v412
        %v564 = vunpack.c.l.b16 %v413
        %v565 = vunpack.c.h.b16 %v413
        %v566 = vunpack.c.l.b16 %v414
        %v567 = vunpack.c.h.b16 %v414
        %v568 = vunpack.c.l.b16 %v415
        %v569 = vunpack.c.h.b16 %v415
        %v570 = vunpack.c.l.b16 %v416
        %v571 = vunpack.c.h.b16 %v416
        %v572 = vunpack.c.l.b16 %v417
        %v573 = vunpack.c.h.b16 %v417
        %v574 = vunpack.c.l.b16 %v418
        %v575 = vunpack.c.h.b16 %v418
        %v576 = vunpack.c.l.b16 %v419
        %v577 = vunpack.c.h.b16 %v419
        %v578 = vunpack.c.l.b16 %v420
        %v579 = vunpack.c.h.b16 %v420
        %v580 = vunpack.c.l.b16 %v421
        %v581 = vunpack.c.h.b16 %v421
        %v582 = vunpack.c.l.b16 %v422
        %v583 = vunpack.c.h.b16 %v422
        %v584 = vunpack.c.l.b16 %v423
        %v585 = vunpack.c.h.b16 %v423
        %v586 = vunpack.c.l.b16 %v424
        %v587 = vunpack.c.h.b16 %v424
        %v588 = vunpack.c.l.b16 %v425
        %v589 = vunpack.c.h.b16 %v425
        %v590 = vunpack.c.l.b16 %v426
        %v591 = vunpack.c.h.b16 %v426
        %v592 = vunpack.c.l.b16 %v427
        %v593 = vunpack.c.h.b16 %v427
        %v594 = vunpack.c.l.b16 %v428
        %v595 = vunpack.c.h.b16 %v428
        %v596 = vunpack.c.l.b16 %v429
        %v597 = vunpack.c.h.b16 %v429
        %v598 = vunpack.c.l.b16 %v430
        %v599 = vunpack.c.h.b16 %v430
        %v600 = vunpack.c.l.b16 %v431
        %v601 = vunpack.c.h.b16 %v431
        %v602 = vunpack.c.l.b16 %v432
        %v603 = vunpack.c.h.b16 %v432
        %v604 = vunpack.c.l.b16 %v433
        %v605 = vunpack.c.h.b16 %v433
        %v606 = vunpack.c.l.b16 %v434
        %v607 = vunpack.c.h.b16 %v434
        %v608 = vunpack.c.l.b16 %v435
        %v609 = vunpack.c.h.b16 %v435
        %v610 = vunpack.c.l.b16 %v436
        %v611 = vunpack.c.h.b16 %v436
        %v612 = vunpack.c.l.b16 %v437
        %v613 = vunpack.c.h.b16 %v437
        %v614 = vunpack.c.l.b16 %v438
        %v615 = vunpack.c.h.b16 %v438
        %v616 = vunpack.c.l.b16 %v439
        %v617 = vunpack.c.h.b16 %v439
        %v618 = vunpack.c.l.b16 %v440
        %v619 = vunpack.c.h.b16 %v440
        %v620 = vunpack.c.l.b16 %v441
        %v621 = vunpack.c.h.b16 %v441
        %v622 = vunpack.c.l.b16 %v442
        %v623 = vunpack.c.h.b16 %v442
        %v624 = vunpack.c.l.b16 %v443
        %v625 = vunpack.c.h.b16 %v443
        %v626 = vunpack.c.l.b16 %v444
        %v627 = vunpack.c.h.b16 %v444
        %v628 = vunpack.c.l.b16 %v445
        %v629 = vunpack.c.h.b16 %v445
        %v630 = vunpack.c.l.b16 %v446
        %v631 = vunpack.c.h.b16 %v446
        %v632 = vunpack.c.l.b16 %v447
        %v633 = vunpack.c.h.b16 %v447
        %v634 = vunpack.c.l.b16 %v448
        %v635 = vunpack.c.h.b16 %v448
        %v636 = vunpack.c.l.b16 %v449
        %v637 = vunpack.c.h.b16 %v449
        %v638 = vunpack.c.l.b16 %v450
        %v639 = vunpack.c.h.b16 %v450
        %v640 = vunpack.c.l.b16 %v451
        %v641 = vunpack.c.h.b16 %v451
        %v642 = vunpack.c.l.b16 %v452
        %v643 = vunpack.c.h.b16 %v452
        %v644 = vunpack.c.l.b16 %v453
        %v645 = vunpack.c.h.b16 %v453
        %v646 = vunpack.c.l.b16 %v454
        %v647 = vunpack.c.h.b16 %v454
        %v648 = vunpack.c.l.b16 %v455
        %v649 = vunpack.c.h.b16 %v455
        %v650 = vunpack.c.l.b16 %v456
        %v651 = vunpack.c.h.b16 %v456
        %v652 = vunpack.c.l.b16 %v457
        %v653 = vunpack.c.h.b16 %v457
        %v654 = vunpack.c.l.b16 %v458
        %v655 = vunpack.c.h.b16 %v458
        %v656 = vunpack.c.l.b16 %v459
        %v657 = vunpack.c.h.b16 %v459
        %v658 = vpack.c.b16 %v538, %v530
        %v659 = vpack.c.b16 %v539, %v531
        %v660 = vpack.c.b16 %v540, %v532
        %v661 = vpack.c.b16 %v541, %v533
        %v662 = vpack.c.b16 %v542, %v534
        %v663 = vpack.c.b16 %v543, %v535
        %v664 = vpack.c.b16 %v544, %v536
        %v665 = vpack.c.b16 %v545, %v537
        %v666 = vpack.c.b16 %v554, %v546
        %v667 = vpack.c.b16 %v555, %v547
        %v668 = vpack.c.b16 %v556, %v548
        %v669 = vpack.c.b16 %v557, %v549
        %v670 = vpack.c.b16 %v558, %v550
        %v671 = vpack.c.b16 %v559, %v551
        %v672 = vpack.c.b16 %v560, %v552
        %v673 = vpack.c.b16 %v561, %v553
        %v674 = vpack.c.b16 %v570, %v562
        %v675 = vpack.c.b16 %v571, %v563
        %v676 = vpack.c.b16 %v572, %v564
        %v677 = vpack.c.b16 %v573, %v565
        %v678 = vpack.c.b16 %v574, %v566
        %v679 = vpack.c.b16 %v575, %v567
        %v680 = vpack.c.b16 %v576, %v568
        %v681 = vpack.c.b16 %v577, %v569
        %v682 = vpack.c.b16 %v586, %v578
        %v683 = vpack.c.b16 %v587, %v579
        %v684 = vpack.c.b16 %v588, %v580
        %v685 = vpack.c.b16 %v589, %v581
        %v686 = vpack.c.b16 %v590, %v582
        %v687 = vpack.c.b16 %v591, %v583
        %v688 = vpack.c.b16 %v592, %v584
        %v689 = vpack.c.b16 %v593, %v585
        %v690 = vpack.c.b16 %v602, %v594
        %v691 = vpack.c.b16 %v603, %v595
        %v692 = vpack.c.b16 %v604, %v596
        %v693 = vpack.c.b16 %v605, %v597
        %v694 = vpack.c.b16 %v606, %v598
        %v695 = vpack.c.b16 %v607, %v599
        %v696 = vpack.c.b16 %v608, %v600
        %v697 = vpack.c.b16 %v609, %v601
        %v698 = vpack.c.b16 %v618, %v610
        %v699 = vpack.c.b16 %v619, %v611
        %v700 = vpack.c.b16 %v620, %v612
        %v701 = vpack.c.b16 %v621, %v613
        %v702 = vpack.c.b16 %v622, %v614
        %v703 = vpack.c.b16 %v623, %v615
        %v704 = vpack.c.b16 %v624, %v616
        %v705 = vpack.c.b16 %v625, %v617
        %v706 = vpack.c.b16 %v634, %v626
        %v707 = vpack.c.b16 %v635, %v627
        %v708 = vpack.c.b16 %v636, %v628
        %v709 = vpack.c.b16 %v637, %v629
        %v710 = vpack.c.b16 %v638, %v630
        %v711 = vpack.c.b16 %v639, %v631
        %v712 = vpack.c.b16 %v640, %v632
        %v713 = vpack.c.b16 %v641, %v633
        %v714 = vpack.c.b16 %v650, %v642
        %v715 = vpack.c.b16 %v651, %v643
        %v716 = vpack.c.b16 %v652, %v644
        %v717 = vpack.c.b16 %v653, %v645
        %v718 = vpack.c.b16 %v654, %v646
        %v719 = vpack.c.b16 %v655, %v647
        %v720 = vpack.c.b16 %v656, %v648
        %v721 = vpack.c.b16 %v657, %v649
        %786 = vmatprep.subr.bf16.mxu0 %v659
        %787 = vmatpush1.bf16.msra.mxu0 %v658
        %788 = vmatprep.subr.bf16.mxu0 %v667
        %789 = vmatpush1.bf16.msra.mxu0 %v666
        %790 = vmatprep.subr.bf16.mxu0 %v675
        %791 = vmatpush1.bf16.msra.mxu0 %v674
        %792 = vmatprep.subr.bf16.mxu0 %v683
        %793 = vmatpush1.bf16.msra.mxu0 %v682
        %794 = vmatprep.subr.bf16.mxu0 %v691
        %795 = vmatpush1.bf16.msra.mxu0 %v690
        %796 = vmatprep.subr.bf16.mxu0 %v699
        %797 = vmatpush1.bf16.msra.mxu0 %v698
        %798 = vmatprep.subr.bf16.mxu0 %v707
        %799 = vmatpush1.bf16.msra.mxu0 %v706
        %800 = vmatprep.subr.bf16.mxu0 %v715
        %801 = vmatpush1.bf16.msra.mxu0 %v714
        %802 = vmatprep.subr.bf16.mxu0 0
        %803 = vmatpush1.bf16.msra.mxu0 0
        %804 = vmatprep.subr.bf16.mxu0 0
        %805 = vmatpush1.bf16.msra.mxu0 0
        %806 = vmatprep.subr.bf16.mxu0 0
        %807 = vmatpush1.bf16.msra.mxu0 0
        %808 = vmatprep.subr.bf16.mxu0 0
        %809 = vmatpush1.bf16.msra.mxu0 0
        %810 = vmatprep.subr.bf16.mxu0 0
        %811 = vmatpush1.bf16.msra.mxu0 0
        %812 = vmatprep.subr.bf16.mxu0 0
        %813 = vmatpush1.bf16.msra.mxu0 0
        %814 = vmatprep.subr.bf16.mxu0 0
        %815 = vmatpush1.bf16.msra.mxu0 0
        %816 = vmatprep.subr.bf16.mxu0 0
        %817 = vmatpush1.bf16.msra.mxu0 0
        %818 = vmatprep.mubr.bf16.mxu0 0
        %819 = vmatmul.mubr.bf16.gmra.mrb[0].mxu0 %v395
        %v820 = vpop.f32.mrb[0].mxu0
        %v821 = vadd.f32 %v464, %v820
        %v822 = vpop.f32.mrb[0].mxu0
        %v823 = vadd.f32 %v464, %v822
        %v824 = vpop.f32.mrb[0].mxu0
        %v825 = vpop.f32.mrb[0].mxu0
        %826 = vdwg.mxu0
        %827 = vmatprep.subr.bf16.mxu0 %v661
        %828 = vmatpush1.bf16.msra.mxu0 %v660
        %829 = vmatprep.subr.bf16.mxu0 %v669
        %830 = vmatpush1.bf16.msra.mxu0 %v668
        %831 = vmatprep.subr.bf16.mxu0 %v677
        %832 = vmatpush1.bf16.msra.mxu0 %v676
        %833 = vmatprep.subr.bf16.mxu0 %v685
        %834 = vmatpush1.bf16.msra.mxu0 %v684
        %835 = vmatprep.subr.bf16.mxu0 %v693
        %836 = vmatpush1.bf16.msra.mxu0 %v692
        %837 = vmatprep.subr.bf16.mxu0 %v701
        %838 = vmatpush1.bf16.msra.mxu0 %v700
        %839 = vmatprep.subr.bf16.mxu0 %v709
        %840 = vmatpush1.bf16.msra.mxu0 %v708
        %841 = vmatprep.subr.bf16.mxu0 %v717
        %842 = vmatpush1.bf16.msra.mxu0 %v716
        %843 = vmatprep.subr.bf16.mxu0 0
        %844 = vmatpush1.bf16.msra.mxu0 0
        %845 = vmatprep.subr.bf16.mxu0 0
        %846 = vmatpush1.bf16.msra.mxu0 0
        %847 = vmatprep.subr.bf16.mxu0 0
        %848 = vmatpush1.bf16.msra.mxu0 0
        %849 = vmatprep.subr.bf16.mxu0 0
        %850 = vmatpush1.bf16.msra.mxu0 0
        %851 = vmatprep.subr.bf16.mxu0 0
        %852 = vmatpush1.bf16.msra.mxu0 0
        %853 = vmatprep.subr.bf16.mxu0 0
        %854 = vmatpush1.bf16.msra.mxu0 0
        %855 = vmatprep.subr.bf16.mxu0 0
        %856 = vmatpush1.bf16.msra.mxu0 0
        %857 = vmatprep.subr.bf16.mxu0 0
        %858 = vmatpush1.bf16.msra.mxu0 0
        %859 = vmatprep.mubr.bf16.mxu0 0
        %860 = vmatmul.mubr.bf16.gmra.mrb[0].mxu0 %v395
        %v861 = vpop.f32.mrb[0].mxu0
        %v862 = vadd.f32 %v464, %v861
        %v863 = vpop.f32.mrb[0].mxu0
        %v864 = vadd.f32 %v464, %v863
        %v865 = vpop.f32.mrb[0].mxu0
        %v866 = vpop.f32.mrb[0].mxu0
        %867 = vdwg.mxu0
        %868 = vmatprep.subr.bf16.mxu0 %v663
        %869 = vmatpush1.bf16.msra.mxu0 %v662
        %870 = vmatprep.subr.bf16.mxu0 %v671
        %871 = vmatpush1.bf16.msra.mxu0 %v670
        %872 = vmatprep.subr.bf16.mxu0 %v679
        %873 = vmatpush1.bf16.msra.mxu0 %v678
        %874 = vmatprep.subr.bf16.mxu0 %v687
        %875 = vmatpush1.bf16.msra.mxu0 %v686
        %876 = vmatprep.subr.bf16.mxu0 %v695
        %877 = vmatpush1.bf16.msra.mxu0 %v694
        %878 = vmatprep.subr.bf16.mxu0 %v703
        %879 = vmatpush1.bf16.msra.mxu0 %v702
        %880 = vmatprep.subr.bf16.mxu0 %v711
        %881 = vmatpush1.bf16.msra.mxu0 %v710
        %882 = vmatprep.subr.bf16.mxu0 %v719
        %883 = vmatpush1.bf16.msra.mxu0 %v718
        %884 = vmatprep.subr.bf16.mxu0 0
        %885 = vmatpush1.bf16.msra.mxu0 0
        %886 = vmatprep.subr.bf16.mxu0 0
        %887 = vmatpush1.bf16.msra.mxu0 0
        %888 = vmatprep.subr.bf16.mxu0 0
        %889 = vmatpush1.bf16.msra.mxu0 0
        %890 = vmatprep.subr.bf16.mxu0 0
        %891 = vmatpush1.bf16.msra.mxu0 0
        %892 = vmatprep.subr.bf16.mxu0 0
        %893 = vmatpush1.bf16.msra.mxu0 0
        %894 = vmatprep.subr.bf16.mxu0 0
        %895 = vmatpush1.bf16.msra.mxu0 0
        %896 = vmatprep.subr.bf16.mxu0 0
        %897 = vmatpush1.bf16.msra.mxu0 0
        %898 = vmatprep.subr.bf16.mxu0 0
        %899 = vmatpush1.bf16.msra.mxu0 0
        %900 = vmatprep.mubr.bf16.mxu0 0
        %901 = vmatmul.mubr.bf16.gmra.mrb[0].mxu0 %v395
        %v902 = vpop.f32.mrb[0].mxu0
        %v903 = vadd.f32 %v464, %v902
        %v904 = vpop.f32.mrb[0].mxu0
        %v905 = vadd.f32 %v464, %v904
        %v906 = vpop.f32.mrb[0].mxu0
        %v907 = vpop.f32.mrb[0].mxu0
        %908 = vdwg.mxu0
        %909 = vmatprep.subr.bf16.mxu0 %v665
        %910 = vmatpush1.bf16.msra.mxu0 %v664
        %911 = vmatprep.subr.bf16.mxu0 %v673
        %912 = vmatpush1.bf16.msra.mxu0 %v672
        %913 = vmatprep.subr.bf16.mxu0 %v681
        %914 = vmatpush1.bf16.msra.mxu0 %v680
        %915 = vmatprep.subr.bf16.mxu0 %v689
        %916 = vmatpush1.bf16.msra.mxu0 %v688
        %917 = vmatprep.subr.bf16.mxu0 %v697
        %918 = vmatpush1.bf16.msra.mxu0 %v696
        %919 = vmatprep.subr.bf16.mxu0 %v705
        %920 = vmatpush1.bf16.msra.mxu0 %v704
        %921 = vmatprep.subr.bf16.mxu0 %v713
        %922 = vmatpush1.bf16.msra.mxu0 %v712
        %923 = vmatprep.subr.bf16.mxu0 %v721
        %924 = vmatpush1.bf16.msra.mxu0 %v720
        %925 = vmatprep.subr.bf16.mxu0 0
        %926 = vmatpush1.bf16.msra.mxu0 0
        %927 = vmatprep.subr.bf16.mxu0 0
        %928 = vmatpush1.bf16.msra.mxu0 0
        %929 = vmatprep.subr.bf16.mxu0 0
        %930 = vmatpush1.bf16.msra.mxu0 0
        %931 = vmatprep.subr.bf16.mxu0 0
        %932 = vmatpush1.bf16.msra.mxu0 0
        %933 = vmatprep.subr.bf16.mxu0 0
        %934 = vmatpush1.bf16.msra.mxu0 0
        %935 = vmatprep.subr.bf16.mxu0 0
        %936 = vmatpush1.bf16.msra.mxu0 0
        %937 = vmatprep.subr.bf16.mxu0 0
        %938 = vmatpush1.bf16.msra.mxu0 0
        %939 = vmatprep.subr.bf16.mxu0 0
        %940 = vmatpush1.bf16.msra.mxu0 0
        %941 = vmatprep.mubr.bf16.mxu0 0
        %942 = vmatmul.mubr.bf16.gmra.mrb[0].mxu0 %v395
        %v943 = vpop.f32.mrb[0].mxu0
        %v944 = vadd.f32 %v464, %v943
        %v945 = vpop.f32.mrb[0].mxu0
        %v946 = vadd.f32 %v464, %v945
        %v947 = vpop.f32.mrb[0].mxu0
        %v948 = vpop.f32.mrb[0].mxu0
        %949 = vdwg.mxu0
        %950 = vst [vmem:[%s384] sm:$0xff] %v821
        %951 = vst [vmem:[%s384 + $0x8] sm:$0xff] %v823
        %952 = vst [vmem:[%s384 + $0x10] sm:$0xff] %v862
        %953 = vst [vmem:[%s384 + $0x18] sm:$0xff] %v864
        %954 = vst [vmem:[%s384 + $0x20] sm:$0xff] %v903
        %955 = vst [vmem:[%s384 + $0x28] sm:$0xff] %v905
        %956 = vst [vmem:[%s384 + $0x30] sm:$0xff] %v944
        %957 = vst [vmem:[%s384 + $0x38] sm:$0xff] %v946
        %v958 = vadd.f32 %v821, %v823
        %v959 = vadd.f32 %v958, %v862
        %v960 = vadd.f32 %v959, %v864
        %v961 = vadd.f32 %v960, %v903
        %v962 = vadd.f32 %v961, %v905
        %v963 = vadd.f32 %v962, %v944
        %v964 = vadd.f32 %v963, %v946
        %965 = vadd.xlane.f32.xlu0 %v964
        %v966 = vpop.xlane.xlu0 %965
        %v967 = vmul.f32 %v821, %v821
        %v968 = vmul.f32 %v823, %v823
        %v969 = vmul.f32 %v862, %v862
        %v970 = vmul.f32 %v864, %v864
        %v971 = vmul.f32 %v903, %v903
        %v972 = vmul.f32 %v905, %v905
        %v973 = vmul.f32 %v944, %v944
        %v974 = vmul.f32 %v946, %v946
        %v975 = vadd.f32 %v967, %v968
        %v976 = vadd.f32 %v975, %v969
        %v977 = vadd.f32 %v976, %v970
        %v978 = vadd.f32 %v977, %v971
        %v979 = vadd.f32 %v978, %v972
        %v980 = vadd.f32 %v979, %v973
        %v981 = vadd.f32 %v980, %v974
        %982 = vadd.xlane.f32.xlu0 %v981
        %v983 = vpop.xlane.xlu0 %982
        %984 = vst [vmem:[%s389] sm:$0xff] %v966
        %985 = vst [vmem:[%s393] sm:$0xff] %v983
        %s986 = smul.u32 8, %s17
        %p987 = scmp.lt.s32.totalorder %s986, 63
        %s988 = scalar_select %p987, %s986, 63
        %s989 = smul.addr %s988, 8
        %s990 = scalar_lea.vmem %s3, %s989
        %p991 = scmp.lt.s32.totalorder %s17, 7
        %s992 = scalar_select %p991, %s17, 7
        %s993 = smul.addr %s992, 8
        %s994 = scalar_lea.vmem %s4, %s993
        %p995 = scmp.lt.s32.totalorder %s17, 7
        %s996 = scalar_select %p995, %s17, 7
        %s997 = smul.addr %s996, 8
        %s998 = scalar_lea.vmem %s5, %s997
        // Predicated region
        $region56: #{double_conv_forward.4} parent=50 // pred_check
          %p999 = pneg %p103
        $region57: #{double_conv_forward.4} parent=50 // pred_check_branch
          %1001 = sbr.rel (%p999) target = $region59
        $region58: #{double_conv_forward.4} parent=50 // pred_region
          %s1002 = smul.u32 8, %s17
        $region59: #{double_conv_forward.4} parent=50 // pred_fallthru
          _
        // Predicated region
        $region60: #{double_conv_forward.4} parent=50 // pred_check
          %p1003 = pneg %p129
        $region61: #{double_conv_forward.4} parent=50 // pred_check_branch
          %1005 = sbr.rel (%p1003) target = $region63
        $region62: #{double_conv_forward.4} parent=50 // pred_region
          _
        $region63: #{double_conv_forward.4} parent=50 // pred_fallthru
          _
        // Predicated region
        $region64: #{double_conv_forward.4} parent=50 // pred_check
          %p1006 = pneg %p155
        $region65: #{double_conv_forward.4} parent=50 // pred_check_branch
          %1008 = sbr.rel (%p1006) target = $region67
        $region66: #{double_conv_forward.4} parent=50 // pred_region
          _
        $region67: #{double_conv_forward.4} parent=50 // pred_fallthru
          _
      $region51: #{double_conv_forward.4} parent=5 // pred_fallthru
        _
      %p1009 = scmp.le.s32.totalorder 2, %s12
      // Predicated region
      $region68: #{double_conv_forward.4} parent=5 // pred_check
        %p1010 = pneg %p1009
      $region69: #{double_conv_forward.4} parent=5 // pred_check_branch
        %1012 = sbr.rel (%p1010) target = $region71
      $region70: #{double_conv_forward.4} parent=5 // pred_region
        %s1013 = ssub.s32 %s12, 2
        // Predicated region
        $region72: #{double_conv_forward.4} parent=70 // pred_check
          %p1014 = pneg %p109
        $region73: #{double_conv_forward.4} parent=70 // pred_check_branch
          %1016 = sbr.rel (%p1014) target = $region75
        $region74: #{double_conv_forward.4} parent=70 // pred_region
          %s1017 = smul.u32 8, %s18
          %p1018 = scmp.lt.s32.totalorder %s1017, 63
          %s1019 = scalar_select %p1018, %s1017, 63
          %s1020 = smul.addr %s1019, 8
          %s1021 = scalar_lea.vmem %s3, %s1020
        $region75: #{double_conv_forward.4} parent=70 // pred_fallthru
          _
        // Predicated region
        $region76: #{double_conv_forward.4} parent=70 // pred_check
          %p1022 = pneg %p135
        $region77: #{double_conv_forward.4} parent=70 // pred_check_branch
          %1024 = sbr.rel (%p1022) target = $region79
        $region78: #{double_conv_forward.4} parent=70 // pred_region
          %p1025 = scmp.lt.s32.totalorder %s18, 7
          %s1026 = scalar_select %p1025, %s18, 7
          %s1027 = smul.addr %s1026, 8
          %s1028 = scalar_lea.vmem %s4, %s1027
        $region79: #{double_conv_forward.4} parent=70 // pred_fallthru
          _
        // Predicated region
        $region80: #{double_conv_forward.4} parent=70 // pred_check
          %p1029 = pneg %p161
        $region81: #{double_conv_forward.4} parent=70 // pred_check_branch
          %1031 = sbr.rel (%p1029) target = $region83
        $region82: #{double_conv_forward.4} parent=70 // pred_region
          %p1032 = scmp.lt.s32.totalorder %s18, 7
          %s1033 = scalar_select %p1032, %s18, 7
          %s1034 = smul.addr %s1033, 8
          %s1035 = scalar_lea.vmem %s5, %s1034
        $region83: #{double_conv_forward.4} parent=70 // pred_fallthru
          _
      $region71: #{double_conv_forward.4} parent=5 // pred_fallthru
        _
    $region6: #{double_conv_forward.4} parent=1 // loop_footer
      %s16 = sadd.s32 1, %s12
    $region7: #{double_conv_forward.4} parent=1 // loop_footer_branch
      %11 = sbr.rel target = $region3
    $region8: #{double_conv_forward.4} parent=1 // loop_exit
      _

// kernel: double_conv_forward.5
$region0: #{double_conv_forward.5}
  #allocation0 [shape = 'u32[]', space=smem, size = 0x4, offset = 0x4, fixed_abs, tag = 'smem constant byte address 0x4 - core index']
  #allocation1 [shape = 'u32[144,128]{1,0:T(1,128)}', space=vmem, size = 0x12000, scoped, tag = 'internal scratch']
  %s0 = inlined_call_operand.vmem [shape: f32[8,1], index: 0, kind: input, shape index: {}]
  %s1 = inlined_call_operand.vmem [shape: f32[8,1], index: 1, kind: input, shape index: {}]
  %s2 = inlined_call_operand.vmem [shape: f32[8,8192], index: 2, kind: input, shape index: {}]
  %s3 = inlined_call_operand.vmem [shape: bf16[8,8192], index: 3, kind: output, shape index: {}]
  %s4 = sld [smem:[#allocation0]]
  $region45: #{double_conv_forward.5} parent=0
    _
  %s6 = ssub.s32 1, %s4
  %s7 = scalar_select 0, %s6, %s4
  loop: start=0, step=1, limit=10
  $region2: #{double_conv_forward.5} parent=0 // loop_pre_header
    _
  $region3: #{double_conv_forward.5} parent=0 // loop_header
    %s9 = sphi 0, %s13
    %p10 = scmp.ge.s32.totalorder %s9, 10
    %s17 = sphi 0, %s17
    %s19 = sphi 0, %s17
    %s20 = sphi 0, %s19
    %s34 = sphi 0, %s20
    %s38 = sphi 0, %s38
    %s40 = sphi 0, %s38
    %s41 = sphi 0, %s40
    %s55 = sphi 0, %s41
    %s61 = sphi 0, %s63
    %s64 = sphi 0, %s61
    %s65 = sphi 0, %s64
    %s81 = sphi 0, %s65
    %s87 = sphi 0, %s89
    %s90 = sphi 0, %s87
    %s91 = sphi 0, %s90
    %s107 = sphi 0, %s91
  $region4: #{double_conv_forward.5} parent=0 // loop_header_branch
    %12 = sbr.rel (%p10) target = $region8
  $region5: #{double_conv_forward.5} parent=0 // loop_body
    %s14 = ssub.s32 %s9, 1
    %s15 = ssub.s32 %s9, 2
    %s16 = sadd.s32 %s9, 1
    %s18 = sadd.s32 %s17, 1
    %p21 = scmp.eq.s32.totalorder %s9, 7
    %p22 = scmp.ne.s32.totalorder %s17, %s19
    %p23 = scmp.eq.s32.totalorder %s9, 0
    %p24 = por %p22, %p23
    %p25 = scmp.ne.s32.totalorder %s17, %s19
    %p26 = scmp.eq.s32.totalorder %s14, 7
    %p27 = por %p25, %p26
    %p28 = scmp.ne.s32.totalorder %s19, %s20
    %p29 = scmp.eq.s32.totalorder %s14, 0
    %p30 = por %p28, %p29
    %p31 = scmp.ne.s32.totalorder %s19, %s20
    %p32 = scmp.eq.s32.totalorder %s15, 7
    %p33 = por %p31, %p32
    %p35 = scmp.ne.s32.totalorder %s20, %s34
    %p36 = scmp.eq.s32.totalorder %s15, 0
    %p37 = por %p35, %p36
    %s39 = sadd.s32 %s38, 1
    %p42 = scmp.eq.s32.totalorder %s9, 7
    %p43 = scmp.ne.s32.totalorder %s38, %s40
    %p44 = scmp.eq.s32.totalorder %s9, 0
    %p45 = por %p43, %p44
    %p46 = scmp.ne.s32.totalorder %s38, %s40
    %p47 = scmp.eq.s32.totalorder %s14, 7
    %p48 = por %p46, %p47
    %p49 = scmp.ne.s32.totalorder %s40, %s41
    %p50 = scmp.eq.s32.totalorder %s14, 0
    %p51 = por %p49, %p50
    %p52 = scmp.ne.s32.totalorder %s40, %s41
    %p53 = scmp.eq.s32.totalorder %s15, 7
    %p54 = por %p52, %p53
    %p56 = scmp.ne.s32.totalorder %s41, %s55
    %p57 = scmp.eq.s32.totalorder %s15, 0
    %p58 = por %p56, %p57
    %s59 = ssub.s32 %s9, %s16
    %p60 = scmp.eq.s32.totalorder %s59, 0
    %s62 = sadd.s32 %s61, 1
    %s63 = scalar_select %p60, %s61, %s62
    %p66 = pneg %p60
    %p67 = scmp.eq.s32.totalorder %s9, 7
    %p68 = por %p66, %p67
    %p69 = scmp.ne.s32.totalorder %s61, %s64
    %p70 = scmp.eq.s32.totalorder %s9, 0
    %p71 = por %p69, %p70
    %p72 = scmp.ne.s32.totalorder %s61, %s64
    %p73 = scmp.eq.s32.totalorder %s14, 7
    %p74 = por %p72, %p73
    %p75 = scmp.ne.s32.totalorder %s64, %s65
    %p76 = scmp.eq.s32.totalorder %s14, 0
    %p77 = por %p75, %p76
    %p78 = scmp.ne.s32.totalorder %s64, %s65
    %p79 = scmp.eq.s32.totalorder %s15, 7
    %p80 = por %p78, %p79
    %p82 = scmp.ne.s32.totalorder %s65, %s81
    %p83 = scmp.eq.s32.totalorder %s15, 0
    %p84 = por %p82, %p83
    %s85 = ssub.s32 %s9, %s16
    %p86 = scmp.eq.s32.totalorder %s85, 0
    %s88 = sadd.s32 %s87, 1
    %s89 = scalar_select %p86, %s87, %s88
    %p92 = pneg %p86
    %p93 = scmp.eq.s32.totalorder %s9, 7
    %p94 = por %p92, %p93
    %p95 = scmp.ne.s32.totalorder %s87, %s90
    %p96 = scmp.eq.s32.totalorder %s9, 0
    %p97 = por %p95, %p96
    %p98 = scmp.ne.s32.totalorder %s87, %s90
    %p99 = scmp.eq.s32.totalorder %s14, 7
    %p100 = por %p98, %p99
    %p101 = scmp.ne.s32.totalorder %s90, %s91
    %p102 = scmp.eq.s32.totalorder %s14, 0
    %p103 = por %p101, %p102
    %p104 = scmp.ne.s32.totalorder %s90, %s91
    %p105 = scmp.eq.s32.totalorder %s15, 7
    %p106 = por %p104, %p105
    %p108 = scmp.ne.s32.totalorder %s91, %s107
    %p109 = scmp.eq.s32.totalorder %s15, 0
    %p110 = por %p108, %p109
    %p111 = scmp.le.s32.totalorder 1, %s9
    %p112 = scmp.lt.s32.totalorder %s9, 9
    %p113 = pnand %p111, %p112
    %p114 = pneg %p113
    // Predicated region
    $region9: #{double_conv_forward.5} parent=5 // pred_check
      _
    $region10: #{double_conv_forward.5} parent=5 // pred_check_branch
      %116 = sbr.rel (%p113) target = $region12
    $region11: #{double_conv_forward.5} parent=5 // pred_region
      %s117 = ssub.s32 %s9, 1
      // Predicated region
      $region13: #{double_conv_forward.5} parent=11 // pred_check
        %p118 = pneg %p30
      $region14: #{double_conv_forward.5} parent=11 // pred_check_branch
        %120 = sbr.rel (%p118) target = $region16
      $region15: #{double_conv_forward.5} parent=11 // pred_region
        _
      $region16: #{double_conv_forward.5} parent=11 // pred_fallthru
        _
      // Predicated region
      $region17: #{double_conv_forward.5} parent=11 // pred_check
        %p121 = pneg %p51
      $region18: #{double_conv_forward.5} parent=11 // pred_check_branch
        %123 = sbr.rel (%p121) target = $region20
      $region19: #{double_conv_forward.5} parent=11 // pred_region
        _
      $region20: #{double_conv_forward.5} parent=11 // pred_fallthru
        _
    $region12: #{double_conv_forward.5} parent=5 // pred_fallthru
      _
    %p124 = scmp.lt.s32.totalorder %s9, 8
    // Predicated region
    $region21: #{double_conv_forward.5} parent=5 // pred_check
      %p125 = pneg %p124
    $region22: #{double_conv_forward.5} parent=5 // pred_check_branch
      %127 = sbr.rel (%p125) target = $region24
    $region23: #{double_conv_forward.5} parent=5 // pred_region
      // Predicated region
      $region25: #{double_conv_forward.5} parent=23 // pred_check
        %p128 = pneg %p71
      $region26: #{double_conv_forward.5} parent=23 // pred_check_branch
        %130 = sbr.rel (%p128) target = $region28
      $region27: #{double_conv_forward.5} parent=23 // pred_region
        %s131 = smul.u32 8, %s9
        %p132 = scmp.lt.s32.totalorder %s131, 63
        %s133 = scalar_select %p132, %s131, 63
        %s134 = smul.addr %s133, 8
        %s135 = scalar_lea.vmem %s2, %s134
        %s136 = smul.u32 8, %s9
      $region28: #{double_conv_forward.5} parent=23 // pred_fallthru
        _
    $region24: #{double_conv_forward.5} parent=5 // pred_fallthru
      _
    %p137 = scmp.le.s32.totalorder 1, %s9
    %p138 = scmp.lt.s32.totalorder %s9, 9
    %p139 = pnand %p137, %p138
    %p140 = pneg %p139
    // Predicated region
    $region29: #{double_conv_forward.5} parent=5 // pred_check
      _
    $region30: #{double_conv_forward.5} parent=5 // pred_check_branch
      %142 = sbr.rel (%p139) target = $region32
    $region31: #{double_conv_forward.5} parent=5 // pred_region
      %s143 = ssub.s32 %s9, 1
      %p144 = pneg %p30
      %p145 = pneg %p27
      %p146 = pneg %p51
      %p147 = pneg %p48
      %s148 = smul.u32 8, %s14
      %p149 = scmp.lt.s32.totalorder %s148, 63
      %s150 = scalar_select %p149, %s148, 63
      %s151 = smul.addr %s150, 8
      %s152 = scalar_lea.vmem %s2, %s151
      %p153 = pneg %p77
      %p154 = pneg %p74
      %p155 = pneg %p103
      %p156 = pneg %p100
      %s157 = smul.u32 8, %s14
      %p158 = scmp.lt.s32.totalorder %s157, 63
      %s159 = scalar_select %p158, %s157, 63
      %s160 = smul.addr %s159, 4
      %s161 = scalar_lea.vmem %s3, %s160
      %s162 = smul.u32 8, %s14
      %p163 = scmp.lt.s32.totalorder %s162, 63
      %s164 = scalar_select %p163, %s162, 63
      %s165 = smul.addr %s164, 8
      %s166 = scalar_lea.vmem %s2, %s165
      %s167 = smul.u32 8, %s14
      %s168 = smul.u32 8, %s14
      %p169 = scmp.lt.s32.totalorder %s168, 63
      %s170 = scalar_select %p169, %s168, 63
      %s171 = smul.addr %s170, 4
      %s172 = scalar_lea.vmem %s3, %s171
      %s173 = smul.u32 8, %s14
      %v174 = vld [vmem:[%s166] sm:$0xff]
      %v175 = vld [vmem:[%s166 + $0x8] sm:$0xff]
      %v176 = vld [vmem:[%s166 + $0x10] sm:$0xff]
      %v177 = vld [vmem:[%s166 + $0x18] sm:$0xff]
      %v178 = vld [vmem:[%s166 + $0x20] sm:$0xff]
      %v179 = vld [vmem:[%s166 + $0x28] sm:$0xff]
      %v180 = vld [vmem:[%s166 + $0x30] sm:$0xff]
      %v181 = vld [vmem:[%s166 + $0x38] sm:$0xff]
      %v182 = vld [vmem:[%s0] sm:$0xff]
      %184 = vset.pattern.permute.xlu0 0
      %185 = vperm.xlu0 %184, %v182
      %v186 = vpop.permute.xlu0 %185
      %v188 = vmul.f32 %v174, %v186
      %v189 = vmul.f32 %v175, %v186
      %v190 = vmul.f32 %v176, %v186
      %v191 = vmul.f32 %v177, %v186
      %v192 = vmul.f32 %v178, %v186
      %v193 = vmul.f32 %v179, %v186
      %v194 = vmul.f32 %v180, %v186
      %v195 = vmul.f32 %v181, %v186
      %v196 = vld [vmem:[%s1] sm:$0xff]
      %198 = vset.pattern.permute.xlu0 0
      %199 = vperm.xlu0 %198, %v196
      %v200 = vpop.permute.xlu0 %199
      %v202 = vadd.f32 %v188, %v200
      %v203 = vadd.f32 %v189, %v200
      %v204 = vadd.f32 %v190, %v200
      %v205 = vadd.f32 %v191, %v200
      %v206 = vadd.f32 %v192, %v200
      %v207 = vadd.f32 %v193, %v200
      %v208 = vadd.f32 %v194, %v200
      %v209 = vadd.f32 %v195, %v200
      %v210 = vmax.f32 %v202, 0.0
      %v211 = vmax.f32 %v203, 0.0
      %v212 = vmax.f32 %v204, 0.0
      %v213 = vmax.f32 %v205, 0.0
      %v214 = vmax.f32 %v206, 0.0
      %v215 = vmax.f32 %v207, 0.0
      %v216 = vmax.f32 %v208, 0.0
      %v217 = vmax.f32 %v209, 0.0
      %v218 = vpack.c.bf16 %v210, %v210
      %v219 = vpack.c.bf16 %v211, %v211
      %v220 = vpack.c.bf16 %v212, %v212
      %v221 = vpack.c.bf16 %v213, %v213
      %v222 = vpack.c.bf16 %v214, %v214
      %v223 = vpack.c.bf16 %v215, %v215
      %v224 = vpack.c.bf16 %v216, %v216
      %v225 = vpack.c.bf16 %v217, %v217
      %v234 = vunpack.c.l.b16 %v218
      %v235 = vunpack.c.l.b16 %v219
      %v236 = vunpack.c.l.b16 %v220
      %v237 = vunpack.c.l.b16 %v221
      %v238 = vunpack.c.l.b16 %v222
      %v239 = vunpack.c.l.b16 %v223
      %v240 = vunpack.c.l.b16 %v224
      %v241 = vunpack.c.l.b16 %v225
      %v242 = vpack.c.b16 %v235, %v234
      %v243 = vpack.c.b16 %v237, %v236
      %v244 = vpack.c.b16 %v239, %v238
      %v245 = vpack.c.b16 %v241, %v240
      %250 = vst [vmem:[%s172] sm:$0xff] %v242
      %251 = vst [vmem:[%s172 + $0x8] sm:$0xff] %v243
      %252 = vst [vmem:[%s172 + $0x10] sm:$0xff] %v244
      %253 = vst [vmem:[%s172 + $0x18] sm:$0xff] %v245
      %s254 = smul.u32 8, %s14
      %p255 = scmp.lt.s32.totalorder %s254, 63
      %s256 = scalar_select %p255, %s254, 63
      %s257 = smul.addr %s256, 4
      %s258 = scalar_lea.vmem %s3, %s257
      // Predicated region
      $region33: #{double_conv_forward.5} parent=31 // pred_check
        %p259 = pneg %p100
      $region34: #{double_conv_forward.5} parent=31 // pred_check_branch
        %261 = sbr.rel (%p259) target = $region36
      $region35: #{double_conv_forward.5} parent=31 // pred_region
        %s262 = smul.u32 8, %s14
      $region36: #{double_conv_forward.5} parent=31 // pred_fallthru
        _
    $region32: #{double_conv_forward.5} parent=5 // pred_fallthru
      _
    %p263 = scmp.le.s32.totalorder 2, %s9
    // Predicated region
    $region37: #{double_conv_forward.5} parent=5 // pred_check
      %p264 = pneg %p263
    $region38: #{double_conv_forward.5} parent=5 // pred_check_branch
      %266 = sbr.rel (%p264) target = $region40
    $region39: #{double_conv_forward.5} parent=5 // pred_region
      %s267 = ssub.s32 %s9, 2
      // Predicated region
      $region41: #{double_conv_forward.5} parent=39 // pred_check
        %p268 = pneg %p106
      $region42: #{double_conv_forward.5} parent=39 // pred_check_branch
        %270 = sbr.rel (%p268) target = $region44
      $region43: #{double_conv_forward.5} parent=39 // pred_region
        %s271 = smul.u32 8, %s15
        %p272 = scmp.lt.s32.totalorder %s271, 63
        %s273 = scalar_select %p272, %s271, 63
        %s274 = smul.addr %s273, 4
        %s275 = scalar_lea.vmem %s3, %s274
      $region44: #{double_conv_forward.5} parent=39 // pred_fallthru
        _
    $region40: #{double_conv_forward.5} parent=5 // pred_fallthru
      _
  $region6: #{double_conv_forward.5} parent=0 // loop_footer
    %s13 = sadd.s32 1, %s9
  $region7: #{double_conv_forward.5} parent=0 // loop_footer_branch
    %8 = sbr.rel target = $region3
  $region8: #{double_conv_forward.5} parent=0 // loop_exit
    _

// kernel: double_conv_forward.7
$region0: #{double_conv_forward.7}
  #allocation0 [shape = 'u32[]', space=smem, size = 0x4, offset = 0x4, fixed_abs, tag = 'smem constant byte address 0x4 - core index']
  #allocation1 [shape = 'u32[144,128]{1,0:T(1,128)}', space=vmem, size = 0x12000, scoped, tag = 'internal scratch']
  %s0 = inlined_call_operand.vmem [shape: f32[8,1], index: 0, kind: input, shape index: {}]
  %s1 = inlined_call_operand.vmem [shape: f32[8,1], index: 1, kind: input, shape index: {}]
  %s2 = inlined_call_operand.vmem [shape: f32[8,8192], index: 2, kind: input, shape index: {}]
  %s3 = inlined_call_operand.vmem [shape: f32[8,8192], index: 3, kind: output, shape index: {}]
  %s4 = sld [smem:[#allocation0]]
  $region45: #{double_conv_forward.7} parent=0
    _
  %s6 = ssub.s32 1, %s4
  %s7 = scalar_select 0, %s6, %s4
  loop: start=0, step=1, limit=10
  $region2: #{double_conv_forward.7} parent=0 // loop_pre_header
    _
  $region3: #{double_conv_forward.7} parent=0 // loop_header
    %s9 = sphi 0, %s13
    %p10 = scmp.ge.s32.totalorder %s9, 10
    %s17 = sphi 0, %s17
    %s19 = sphi 0, %s17
    %s20 = sphi 0, %s19
    %s34 = sphi 0, %s20
    %s38 = sphi 0, %s38
    %s40 = sphi 0, %s38
    %s41 = sphi 0, %s40
    %s55 = sphi 0, %s41
    %s61 = sphi 0, %s63
    %s64 = sphi 0, %s61
    %s65 = sphi 0, %s64
    %s81 = sphi 0, %s65
    %s87 = sphi 0, %s89
    %s90 = sphi 0, %s87
    %s91 = sphi 0, %s90
    %s107 = sphi 0, %s91
  $region4: #{double_conv_forward.7} parent=0 // loop_header_branch
    %12 = sbr.rel (%p10) target = $region8
  $region5: #{double_conv_forward.7} parent=0 // loop_body
    %s14 = ssub.s32 %s9, 1
    %s15 = ssub.s32 %s9, 2
    %s16 = sadd.s32 %s9, 1
    %s18 = sadd.s32 %s17, 1
    %p21 = scmp.eq.s32.totalorder %s9, 7
    %p22 = scmp.ne.s32.totalorder %s17, %s19
    %p23 = scmp.eq.s32.totalorder %s9, 0
    %p24 = por %p22, %p23
    %p25 = scmp.ne.s32.totalorder %s17, %s19
    %p26 = scmp.eq.s32.totalorder %s14, 7
    %p27 = por %p25, %p26
    %p28 = scmp.ne.s32.totalorder %s19, %s20
    %p29 = scmp.eq.s32.totalorder %s14, 0
    %p30 = por %p28, %p29
    %p31 = scmp.ne.s32.totalorder %s19, %s20
    %p32 = scmp.eq.s32.totalorder %s15, 7
    %p33 = por %p31, %p32
    %p35 = scmp.ne.s32.totalorder %s20, %s34
    %p36 = scmp.eq.s32.totalorder %s15, 0
    %p37 = por %p35, %p36
    %s39 = sadd.s32 %s38, 1
    %p42 = scmp.eq.s32.totalorder %s9, 7
    %p43 = scmp.ne.s32.totalorder %s38, %s40
    %p44 = scmp.eq.s32.totalorder %s9, 0
    %p45 = por %p43, %p44
    %p46 = scmp.ne.s32.totalorder %s38, %s40
    %p47 = scmp.eq.s32.totalorder %s14, 7
    %p48 = por %p46, %p47
    %p49 = scmp.ne.s32.totalorder %s40, %s41
    %p50 = scmp.eq.s32.totalorder %s14, 0
    %p51 = por %p49, %p50
    %p52 = scmp.ne.s32.totalorder %s40, %s41
    %p53 = scmp.eq.s32.totalorder %s15, 7
    %p54 = por %p52, %p53
    %p56 = scmp.ne.s32.totalorder %s41, %s55
    %p57 = scmp.eq.s32.totalorder %s15, 0
    %p58 = por %p56, %p57
    %s59 = ssub.s32 %s9, %s16
    %p60 = scmp.eq.s32.totalorder %s59, 0
    %s62 = sadd.s32 %s61, 1
    %s63 = scalar_select %p60, %s61, %s62
    %p66 = pneg %p60
    %p67 = scmp.eq.s32.totalorder %s9, 7
    %p68 = por %p66, %p67
    %p69 = scmp.ne.s32.totalorder %s61, %s64
    %p70 = scmp.eq.s32.totalorder %s9, 0
    %p71 = por %p69, %p70
    %p72 = scmp.ne.s32.totalorder %s61, %s64
    %p73 = scmp.eq.s32.totalorder %s14, 7
    %p74 = por %p72, %p73
    %p75 = scmp.ne.s32.totalorder %s64, %s65
    %p76 = scmp.eq.s32.totalorder %s14, 0
    %p77 = por %p75, %p76
    %p78 = scmp.ne.s32.totalorder %s64, %s65
    %p79 = scmp.eq.s32.totalorder %s15, 7
    %p80 = por %p78, %p79
    %p82 = scmp.ne.s32.totalorder %s65, %s81
    %p83 = scmp.eq.s32.totalorder %s15, 0
    %p84 = por %p82, %p83
    %s85 = ssub.s32 %s9, %s16
    %p86 = scmp.eq.s32.totalorder %s85, 0
    %s88 = sadd.s32 %s87, 1
    %s89 = scalar_select %p86, %s87, %s88
    %p92 = pneg %p86
    %p93 = scmp.eq.s32.totalorder %s9, 7
    %p94 = por %p92, %p93
    %p95 = scmp.ne.s32.totalorder %s87, %s90
    %p96 = scmp.eq.s32.totalorder %s9, 0
    %p97 = por %p95, %p96
    %p98 = scmp.ne.s32.totalorder %s87, %s90
    %p99 = scmp.eq.s32.totalorder %s14, 7
    %p100 = por %p98, %p99
    %p101 = scmp.ne.s32.totalorder %s90, %s91
    %p102 = scmp.eq.s32.totalorder %s14, 0
    %p103 = por %p101, %p102
    %p104 = scmp.ne.s32.totalorder %s90, %s91
    %p105 = scmp.eq.s32.totalorder %s15, 7
    %p106 = por %p104, %p105
    %p108 = scmp.ne.s32.totalorder %s91, %s107
    %p109 = scmp.eq.s32.totalorder %s15, 0
    %p110 = por %p108, %p109
    %p111 = scmp.le.s32.totalorder 1, %s9
    %p112 = scmp.lt.s32.totalorder %s9, 9
    %p113 = pnand %p111, %p112
    %p114 = pneg %p113
    // Predicated region
    $region9: #{double_conv_forward.7} parent=5 // pred_check
      _
    $region10: #{double_conv_forward.7} parent=5 // pred_check_branch
      %116 = sbr.rel (%p113) target = $region12
    $region11: #{double_conv_forward.7} parent=5 // pred_region
      %s117 = ssub.s32 %s9, 1
      // Predicated region
      $region13: #{double_conv_forward.7} parent=11 // pred_check
        %p118 = pneg %p30
      $region14: #{double_conv_forward.7} parent=11 // pred_check_branch
        %120 = sbr.rel (%p118) target = $region16
      $region15: #{double_conv_forward.7} parent=11 // pred_region
        _
      $region16: #{double_conv_forward.7} parent=11 // pred_fallthru
        _
      // Predicated region
      $region17: #{double_conv_forward.7} parent=11 // pred_check
        %p121 = pneg %p51
      $region18: #{double_conv_forward.7} parent=11 // pred_check_branch
        %123 = sbr.rel (%p121) target = $region20
      $region19: #{double_conv_forward.7} parent=11 // pred_region
        _
      $region20: #{double_conv_forward.7} parent=11 // pred_fallthru
        _
    $region12: #{double_conv_forward.7} parent=5 // pred_fallthru
      _
    %p124 = scmp.lt.s32.totalorder %s9, 8
    // Predicated region
    $region21: #{double_conv_forward.7} parent=5 // pred_check
      %p125 = pneg %p124
    $region22: #{double_conv_forward.7} parent=5 // pred_check_branch
      %127 = sbr.rel (%p125) target = $region24
    $region23: #{double_conv_forward.7} parent=5 // pred_region
      // Predicated region
      $region25: #{double_conv_forward.7} parent=23 // pred_check
        %p128 = pneg %p71
      $region26: #{double_conv_forward.7} parent=23 // pred_check_branch
        %130 = sbr.rel (%p128) target = $region28
      $region27: #{double_conv_forward.7} parent=23 // pred_region
        %s131 = smul.u32 8, %s9
        %p132 = scmp.lt.s32.totalorder %s131, 63
        %s133 = scalar_select %p132, %s131, 63
        %s134 = smul.addr %s133, 8
        %s135 = scalar_lea.vmem %s2, %s134
        %s136 = smul.u32 8, %s9
      $region28: #{double_conv_forward.7} parent=23 // pred_fallthru
        _
    $region24: #{double_conv_forward.7} parent=5 // pred_fallthru
      _
    %p137 = scmp.le.s32.totalorder 1, %s9
    %p138 = scmp.lt.s32.totalorder %s9, 9
    %p139 = pnand %p137, %p138
    %p140 = pneg %p139
    // Predicated region
    $region29: #{double_conv_forward.7} parent=5 // pred_check
      _
    $region30: #{double_conv_forward.7} parent=5 // pred_check_branch
      %142 = sbr.rel (%p139) target = $region32
    $region31: #{double_conv_forward.7} parent=5 // pred_region
      %s143 = ssub.s32 %s9, 1
      %p144 = pneg %p30
      %p145 = pneg %p27
      %p146 = pneg %p51
      %p147 = pneg %p48
      %s148 = smul.u32 8, %s14
      %p149 = scmp.lt.s32.totalorder %s148, 63
      %s150 = scalar_select %p149, %s148, 63
      %s151 = smul.addr %s150, 8
      %s152 = scalar_lea.vmem %s2, %s151
      %p153 = pneg %p77
      %p154 = pneg %p74
      %p155 = pneg %p103
      %p156 = pneg %p100
      %s157 = smul.u32 8, %s14
      %p158 = scmp.lt.s32.totalorder %s157, 63
      %s159 = scalar_select %p158, %s157, 63
      %s160 = smul.addr %s159, 8
      %s161 = scalar_lea.vmem %s3, %s160
      %s162 = smul.u32 8, %s14
      %p163 = scmp.lt.s32.totalorder %s162, 63
      %s164 = scalar_select %p163, %s162, 63
      %s165 = smul.addr %s164, 8
      %s166 = scalar_lea.vmem %s2, %s165
      %s167 = smul.u32 8, %s14
      %s168 = smul.u32 8, %s14
      %p169 = scmp.lt.s32.totalorder %s168, 63
      %s170 = scalar_select %p169, %s168, 63
      %s171 = smul.addr %s170, 8
      %s172 = scalar_lea.vmem %s3, %s171
      %s173 = smul.u32 8, %s14
      %v174 = vld [vmem:[%s166] sm:$0xff]
      %v175 = vld [vmem:[%s166 + $0x8] sm:$0xff]
      %v176 = vld [vmem:[%s166 + $0x10] sm:$0xff]
      %v177 = vld [vmem:[%s166 + $0x18] sm:$0xff]
      %v178 = vld [vmem:[%s166 + $0x20] sm:$0xff]
      %v179 = vld [vmem:[%s166 + $0x28] sm:$0xff]
      %v180 = vld [vmem:[%s166 + $0x30] sm:$0xff]
      %v181 = vld [vmem:[%s166 + $0x38] sm:$0xff]
      %v182 = vld [vmem:[%s0] sm:$0xff]
      %184 = vset.pattern.permute.xlu0 0
      %185 = vperm.xlu0 %184, %v182
      %v186 = vpop.permute.xlu0 %185
      %v188 = vmul.f32 %v174, %v186
      %v189 = vmul.f32 %v175, %v186
      %v190 = vmul.f32 %v176, %v186
      %v191 = vmul.f32 %v177, %v186
      %v192 = vmul.f32 %v178, %v186
      %v193 = vmul.f32 %v179, %v186
      %v194 = vmul.f32 %v180, %v186
      %v195 = vmul.f32 %v181, %v186
      %v196 = vld [vmem:[%s1] sm:$0xff]
      %198 = vset.pattern.permute.xlu0 0
      %199 = vperm.xlu0 %198, %v196
      %v200 = vpop.permute.xlu0 %199
      %v202 = vadd.f32 %v188, %v200
      %v203 = vadd.f32 %v189, %v200
      %v204 = vadd.f32 %v190, %v200
      %v205 = vadd.f32 %v191, %v200
      %v206 = vadd.f32 %v192, %v200
      %v207 = vadd.f32 %v193, %v200
      %v208 = vadd.f32 %v194, %v200
      %v209 = vadd.f32 %v195, %v200
      %v210 = vmax.f32 %v202, 0.0
      %v211 = vmax.f32 %v203, 0.0
      %v212 = vmax.f32 %v204, 0.0
      %v213 = vmax.f32 %v205, 0.0
      %v214 = vmax.f32 %v206, 0.0
      %v215 = vmax.f32 %v207, 0.0
      %v216 = vmax.f32 %v208, 0.0
      %v217 = vmax.f32 %v209, 0.0
      %218 = vst [vmem:[%s172] sm:$0xff] %v210
      %219 = vst [vmem:[%s172 + $0x8] sm:$0xff] %v211
      %220 = vst [vmem:[%s172 + $0x10] sm:$0xff] %v212
      %221 = vst [vmem:[%s172 + $0x18] sm:$0xff] %v213
      %222 = vst [vmem:[%s172 + $0x20] sm:$0xff] %v214
      %223 = vst [vmem:[%s172 + $0x28] sm:$0xff] %v215
      %224 = vst [vmem:[%s172 + $0x30] sm:$0xff] %v216
      %225 = vst [vmem:[%s172 + $0x38] sm:$0xff] %v217
      %s226 = smul.u32 8, %s14
      %p227 = scmp.lt.s32.totalorder %s226, 63
      %s228 = scalar_select %p227, %s226, 63
      %s229 = smul.addr %s228, 8
      %s230 = scalar_lea.vmem %s3, %s229
      // Predicated region
      $region33: #{double_conv_forward.7} parent=31 // pred_check
        %p231 = pneg %p100
      $region34: #{double_conv_forward.7} parent=31 // pred_check_branch
        %233 = sbr.rel (%p231) target = $region36
      $region35: #{double_conv_forward.7} parent=31 // pred_region
        %s234 = smul.u32 8, %s14
      $region36: #{double_conv_forward.7} parent=31 // pred_fallthru
        _
    $region32: #{double_conv_forward.7} parent=5 // pred_fallthru
      _
    %p235 = scmp.le.s32.totalorder 2, %s9
    // Predicated region
    $region37: #{double_conv_forward.7} parent=5 // pred_check
      %p236 = pneg %p235
    $region38: #{double_conv_forward.7} parent=5 // pred_check_branch
      %238 = sbr.rel (%p236) target = $region40
    $region39: #{double_conv_forward.7} parent=5 // pred_region
      %s239 = ssub.s32 %s9, 2
      // Predicated region
      $region41: #{double_conv_forward.7} parent=39 // pred_check
        %p240 = pneg %p106
      $region42: #{double_conv_forward.7} parent=39 // pred_check_branch
        %242 = sbr.rel (%p240) target = $region44
      $region43: #{double_conv_forward.7} parent=39 // pred_region
        %s243 = smul.u32 8, %s15
        %p244 = scmp.lt.s32.totalorder %s243, 63
        %s245 = scalar_select %p244, %s243, 63
        %s246 = smul.addr %s245, 8
        %s247 = scalar_lea.vmem %s3, %s246
      $region44: #{double_conv_forward.7} parent=39 // pred_fallthru
        _
    $region40: #{double_conv_forward.7} parent=5 // pred_fallthru
      _
  $region6: #{double_conv_forward.7} parent=0 // loop_footer
    %s13 = sadd.s32 1, %s9
  $region7: #{double_conv_forward.7} parent=0 // loop_footer_branch
    %8 = sbr.rel target = $region3
  $region8: #{double_conv_forward.7} parent=0 // loop_exit
    _

// kernel: double_conv_forward.6
$region0: #{double_conv_forward.6}
  #allocation0 [shape = 'u32[]', space=smem, size = 0x4, offset = 0x4, fixed_abs, tag = 'smem constant byte address 0x4 - core index']
  #allocation1 [shape = 'u32[144,128]{1,0:T(1,128)}', space=vmem, size = 0x12000, scoped, tag = 'internal scratch']
  %s0 = inlined_call_operand.vmem [shape: bf16[8,256], index: 0, kind: input, shape index: {}]
  %s1 = inlined_call_operand.vmem [shape: f32[8,1], index: 1, kind: input, shape index: {}]
  %s2 = inlined_call_operand.vmem [shape: bf16[256,8192], index: 2, kind: input, shape index: {}]
  %s3 = inlined_call_operand.vmem [shape: f32[8,8192], index: 3, kind: output, shape index: {0}]
  %s4 = inlined_call_operand.vmem [shape: f32[8,8,128], index: 4, kind: output, shape index: {1}]
  %s5 = inlined_call_operand.vmem [shape: f32[8,8,128], index: 5, kind: output, shape index: {2}]
  %6 = xla_tuple %s3, %s4, %s5
  %s7 = sld [smem:[#allocation0]]
  $region84: #{double_conv_forward.6} parent=0
    _
  %s9 = ssub.s32 1, %s7
  %s10 = scalar_select 0, %s9, %s7
  $region1: #{double_conv_forward.6} parent=0
    #allocation2 [shape = 'u8[1048576]{0}', space=vmem, size = 0x100000, scoped, tag = 'input window, operand 2']
    loop: start=0, step=1, limit=10
    $region2: #{double_conv_forward.6} parent=1 // loop_pre_header
      _
    $region3: #{double_conv_forward.6} parent=1 // loop_header
      %s12 = sphi 0, %s16
      %p13 = scmp.ge.s32.totalorder %s12, 10
      %s20 = sphi 0, %s20
      %s22 = sphi 0, %s20
      %s23 = sphi 0, %s22
      %s37 = sphi 0, %s23
      %s41 = sphi 0, %s41
      %s43 = sphi 0, %s41
      %s44 = sphi 0, %s43
      %s58 = sphi 0, %s44
      %s64 = sphi 0, %s66
      %s67 = sphi 0, %s64
      %s68 = sphi 0, %s67
      %s84 = sphi 0, %s68
      %s90 = sphi 0, %s92
      %s93 = sphi 0, %s90
      %s94 = sphi 0, %s93
      %s110 = sphi 0, %s94
      %s116 = sphi 0, %s118
      %s119 = sphi 0, %s116
      %s120 = sphi 0, %s119
      %s136 = sphi 0, %s120
      %s142 = sphi 0, %s144
      %s145 = sphi 0, %s142
      %s146 = sphi 0, %s145
      %s162 = sphi 0, %s146
    $region4: #{double_conv_forward.6} parent=1 // loop_header_branch
      %15 = sbr.rel (%p13) target = $region8
    $region5: #{double_conv_forward.6} parent=1 // loop_body
      %s17 = ssub.s32 %s12, 1
      %s18 = ssub.s32 %s12, 2
      %s19 = sadd.s32 %s12, 1
      %s21 = sadd.s32 %s20, 1
      %p24 = scmp.eq.s32.totalorder %s12, 7
      %p25 = scmp.ne.s32.totalorder %s20, %s22
      %p26 = scmp.eq.s32.totalorder %s12, 0
      %p27 = por %p25, %p26
      %p28 = scmp.ne.s32.totalorder %s20, %s22
      %p29 = scmp.eq.s32.totalorder %s17, 7
      %p30 = por %p28, %p29
      %p31 = scmp.ne.s32.totalorder %s22, %s23
      %p32 = scmp.eq.s32.totalorder %s17, 0
      %p33 = por %p31, %p32
      %p34 = scmp.ne.s32.totalorder %s22, %s23
      %p35 = scmp.eq.s32.totalorder %s18, 7
      %p36 = por %p34, %p35
      %p38 = scmp.ne.s32.totalorder %s23, %s37
      %p39 = scmp.eq.s32.totalorder %s18, 0
      %p40 = por %p38, %p39
      %s42 = sadd.s32 %s41, 1
      %p45 = scmp.eq.s32.totalorder %s12, 7
      %p46 = scmp.ne.s32.totalorder %s41, %s43
      %p47 = scmp.eq.s32.totalorder %s12, 0
      %p48 = por %p46, %p47
      %p49 = scmp.ne.s32.totalorder %s41, %s43
      %p50 = scmp.eq.s32.totalorder %s17, 7
      %p51 = por %p49, %p50
      %p52 = scmp.ne.s32.totalorder %s43, %s44
      %p53 = scmp.eq.s32.totalorder %s17, 0
      %p54 = por %p52, %p53
      %p55 = scmp.ne.s32.totalorder %s43, %s44
      %p56 = scmp.eq.s32.totalorder %s18, 7
      %p57 = por %p55, %p56
      %p59 = scmp.ne.s32.totalorder %s44, %s58
      %p60 = scmp.eq.s32.totalorder %s18, 0
      %p61 = por %p59, %p60
      %s62 = ssub.s32 %s12, %s19
      %p63 = scmp.eq.s32.totalorder %s62, 0
      %s65 = sadd.s32 %s64, 1
      %s66 = scalar_select %p63, %s64, %s65
      %p69 = pneg %p63
      %p70 = scmp.eq.s32.totalorder %s12, 7
      %p71 = por %p69, %p70
      %p72 = scmp.ne.s32.totalorder %s64, %s67
      %p73 = scmp.eq.s32.totalorder %s12, 0
      %p74 = por %p72, %p73
      %p75 = scmp.ne.s32.totalorder %s64, %s67
      %p76 = scmp.eq.s32.totalorder %s17, 7
      %p77 = por %p75, %p76
      %p78 = scmp.ne.s32.totalorder %s67, %s68
      %p79 = scmp.eq.s32.totalorder %s17, 0
      %p80 = por %p78, %p79
      %p81 = scmp.ne.s32.totalorder %s67, %s68
      %p82 = scmp.eq.s32.totalorder %s18, 7
      %p83 = por %p81, %p82
      %p85 = scmp.ne.s32.totalorder %s68, %s84
      %p86 = scmp.eq.s32.totalorder %s18, 0
      %p87 = por %p85, %p86
      %s88 = ssub.s32 %s12, %s19
      %p89 = scmp.eq.s32.totalorder %s88, 0
      %s91 = sadd.s32 %s90, 1
      %s92 = scalar_select %p89, %s90, %s91
      %p95 = pneg %p89
      %p96 = scmp.eq.s32.totalorder %s12, 7
      %p97 = por %p95, %p96
      %p98 = scmp.ne.s32.totalorder %s90, %s93
      %p99 = scmp.eq.s32.totalorder %s12, 0
      %p100 = por %p98, %p99
      %p101 = scmp.ne.s32.totalorder %s90, %s93
      %p102 = scmp.eq.s32.totalorder %s17, 7
      %p103 = por %p101, %p102
      %p104 = scmp.ne.s32.totalorder %s93, %s94
      %p105 = scmp.eq.s32.totalorder %s17, 0
      %p106 = por %p104, %p105
      %p107 = scmp.ne.s32.totalorder %s93, %s94
      %p108 = scmp.eq.s32.totalorder %s18, 7
      %p109 = por %p107, %p108
      %p111 = scmp.ne.s32.totalorder %s94, %s110
      %p112 = scmp.eq.s32.totalorder %s18, 0
      %p113 = por %p111, %p112
      %s114 = ssub.s32 %s12, %s19
      %p115 = scmp.eq.s32.totalorder %s114, 0
      %s117 = sadd.s32 %s116, 1
      %s118 = scalar_select %p115, %s116, %s117
      %p121 = pneg %p115
      %p122 = scmp.eq.s32.totalorder %s12, 7
      %p123 = por %p121, %p122
      %p124 = scmp.ne.s32.totalorder %s116, %s119
      %p125 = scmp.eq.s32.totalorder %s12, 0
      %p126 = por %p124, %p125
      %p127 = scmp.ne.s32.totalorder %s116, %s119
      %p128 = scmp.eq.s32.totalorder %s17, 7
      %p129 = por %p127, %p128
      %p130 = scmp.ne.s32.totalorder %s119, %s120
      %p131 = scmp.eq.s32.totalorder %s17, 0
      %p132 = por %p130, %p131
      %p133 = scmp.ne.s32.totalorder %s119, %s120
      %p134 = scmp.eq.s32.totalorder %s18, 7
      %p135 = por %p133, %p134
      %p137 = scmp.ne.s32.totalorder %s120, %s136
      %p138 = scmp.eq.s32.totalorder %s18, 0
      %p139 = por %p137, %p138
      %s140 = ssub.s32 %s12, %s19
      %p141 = scmp.eq.s32.totalorder %s140, 0
      %s143 = sadd.s32 %s142, 1
      %s144 = scalar_select %p141, %s142, %s143
      %p147 = pneg %p141
      %p148 = scmp.eq.s32.totalorder %s12, 7
      %p149 = por %p147, %p148
      %p150 = scmp.ne.s32.totalorder %s142, %s145
      %p151 = scmp.eq.s32.totalorder %s12, 0
      %p152 = por %p150, %p151
      %p153 = scmp.ne.s32.totalorder %s142, %s145
      %p154 = scmp.eq.s32.totalorder %s17, 7
      %p155 = por %p153, %p154
      %p156 = scmp.ne.s32.totalorder %s145, %s146
      %p157 = scmp.eq.s32.totalorder %s17, 0
      %p158 = por %p156, %p157
      %p159 = scmp.ne.s32.totalorder %s145, %s146
      %p160 = scmp.eq.s32.totalorder %s18, 7
      %p161 = por %p159, %p160
      %p163 = scmp.ne.s32.totalorder %s146, %s162
      %p164 = scmp.eq.s32.totalorder %s18, 0
      %p165 = por %p163, %p164
      %p166 = scmp.le.s32.totalorder 1, %s12
      %p167 = scmp.lt.s32.totalorder %s12, 9
      %p168 = pnand %p166, %p167
      %p169 = pneg %p168
      // Predicated region
      $region9: #{double_conv_forward.6} parent=5 // pred_check
        _
      $region10: #{double_conv_forward.6} parent=5 // pred_check_branch
        %171 = sbr.rel (%p168) target = $region12
      $region11: #{double_conv_forward.6} parent=5 // pred_region
        %s172 = ssub.s32 %s12, 1
        // Predicated region
        $region13: #{double_conv_forward.6} parent=11 // pred_check
          %p173 = pneg %p33
        $region14: #{double_conv_forward.6} parent=11 // pred_check_branch
          %175 = sbr.rel (%p173) target = $region16
        $region15: #{double_conv_forward.6} parent=11 // pred_region
          _
        $region16: #{double_conv_forward.6} parent=11 // pred_fallthru
          _
        // Predicated region
        $region17: #{double_conv_forward.6} parent=11 // pred_check
          %p176 = pneg %p54
        $region18: #{double_conv_forward.6} parent=11 // pred_check_branch
          %178 = sbr.rel (%p176) target = $region20
        $region19: #{double_conv_forward.6} parent=11 // pred_region
          _
        $region20: #{double_conv_forward.6} parent=11 // pred_fallthru
          _
      $region12: #{double_conv_forward.6} parent=5 // pred_fallthru
        _
      %p179 = scmp.lt.s32.totalorder %s12, 8
      // Predicated region
      $region21: #{double_conv_forward.6} parent=5 // pred_check
        %p180 = pneg %p179
      $region22: #{double_conv_forward.6} parent=5 // pred_check_branch
        %182 = sbr.rel (%p180) target = $region24
      $region23: #{double_conv_forward.6} parent=5 // pred_region
        // Predicated region
        $region25: #{double_conv_forward.6} parent=23 // pred_check
          %p183 = pneg %p74
        $region26: #{double_conv_forward.6} parent=23 // pred_check_branch
          %185 = sbr.rel (%p183) target = $region28
        $region27: #{double_conv_forward.6} parent=23 // pred_region
          %s186 = sand.u32 %s64, 1
          %s187 = sand.u32 %s64, 1
          %s188 = smul.addr %s187, 1024
          %s189 = scalar_lea.vmem [#allocation2], %s188
          %s190 = smul.u32 8, %s12
          %s191 = smul.addr %s190, 4
          %s192 = scalar_lea.vmem %s2, %s191
          // Predicated region
          $region29: #{double_conv_forward.6} parent=27 // pred_check
            _
          $region30: #{double_conv_forward.6} parent=27 // pred_check_branch
            %194 = sbr.rel (0) target = $region32
          $region31: #{double_conv_forward.6} parent=27 // pred_region
            // Predicated region
            $region33: #{double_conv_forward.6} parent=31 // pred_check
              _
            $region34: #{double_conv_forward.6} parent=31 // pred_check_branch
              %196 = sbr.rel (0) target = $region36
            $region35: #{double_conv_forward.6} parent=31 // pred_region
              loop: start=0, step=1, limit=1
              $region37: #{double_conv_forward.6} parent=35 // loop_pre_header
                _
              $region38: #{double_conv_forward.6} parent=35 // loop_header
                %s198 = sphi 0, %s202
                %p199 = scmp.ge.s32.totalorder %s198, 1
                %s203 = sphi %s192, %s192
                %s204 = sphi %s189, %s189
              $region39: #{double_conv_forward.6} parent=35 // loop_header_branch
                %201 = sbr.rel (%p199) target = $region43
              $region40: #{double_conv_forward.6} parent=35 // loop_body
                %v205 = vld [vmem:[%s203] sm:$0xff]
                %206 = vst [vmem:[%s204] sm:$0xff] %v205
                %v207 = vld [vmem:[%s203 + $0x8] sm:$0xff]
                %208 = vst [vmem:[%s204 + $0x8] sm:$0xff] %v207
                %v209 = vld [vmem:[%s203 + $0x10] sm:$0xff]
                %210 = vst [vmem:[%s204 + $0x10] sm:$0xff] %v209
                %v211 = vld [vmem:[%s203 + $0x18] sm:$0xff]
                %212 = vst [vmem:[%s204 + $0x18] sm:$0xff] %v211
                %v213 = vld [vmem:[%s203 + $0x100] sm:$0xff]
                %214 = vst [vmem:[%s204 + $0x20] sm:$0xff] %v213
                %v215 = vld [vmem:[%s203 + $0x108] sm:$0xff]
                %216 = vst [vmem:[%s204 + $0x28] sm:$0xff] %v215
                %v217 = vld [vmem:[%s203 + $0x110] sm:$0xff]
                %218 = vst [vmem:[%s204 + $0x30] sm:$0xff] %v217
                %v219 = vld [vmem:[%s203 + $0x118] sm:$0xff]
                %220 = vst [vmem:[%s204 + $0x38] sm:$0xff] %v219
                %v221 = vld [vmem:[%s203 + $0x200] sm:$0xff]
                %222 = vst [vmem:[%s204 + $0x40] sm:$0xff] %v221
                %v223 = vld [vmem:[%s203 + $0x208] sm:$0xff]
                %224 = vst [vmem:[%s204 + $0x48] sm:$0xff] %v223
                %v225 = vld [vmem:[%s203 + $0x210] sm:$0xff]
                %226 = vst [vmem:[%s204 + $0x50] sm:$0xff] %v225
                %v227 = vld [vmem:[%s203 + $0x218] sm:$0xff]
                %228 = vst [vmem:[%s204 + $0x58] sm:$0xff] %v227
                %v229 = vld [vmem:[%s203 + $0x300] sm:$0xff]
                %230 = vst [vmem:[%s204 + $0x60] sm:$0xff] %v229
                %v231 = vld [vmem:[%s203 + $0x308] sm:$0xff]
                %232 = vst [vmem:[%s204 + $0x68] sm:$0xff] %v231
                %v233 = vld [vmem:[%s203 + $0x310] sm:$0xff]
                %234 = vst [vmem:[%s204 + $0x70] sm:$0xff] %v233
                %v235 = vld [vmem:[%s203 + $0x318] sm:$0xff]
                %236 = vst [vmem:[%s204 + $0x78] sm:$0xff] %v235
                %v237 = vld [vmem:[%s203 + $0x400] sm:$0xff]
                %238 = vst [vmem:[%s204 + $0x80] sm:$0xff] %v237
                %v239 = vld [vmem:[%s203 + $0x408] sm:$0xff]
                %240 = vst [vmem:[%s204 + $0x88] sm:$0xff] %v239
                %v241 = vld [vmem:[%s203 + $0x410] sm:$0xff]
                %242 = vst [vmem:[%s204 + $0x90] sm:$0xff] %v241
                %v243 = vld [vmem:[%s203 + $0x418] sm:$0xff]
                %244 = vst [vmem:[%s204 + $0x98] sm:$0xff] %v243
                %v245 = vld [vmem:[%s203 + $0x500] sm:$0xff]
                %246 = vst [vmem:[%s204 + $0xa0] sm:$0xff] %v245
                %v247 = vld [vmem:[%s203 + $0x508] sm:$0xff]
                %248 = vst [vmem:[%s204 + $0xa8] sm:$0xff] %v247
                %v249 = vld [vmem:[%s203 + $0x510] sm:$0xff]
                %250 = vst [vmem:[%s204 + $0xb0] sm:$0xff] %v249
                %v251 = vld [vmem:[%s203 + $0x518] sm:$0xff]
                %252 = vst [vmem:[%s204 + $0xb8] sm:$0xff] %v251
                %v253 = vld [vmem:[%s203 + $0x600] sm:$0xff]
                %254 = vst [vmem:[%s204 + $0xc0] sm:$0xff] %v253
                %v255 = vld [vmem:[%s203 + $0x608] sm:$0xff]
                %256 = vst [vmem:[%s204 + $0xc8] sm:$0xff] %v255
                %v257 = vld [vmem:[%s203 + $0x610] sm:$0xff]
                %258 = vst [vmem:[%s204 + $0xd0] sm:$0xff] %v257
                %v259 = vld [vmem:[%s203 + $0x618] sm:$0xff]
                %260 = vst [vmem:[%s204 + $0xd8] sm:$0xff] %v259
                %v261 = vld [vmem:[%s203 + $0x700] sm:$0xff]
                %262 = vst [vmem:[%s204 + $0xe0] sm:$0xff] %v261
                %v263 = vld [vmem:[%s203 + $0x708] sm:$0xff]
                %264 = vst [vmem:[%s204 + $0xe8] sm:$0xff] %v263
                %v265 = vld [vmem:[%s203 + $0x710] sm:$0xff]
                %266 = vst [vmem:[%s204 + $0xf0] sm:$0xff] %v265
                %v267 = vld [vmem:[%s203 + $0x718] sm:$0xff]
                %268 = vst [vmem:[%s204 + $0xf8] sm:$0xff] %v267
                %v269 = vld [vmem:[%s203 + $0x800] sm:$0xff]
                %270 = vst [vmem:[%s204 + $0x100] sm:$0xff] %v269
                %v271 = vld [vmem:[%s203 + $0x808] sm:$0xff]
                %272 = vst [vmem:[%s204 + $0x108] sm:$0xff] %v271
                %v273 = vld [vmem:[%s203 + $0x810] sm:$0xff]
                %274 = vst [vmem:[%s204 + $0x110] sm:$0xff] %v273
                %v275 = vld [vmem:[%s203 + $0x818] sm:$0xff]
                %276 = vst [vmem:[%s204 + $0x118] sm:$0xff] %v275
                %v277 = vld [vmem:[%s203 + $0x900] sm:$0xff]
                %278 = vst [vmem:[%s204 + $0x120] sm:$0xff] %v277
                %v279 = vld [vmem:[%s203 + $0x908] sm:$0xff]
                %280 = vst [vmem:[%s204 + $0x128] sm:$0xff] %v279
                %v281 = vld [vmem:[%s203 + $0x910] sm:$0xff]
                %282 = vst [vmem:[%s204 + $0x130] sm:$0xff] %v281
                %v283 = vld [vmem:[%s203 + $0x918] sm:$0xff]
                %284 = vst [vmem:[%s204 + $0x138] sm:$0xff] %v283
                %v285 = vld [vmem:[%s203 + $0xa00] sm:$0xff]
                %286 = vst [vmem:[%s204 + $0x140] sm:$0xff] %v285
                %v287 = vld [vmem:[%s203 + $0xa08] sm:$0xff]
                %288 = vst [vmem:[%s204 + $0x148] sm:$0xff] %v287
                %v289 = vld [vmem:[%s203 + $0xa10] sm:$0xff]
                %290 = vst [vmem:[%s204 + $0x150] sm:$0xff] %v289
                %v291 = vld [vmem:[%s203 + $0xa18] sm:$0xff]
                %292 = vst [vmem:[%s204 + $0x158] sm:$0xff] %v291
                %v293 = vld [vmem:[%s203 + $0xb00] sm:$0xff]
                %294 = vst [vmem:[%s204 + $0x160] sm:$0xff] %v293
                %v295 = vld [vmem:[%s203 + $0xb08] sm:$0xff]
                %296 = vst [vmem:[%s204 + $0x168] sm:$0xff] %v295
                %v297 = vld [vmem:[%s203 + $0xb10] sm:$0xff]
                %298 = vst [vmem:[%s204 + $0x170] sm:$0xff] %v297
                %v299 = vld [vmem:[%s203 + $0xb18] sm:$0xff]
                %300 = vst [vmem:[%s204 + $0x178] sm:$0xff] %v299
                %v301 = vld [vmem:[%s203 + $0xc00] sm:$0xff]
                %302 = vst [vmem:[%s204 + $0x180] sm:$0xff] %v301
                %v303 = vld [vmem:[%s203 + $0xc08] sm:$0xff]
                %304 = vst [vmem:[%s204 + $0x188] sm:$0xff] %v303
                %v305 = vld [vmem:[%s203 + $0xc10] sm:$0xff]
                %306 = vst [vmem:[%s204 + $0x190] sm:$0xff] %v305
                %v307 = vld [vmem:[%s203 + $0xc18] sm:$0xff]
                %308 = vst [vmem:[%s204 + $0x198] sm:$0xff] %v307
                %v309 = vld [vmem:[%s203 + $0xd00] sm:$0xff]
                %310 = vst [vmem:[%s204 + $0x1a0] sm:$0xff] %v309
                %v311 = vld [vmem:[%s203 + $0xd08] sm:$0xff]
                %312 = vst [vmem:[%s204 + $0x1a8] sm:$0xff] %v311
                %v313 = vld [vmem:[%s203 + $0xd10] sm:$0xff]
                %314 = vst [vmem:[%s204 + $0x1b0] sm:$0xff] %v313
                %v315 = vld [vmem:[%s203 + $0xd18] sm:$0xff]
                %316 = vst [vmem:[%s204 + $0x1b8] sm:$0xff] %v315
                %v317 = vld [vmem:[%s203 + $0xe00] sm:$0xff]
                %318 = vst [vmem:[%s204 + $0x1c0] sm:$0xff] %v317
                %v319 = vld [vmem:[%s203 + $0xe08] sm:$0xff]
                %320 = vst [vmem:[%s204 + $0x1c8] sm:$0xff] %v319
                %v321 = vld [vmem:[%s203 + $0xe10] sm:$0xff]
                %322 = vst [vmem:[%s204 + $0x1d0] sm:$0xff] %v321
                %v323 = vld [vmem:[%s203 + $0xe18] sm:$0xff]
                %324 = vst [vmem:[%s204 + $0x1d8] sm:$0xff] %v323
                %v325 = vld [vmem:[%s203 + $0xf00] sm:$0xff]
                %326 = vst [vmem:[%s204 + $0x1e0] sm:$0xff] %v325
                %v327 = vld [vmem:[%s203 + $0xf08] sm:$0xff]
                %328 = vst [vmem:[%s204 + $0x1e8] sm:$0xff] %v327
                %v329 = vld [vmem:[%s203 + $0xf10] sm:$0xff]
                %330 = vst [vmem:[%s204 + $0x1f0] sm:$0xff] %v329
                %v331 = vld [vmem:[%s203 + $0xf18] sm:$0xff]
                %332 = vst [vmem:[%s204 + $0x1f8] sm:$0xff] %v331
                %v333 = vld [vmem:[%s203 + $0x1000] sm:$0xff]
                %334 = vst [vmem:[%s204 + $0x200] sm:$0xff] %v333
                %v335 = vld [vmem:[%s203 + $0x1008] sm:$0xff]
                %336 = vst [vmem:[%s204 + $0x208] sm:$0xff] %v335
                %v337 = vld [vmem:[%s203 + $0x1010] sm:$0xff]
                %338 = vst [vmem:[%s204 + $0x210] sm:$0xff] %v337
                %v339 = vld [vmem:[%s203 + $0x1018] sm:$0xff]
                %340 = vst [vmem:[%s204 + $0x218] sm:$0xff] %v339
                %v341 = vld [vmem:[%s203 + $0x1100] sm:$0xff]
                %342 = vst [vmem:[%s204 + $0x220] sm:$0xff] %v341
                %v343 = vld [vmem:[%s203 + $0x1108] sm:$0xff]
                %344 = vst [vmem:[%s204 + $0x228] sm:$0xff] %v343
                %v345 = vld [vmem:[%s203 + $0x1110] sm:$0xff]
                %346 = vst [vmem:[%s204 + $0x230] sm:$0xff] %v345
                %v347 = vld [vmem:[%s203 + $0x1118] sm:$0xff]
                %348 = vst [vmem:[%s204 + $0x238] sm:$0xff] %v347
                %v349 = vld [vmem:[%s203 + $0x1200] sm:$0xff]
                %350 = vst [vmem:[%s204 + $0x240] sm:$0xff] %v349
                %v351 = vld [vmem:[%s203 + $0x1208] sm:$0xff]
                %352 = vst [vmem:[%s204 + $0x248] sm:$0xff] %v351
                %v353 = vld [vmem:[%s203 + $0x1210] sm:$0xff]
                %354 = vst [vmem:[%s204 + $0x250] sm:$0xff] %v353
                %v355 = vld [vmem:[%s203 + $0x1218] sm:$0xff]
                %356 = vst [vmem:[%s204 + $0x258] sm:$0xff] %v355
                %v357 = vld [vmem:[%s203 + $0x1300] sm:$0xff]
                %358 = vst [vmem:[%s204 + $0x260] sm:$0xff] %v357
                %v359 = vld [vmem:[%s203 + $0x1308] sm:$0xff]
                %360 = vst [vmem:[%s204 + $0x268] sm:$0xff] %v359
                %v361 = vld [vmem:[%s203 + $0x1310] sm:$0xff]
                %362 = vst [vmem:[%s204 + $0x270] sm:$0xff] %v361
                %v363 = vld [vmem:[%s203 + $0x1318] sm:$0xff]
                %364 = vst [vmem:[%s204 + $0x278] sm:$0xff] %v363
                %v365 = vld [vmem:[%s203 + $0x1400] sm:$0xff]
                %366 = vst [vmem:[%s204 + $0x280] sm:$0xff] %v365
                %v367 = vld [vmem:[%s203 + $0x1408] sm:$0xff]
                %368 = vst [vmem:[%s204 + $0x288] sm:$0xff] %v367
                %v369 = vld [vmem:[%s203 + $0x1410] sm:$0xff]
                %370 = vst [vmem:[%s204 + $0x290] sm:$0xff] %v369
                %v371 = vld [vmem:[%s203 + $0x1418] sm:$0xff]
                %372 = vst [vmem:[%s204 + $0x298] sm:$0xff] %v371
                %v373 = vld [vmem:[%s203 + $0x1500] sm:$0xff]
                %374 = vst [vmem:[%s204 + $0x2a0] sm:$0xff] %v373
                %v375 = vld [vmem:[%s203 + $0x1508] sm:$0xff]
                %376 = vst [vmem:[%s204 + $0x2a8] sm:$0xff] %v375
                %v377 = vld [vmem:[%s203 + $0x1510] sm:$0xff]
                %378 = vst [vmem:[%s204 + $0x2b0] sm:$0xff] %v377
                %v379 = vld [vmem:[%s203 + $0x1518] sm:$0xff]
                %380 = vst [vmem:[%s204 + $0x2b8] sm:$0xff] %v379
                %v381 = vld [vmem:[%s203 + $0x1600] sm:$0xff]
                %382 = vst [vmem:[%s204 + $0x2c0] sm:$0xff] %v381
                %v383 = vld [vmem:[%s203 + $0x1608] sm:$0xff]
                %384 = vst [vmem:[%s204 + $0x2c8] sm:$0xff] %v383
                %v385 = vld [vmem:[%s203 + $0x1610] sm:$0xff]
                %386 = vst [vmem:[%s204 + $0x2d0] sm:$0xff] %v385
                %v387 = vld [vmem:[%s203 + $0x1618] sm:$0xff]
                %388 = vst [vmem:[%s204 + $0x2d8] sm:$0xff] %v387
                %v389 = vld [vmem:[%s203 + $0x1700] sm:$0xff]
                %390 = vst [vmem:[%s204 + $0x2e0] sm:$0xff] %v389
                %v391 = vld [vmem:[%s203 + $0x1708] sm:$0xff]
                %392 = vst [vmem:[%s204 + $0x2e8] sm:$0xff] %v391
                %v393 = vld [vmem:[%s203 + $0x1710] sm:$0xff]
                %394 = vst [vmem:[%s204 + $0x2f0] sm:$0xff] %v393
                %v395 = vld [vmem:[%s203 + $0x1718] sm:$0xff]
                %396 = vst [vmem:[%s204 + $0x2f8] sm:$0xff] %v395
                %v397 = vld [vmem:[%s203 + $0x1800] sm:$0xff]
                %398 = vst [vmem:[%s204 + $0x300] sm:$0xff] %v397
                %v399 = vld [vmem:[%s203 + $0x1808] sm:$0xff]
                %400 = vst [vmem:[%s204 + $0x308] sm:$0xff] %v399
                %v401 = vld [vmem:[%s203 + $0x1810] sm:$0xff]
                %402 = vst [vmem:[%s204 + $0x310] sm:$0xff] %v401
                %v403 = vld [vmem:[%s203 + $0x1818] sm:$0xff]
                %404 = vst [vmem:[%s204 + $0x318] sm:$0xff] %v403
                %v405 = vld [vmem:[%s203 + $0x1900] sm:$0xff]
                %406 = vst [vmem:[%s204 + $0x320] sm:$0xff] %v405
                %v407 = vld [vmem:[%s203 + $0x1908] sm:$0xff]
                %408 = vst [vmem:[%s204 + $0x328] sm:$0xff] %v407
                %v409 = vld [vmem:[%s203 + $0x1910] sm:$0xff]
                %410 = vst [vmem:[%s204 + $0x330] sm:$0xff] %v409
                %v411 = vld [vmem:[%s203 + $0x1918] sm:$0xff]
                %412 = vst [vmem:[%s204 + $0x338] sm:$0xff] %v411
                %v413 = vld [vmem:[%s203 + $0x1a00] sm:$0xff]
                %414 = vst [vmem:[%s204 + $0x340] sm:$0xff] %v413
                %v415 = vld [vmem:[%s203 + $0x1a08] sm:$0xff]
                %416 = vst [vmem:[%s204 + $0x348] sm:$0xff] %v415
                %v417 = vld [vmem:[%s203 + $0x1a10] sm:$0xff]
                %418 = vst [vmem:[%s204 + $0x350] sm:$0xff] %v417
                %v419 = vld [vmem:[%s203 + $0x1a18] sm:$0xff]
                %420 = vst [vmem:[%s204 + $0x358] sm:$0xff] %v419
                %v421 = vld [vmem:[%s203 + $0x1b00] sm:$0xff]
                %422 = vst [vmem:[%s204 + $0x360] sm:$0xff] %v421
                %v423 = vld [vmem:[%s203 + $0x1b08] sm:$0xff]
                %424 = vst [vmem:[%s204 + $0x368] sm:$0xff] %v423
                %v425 = vld [vmem:[%s203 + $0x1b10] sm:$0xff]
                %426 = vst [vmem:[%s204 + $0x370] sm:$0xff] %v425
                %v427 = vld [vmem:[%s203 + $0x1b18] sm:$0xff]
                %428 = vst [vmem:[%s204 + $0x378] sm:$0xff] %v427
                %v429 = vld [vmem:[%s203 + $0x1c00] sm:$0xff]
                %430 = vst [vmem:[%s204 + $0x380] sm:$0xff] %v429
                %v431 = vld [vmem:[%s203 + $0x1c08] sm:$0xff]
                %432 = vst [vmem:[%s204 + $0x388] sm:$0xff] %v431
                %v433 = vld [vmem:[%s203 + $0x1c10] sm:$0xff]
                %434 = vst [vmem:[%s204 + $0x390] sm:$0xff] %v433
                %v435 = vld [vmem:[%s203 + $0x1c18] sm:$0xff]
                %436 = vst [vmem:[%s204 + $0x398] sm:$0xff] %v435
                %v437 = vld [vmem:[%s203 + $0x1d00] sm:$0xff]
                %438 = vst [vmem:[%s204 + $0x3a0] sm:$0xff] %v437
                %v439 = vld [vmem:[%s203 + $0x1d08] sm:$0xff]
                %440 = vst [vmem:[%s204 + $0x3a8] sm:$0xff] %v439
                %v441 = vld [vmem:[%s203 + $0x1d10] sm:$0xff]
                %442 = vst [vmem:[%s204 + $0x3b0] sm:$0xff] %v441
                %v443 = vld [vmem:[%s203 + $0x1d18] sm:$0xff]
                %444 = vst [vmem:[%s204 + $0x3b8] sm:$0xff] %v443
                %v445 = vld [vmem:[%s203 + $0x1e00] sm:$0xff]
                %446 = vst [vmem:[%s204 + $0x3c0] sm:$0xff] %v445
                %v447 = vld [vmem:[%s203 + $0x1e08] sm:$0xff]
                %448 = vst [vmem:[%s204 + $0x3c8] sm:$0xff] %v447
                %v449 = vld [vmem:[%s203 + $0x1e10] sm:$0xff]
                %450 = vst [vmem:[%s204 + $0x3d0] sm:$0xff] %v449
                %v451 = vld [vmem:[%s203 + $0x1e18] sm:$0xff]
                %452 = vst [vmem:[%s204 + $0x3d8] sm:$0xff] %v451
                %v453 = vld [vmem:[%s203 + $0x1f00] sm:$0xff]
                %454 = vst [vmem:[%s204 + $0x3e0] sm:$0xff] %v453
                %v455 = vld [vmem:[%s203 + $0x1f08] sm:$0xff]
                %456 = vst [vmem:[%s204 + $0x3e8] sm:$0xff] %v455
                %v457 = vld [vmem:[%s203 + $0x1f10] sm:$0xff]
                %458 = vst [vmem:[%s204 + $0x3f0] sm:$0xff] %v457
                %v459 = vld [vmem:[%s203 + $0x1f18] sm:$0xff]
                %460 = vst [vmem:[%s204 + $0x3f8] sm:$0xff] %v459
              $region41: #{double_conv_forward.6} parent=35 // loop_footer
                %s202 = sadd.s32 1, %s198
              $region42: #{double_conv_forward.6} parent=35 // loop_footer_branch
                %197 = sbr.rel target = $region38
              $region43: #{double_conv_forward.6} parent=35 // loop_exit
                _
            $region36: #{double_conv_forward.6} parent=31 // pred_fallthru
              _
            // Predicated region
            $region44: #{double_conv_forward.6} parent=31 // pred_check
              _
            $region45: #{double_conv_forward.6} parent=31 // pred_check_branch
              %462 = sbr.rel target = $region47
            $region46: #{double_conv_forward.6} parent=31 // pred_region
              _
            $region47: #{double_conv_forward.6} parent=31 // pred_fallthru
              _
          $region32: #{double_conv_forward.6} parent=27 // pred_fallthru
            _
          %463 = vnop
        $region28: #{double_conv_forward.6} parent=23 // pred_fallthru
          _
      $region24: #{double_conv_forward.6} parent=5 // pred_fallthru
        _
      %p464 = scmp.le.s32.totalorder 1, %s12
      %p465 = scmp.lt.s32.totalorder %s12, 9
      %p466 = pnand %p464, %p465
      %p467 = pneg %p466
      // Predicated region
      $region48: #{double_conv_forward.6} parent=5 // pred_check
        _
      $region49: #{double_conv_forward.6} parent=5 // pred_check_branch
        %469 = sbr.rel (%p466) target = $region51
      $region50: #{double_conv_forward.6} parent=5 // pred_region
        %s470 = ssub.s32 %s12, 1
        %s471 = sand.u32 %s67, 1
        %s472 = sand.u32 %s67, 1
        %s473 = smul.addr %s472, 1024
        %s474 = scalar_lea.vmem [#allocation2], %s473
        // Predicated region
        $region52: #{double_conv_forward.6} parent=50 // pred_check
          %p475 = pneg %p80
        $region53: #{double_conv_forward.6} parent=50 // pred_check_branch
          %477 = sbr.rel (%p475) target = $region55
        $region54: #{double_conv_forward.6} parent=50 // pred_region
          _
        $region55: #{double_conv_forward.6} parent=50 // pred_fallthru
          _
        %p478 = pneg %p33
        %p479 = pneg %p30
        %p480 = pneg %p54
        %p481 = pneg %p51
        %s482 = sand.u32 %s67, 1
        %s483 = sand.u32 %s67, 1
        %s484 = smul.addr %s483, 1024
        %s485 = scalar_lea.vmem [#allocation2], %s484
        %p486 = pneg %p80
        %p487 = pneg %p77
        %p488 = pneg %p106
        %p489 = pneg %p103
        %s490 = smul.u32 8, %s17
        %p491 = scmp.lt.s32.totalorder %s490, 63
        %s492 = scalar_select %p491, %s490, 63
        %s493 = smul.addr %s492, 8
        %s494 = scalar_lea.vmem %s3, %s493
        %p495 = pneg %p132
        %p496 = pneg %p129
        %p497 = scmp.lt.s32.totalorder %s17, 7
        %s498 = scalar_select %p497, %s17, 7
        %s499 = smul.addr %s498, 8
        %s500 = scalar_lea.vmem %s4, %s499
        %p501 = pneg %p158
        %p502 = pneg %p155
        %p503 = scmp.lt.s32.totalorder %s17, 7
        %s504 = scalar_select %p503, %s17, 7
        %s505 = smul.addr %s504, 8
        %s506 = scalar_lea.vmem %s5, %s505
        %s507 = smul.u32 8, %s17
        %s508 = smul.u32 8, %s17
        %p509 = scmp.lt.s32.totalorder %s508, 63
        %s510 = scalar_select %p509, %s508, 63
        %s511 = smul.addr %s510, 8
        %s512 = scalar_lea.vmem %s3, %s511
        %s513 = smul.u32 8, %s17
        %p514 = scmp.lt.s32.totalorder %s17, 7
        %s515 = scalar_select %p514, %s17, 7
        %s516 = smul.addr %s515, 8
        %s517 = scalar_lea.vmem %s4, %s516
        %p518 = scmp.lt.s32.totalorder %s17, 7
        %s519 = scalar_select %p518, %s17, 7
        %s520 = smul.addr %s519, 8
        %s521 = scalar_lea.vmem %s5, %s520
        %v522 = vld [vmem:[%s0] sm:$0xff]
        %v523 = vld [vmem:[%s474] sm:$0xff]
        %v524 = vld [vmem:[%s474 + $0x8] sm:$0xff]
        %v525 = vld [vmem:[%s474 + $0x10] sm:$0xff]
        %v526 = vld [vmem:[%s474 + $0x18] sm:$0xff]
        %v527 = vld [vmem:[%s474 + $0x20] sm:$0xff]
        %v528 = vld [vmem:[%s474 + $0x28] sm:$0xff]
        %v529 = vld [vmem:[%s474 + $0x30] sm:$0xff]
        %v530 = vld [vmem:[%s474 + $0x38] sm:$0xff]
        %v531 = vld [vmem:[%s474 + $0x40] sm:$0xff]
        %v532 = vld [vmem:[%s474 + $0x48] sm:$0xff]
        %v533 = vld [vmem:[%s474 + $0x50] sm:$0xff]
        %v534 = vld [vmem:[%s474 + $0x58] sm:$0xff]
        %v535 = vld [vmem:[%s474 + $0x60] sm:$0xff]
        %v536 = vld [vmem:[%s474 + $0x68] sm:$0xff]
        %v537 = vld [vmem:[%s474 + $0x70] sm:$0xff]
        %v538 = vld [vmem:[%s474 + $0x78] sm:$0xff]
        %v539 = vld [vmem:[%s474 + $0x80] sm:$0xff]
        %v540 = vld [vmem:[%s474 + $0x88] sm:$0xff]
        %v541 = vld [vmem:[%s474 + $0x90] sm:$0xff]
        %v542 = vld [vmem:[%s474 + $0x98] sm:$0xff]
        %v543 = vld [vmem:[%s474 + $0xa0] sm:$0xff]
        %v544 = vld [vmem:[%s474 + $0xa8] sm:$0xff]
        %v545 = vld [vmem:[%s474 + $0xb0] sm:$0xff]
        %v546 = vld [vmem:[%s474 + $0xb8] sm:$0xff]
        %v547 = vld [vmem:[%s474 + $0xc0] sm:$0xff]
        %v548 = vld [vmem:[%s474 + $0xc8] sm:$0xff]
        %v549 = vld [vmem:[%s474 + $0xd0] sm:$0xff]
        %v550 = vld [vmem:[%s474 + $0xd8] sm:$0xff]
        %v551 = vld [vmem:[%s474 + $0xe0] sm:$0xff]
        %v552 = vld [vmem:[%s474 + $0xe8] sm:$0xff]
        %v553 = vld [vmem:[%s474 + $0xf0] sm:$0xff]
        %v554 = vld [vmem:[%s474 + $0xf8] sm:$0xff]
        %v555 = vld [vmem:[%s474 + $0x100] sm:$0xff]
        %v556 = vld [vmem:[%s474 + $0x108] sm:$0xff]
        %v557 = vld [vmem:[%s474 + $0x110] sm:$0xff]
        %v558 = vld [vmem:[%s474 + $0x118] sm:$0xff]
        %v559 = vld [vmem:[%s474 + $0x120] sm:$0xff]
        %v560 = vld [vmem:[%s474 + $0x128] sm:$0xff]
        %v561 = vld [vmem:[%s474 + $0x130] sm:$0xff]
        %v562 = vld [vmem:[%s474 + $0x138] sm:$0xff]
        %v563 = vld [vmem:[%s474 + $0x140] sm:$0xff]
        %v564 = vld [vmem:[%s474 + $0x148] sm:$0xff]
        %v565 = vld [vmem:[%s474 + $0x150] sm:$0xff]
        %v566 = vld [vmem:[%s474 + $0x158] sm:$0xff]
        %v567 = vld [vmem:[%s474 + $0x160] sm:$0xff]
        %v568 = vld [vmem:[%s474 + $0x168] sm:$0xff]
        %v569 = vld [vmem:[%s474 + $0x170] sm:$0xff]
        %v570 = vld [vmem:[%s474 + $0x178] sm:$0xff]
        %v571 = vld [vmem:[%s474 + $0x180] sm:$0xff]
        %v572 = vld [vmem:[%s474 + $0x188] sm:$0xff]
        %v573 = vld [vmem:[%s474 + $0x190] sm:$0xff]
        %v574 = vld [vmem:[%s474 + $0x198] sm:$0xff]
        %v575 = vld [vmem:[%s474 + $0x1a0] sm:$0xff]
        %v576 = vld [vmem:[%s474 + $0x1a8] sm:$0xff]
        %v577 = vld [vmem:[%s474 + $0x1b0] sm:$0xff]
        %v578 = vld [vmem:[%s474 + $0x1b8] sm:$0xff]
        %v579 = vld [vmem:[%s474 + $0x1c0] sm:$0xff]
        %v580 = vld [vmem:[%s474 + $0x1c8] sm:$0xff]
        %v581 = vld [vmem:[%s474 + $0x1d0] sm:$0xff]
        %v582 = vld [vmem:[%s474 + $0x1d8] sm:$0xff]
        %v583 = vld [vmem:[%s474 + $0x1e0] sm:$0xff]
        %v584 = vld [vmem:[%s474 + $0x1e8] sm:$0xff]
        %v585 = vld [vmem:[%s474 + $0x1f0] sm:$0xff]
        %v586 = vld [vmem:[%s474 + $0x1f8] sm:$0xff]
        %v587 = vld [vmem:[%s474 + $0x200] sm:$0xff]
        %v588 = vld [vmem:[%s474 + $0x208] sm:$0xff]
        %v589 = vld [vmem:[%s474 + $0x210] sm:$0xff]
        %v590 = vld [vmem:[%s474 + $0x218] sm:$0xff]
        %v591 = vld [vmem:[%s474 + $0x220] sm:$0xff]
        %v592 = vld [vmem:[%s474 + $0x228] sm:$0xff]
        %v593 = vld [vmem:[%s474 + $0x230] sm:$0xff]
        %v594 = vld [vmem:[%s474 + $0x238] sm:$0xff]
        %v595 = vld [vmem:[%s474 + $0x240] sm:$0xff]
        %v596 = vld [vmem:[%s474 + $0x248] sm:$0xff]
        %v597 = vld [vmem:[%s474 + $0x250] sm:$0xff]
        %v598 = vld [vmem:[%s474 + $0x258] sm:$0xff]
        %v599 = vld [vmem:[%s474 + $0x260] sm:$0xff]
        %v600 = vld [vmem:[%s474 + $0x268] sm:$0xff]
        %v601 = vld [vmem:[%s474 + $0x270] sm:$0xff]
        %v602 = vld [vmem:[%s474 + $0x278] sm:$0xff]
        %v603 = vld [vmem:[%s474 + $0x280] sm:$0xff]
        %v604 = vld [vmem:[%s474 + $0x288] sm:$0xff]
        %v605 = vld [vmem:[%s474 + $0x290] sm:$0xff]
        %v606 = vld [vmem:[%s474 + $0x298] sm:$0xff]
        %v607 = vld [vmem:[%s474 + $0x2a0] sm:$0xff]
        %v608 = vld [vmem:[%s474 + $0x2a8] sm:$0xff]
        %v609 = vld [vmem:[%s474 + $0x2b0] sm:$0xff]
        %v610 = vld [vmem:[%s474 + $0x2b8] sm:$0xff]
        %v611 = vld [vmem:[%s474 + $0x2c0] sm:$0xff]
        %v612 = vld [vmem:[%s474 + $0x2c8] sm:$0xff]
        %v613 = vld [vmem:[%s474 + $0x2d0] sm:$0xff]
        %v614 = vld [vmem:[%s474 + $0x2d8] sm:$0xff]
        %v615 = vld [vmem:[%s474 + $0x2e0] sm:$0xff]
        %v616 = vld [vmem:[%s474 + $0x2e8] sm:$0xff]
        %v617 = vld [vmem:[%s474 + $0x2f0] sm:$0xff]
        %v618 = vld [vmem:[%s474 + $0x2f8] sm:$0xff]
        %v619 = vld [vmem:[%s474 + $0x300] sm:$0xff]
        %v620 = vld [vmem:[%s474 + $0x308] sm:$0xff]
        %v621 = vld [vmem:[%s474 + $0x310] sm:$0xff]
        %v622 = vld [vmem:[%s474 + $0x318] sm:$0xff]
        %v623 = vld [vmem:[%s474 + $0x320] sm:$0xff]
        %v624 = vld [vmem:[%s474 + $0x328] sm:$0xff]
        %v625 = vld [vmem:[%s474 + $0x330] sm:$0xff]
        %v626 = vld [vmem:[%s474 + $0x338] sm:$0xff]
        %v627 = vld [vmem:[%s474 + $0x340] sm:$0xff]
        %v628 = vld [vmem:[%s474 + $0x348] sm:$0xff]
        %v629 = vld [vmem:[%s474 + $0x350] sm:$0xff]
        %v630 = vld [vmem:[%s474 + $0x358] sm:$0xff]
        %v631 = vld [vmem:[%s474 + $0x360] sm:$0xff]
        %v632 = vld [vmem:[%s474 + $0x368] sm:$0xff]
        %v633 = vld [vmem:[%s474 + $0x370] sm:$0xff]
        %v634 = vld [vmem:[%s474 + $0x378] sm:$0xff]
        %v635 = vld [vmem:[%s474 + $0x380] sm:$0xff]
        %v636 = vld [vmem:[%s474 + $0x388] sm:$0xff]
        %v637 = vld [vmem:[%s474 + $0x390] sm:$0xff]
        %v638 = vld [vmem:[%s474 + $0x398] sm:$0xff]
        %v639 = vld [vmem:[%s474 + $0x3a0] sm:$0xff]
        %v640 = vld [vmem:[%s474 + $0x3a8] sm:$0xff]
        %v641 = vld [vmem:[%s474 + $0x3b0] sm:$0xff]
        %v642 = vld [vmem:[%s474 + $0x3b8] sm:$0xff]
        %v643 = vld [vmem:[%s474 + $0x3c0] sm:$0xff]
        %v644 = vld [vmem:[%s474 + $0x3c8] sm:$0xff]
        %v645 = vld [vmem:[%s474 + $0x3d0] sm:$0xff]
        %v646 = vld [vmem:[%s474 + $0x3d8] sm:$0xff]
        %v647 = vld [vmem:[%s474 + $0x3e0] sm:$0xff]
        %v648 = vld [vmem:[%s474 + $0x3e8] sm:$0xff]
        %v649 = vld [vmem:[%s474 + $0x3f0] sm:$0xff]
        %v650 = vld [vmem:[%s474 + $0x3f8] sm:$0xff]
        %v651 = vld [vmem:[%s1] sm:$0xff]
        %653 = vset.pattern.permute.xlu0 0
        %654 = vperm.xlu0 %653, %v651
        %v655 = vpop.permute.xlu0 %654
        %v658 = vunpack.c.l.b16 %v522
        %v659 = vunpack.c.h.b16 %v522
        %v660 = vpack.c.b16 %v658, %v658
        %v661 = vpack.c.b16 %v659, %v659
        %v792 = vunpack.c.l.b16 %v523
        %v793 = vunpack.c.h.b16 %v523
        %v794 = vunpack.c.l.b16 %v524
        %v795 = vunpack.c.h.b16 %v524
        %v796 = vunpack.c.l.b16 %v525
        %v797 = vunpack.c.h.b16 %v525
        %v798 = vunpack.c.l.b16 %v526
        %v799 = vunpack.c.h.b16 %v526
        %v800 = vunpack.c.l.b16 %v527
        %v801 = vunpack.c.h.b16 %v527
        %v802 = vunpack.c.l.b16 %v528
        %v803 = vunpack.c.h.b16 %v528
        %v804 = vunpack.c.l.b16 %v529
        %v805 = vunpack.c.h.b16 %v529
        %v806 = vunpack.c.l.b16 %v530
        %v807 = vunpack.c.h.b16 %v530
        %v808 = vunpack.c.l.b16 %v531
        %v809 = vunpack.c.h.b16 %v531
        %v810 = vunpack.c.l.b16 %v532
        %v811 = vunpack.c.h.b16 %v532
        %v812 = vunpack.c.l.b16 %v533
        %v813 = vunpack.c.h.b16 %v533
        %v814 = vunpack.c.l.b16 %v534
        %v815 = vunpack.c.h.b16 %v534
        %v816 = vunpack.c.l.b16 %v535
        %v817 = vunpack.c.h.b16 %v535
        %v818 = vunpack.c.l.b16 %v536
        %v819 = vunpack.c.h.b16 %v536
        %v820 = vunpack.c.l.b16 %v537
        %v821 = vunpack.c.h.b16 %v537
        %v822 = vunpack.c.l.b16 %v538
        %v823 = vunpack.c.h.b16 %v538
        %v824 = vunpack.c.l.b16 %v539
        %v825 = vunpack.c.h.b16 %v539
        %v826 = vunpack.c.l.b16 %v540
        %v827 = vunpack.c.h.b16 %v540
        %v828 = vunpack.c.l.b16 %v541
        %v829 = vunpack.c.h.b16 %v541
        %v830 = vunpack.c.l.b16 %v542
        %v831 = vunpack.c.h.b16 %v542
        %v832 = vunpack.c.l.b16 %v543
        %v833 = vunpack.c.h.b16 %v543
        %v834 = vunpack.c.l.b16 %v544
        %v835 = vunpack.c.h.b16 %v544
        %v836 = vunpack.c.l.b16 %v545
        %v837 = vunpack.c.h.b16 %v545
        %v838 = vunpack.c.l.b16 %v546
        %v839 = vunpack.c.h.b16 %v546
        %v840 = vunpack.c.l.b16 %v547
        %v841 = vunpack.c.h.b16 %v547
        %v842 = vunpack.c.l.b16 %v548
        %v843 = vunpack.c.h.b16 %v548
        %v844 = vunpack.c.l.b16 %v549
        %v845 = vunpack.c.h.b16 %v549
        %v846 = vunpack.c.l.b16 %v550
        %v847 = vunpack.c.h.b16 %v550
        %v848 = vunpack.c.l.b16 %v551
        %v849 = vunpack.c.h.b16 %v551
        %v850 = vunpack.c.l.b16 %v552
        %v851 = vunpack.c.h.b16 %v552
        %v852 = vunpack.c.l.b16 %v553
        %v853 = vunpack.c.h.b16 %v553
        %v854 = vunpack.c.l.b16 %v554
        %v855 = vunpack.c.h.b16 %v554
        %v856 = vunpack.c.l.b16 %v555
        %v857 = vunpack.c.h.b16 %v555
        %v858 = vunpack.c.l.b16 %v556
        %v859 = vunpack.c.h.b16 %v556
        %v860 = vunpack.c.l.b16 %v557
        %v861 = vunpack.c.h.b16 %v557
        %v862 = vunpack.c.l.b16 %v558
        %v863 = vunpack.c.h.b16 %v558
        %v864 = vunpack.c.l.b16 %v559
        %v865 = vunpack.c.h.b16 %v559
        %v866 = vunpack.c.l.b16 %v560
        %v867 = vunpack.c.h.b16 %v560
        %v868 = vunpack.c.l.b16 %v561
        %v869 = vunpack.c.h.b16 %v561
        %v870 = vunpack.c.l.b16 %v562
        %v871 = vunpack.c.h.b16 %v562
        %v872 = vunpack.c.l.b16 %v563
        %v873 = vunpack.c.h.b16 %v563
        %v874 = vunpack.c.l.b16 %v564
        %v875 = vunpack.c.h.b16 %v564
        %v876 = vunpack.c.l.b16 %v565
        %v877 = vunpack.c.h.b16 %v565
        %v878 = vunpack.c.l.b16 %v566
        %v879 = vunpack.c.h.b16 %v566
        %v880 = vunpack.c.l.b16 %v567
        %v881 = vunpack.c.h.b16 %v567
        %v882 = vunpack.c.l.b16 %v568
        %v883 = vunpack.c.h.b16 %v568
        %v884 = vunpack.c.l.b16 %v569
        %v885 = vunpack.c.h.b16 %v569
        %v886 = vunpack.c.l.b16 %v570
        %v887 = vunpack.c.h.b16 %v570
        %v888 = vunpack.c.l.b16 %v571
        %v889 = vunpack.c.h.b16 %v571
        %v890 = vunpack.c.l.b16 %v572
        %v891 = vunpack.c.h.b16 %v572
        %v892 = vunpack.c.l.b16 %v573
        %v893 = vunpack.c.h.b16 %v573
        %v894 = vunpack.c.l.b16 %v574
        %v895 = vunpack.c.h.b16 %v574
        %v896 = vunpack.c.l.b16 %v575
        %v897 = vunpack.c.h.b16 %v575
        %v898 = vunpack.c.l.b16 %v576
        %v899 = vunpack.c.h.b16 %v576
        %v900 = vunpack.c.l.b16 %v577
        %v901 = vunpack.c.h.b16 %v577
        %v902 = vunpack.c.l.b16 %v578
        %v903 = vunpack.c.h.b16 %v578
        %v904 = vunpack.c.l.b16 %v579
        %v905 = vunpack.c.h.b16 %v579
        %v906 = vunpack.c.l.b16 %v580
        %v907 = vunpack.c.h.b16 %v580
        %v908 = vunpack.c.l.b16 %v581
        %v909 = vunpack.c.h.b16 %v581
        %v910 = vunpack.c.l.b16 %v582
        %v911 = vunpack.c.h.b16 %v582
        %v912 = vunpack.c.l.b16 %v583
        %v913 = vunpack.c.h.b16 %v583
        %v914 = vunpack.c.l.b16 %v584
        %v915 = vunpack.c.h.b16 %v584
        %v916 = vunpack.c.l.b16 %v585
        %v917 = vunpack.c.h.b16 %v585
        %v918 = vunpack.c.l.b16 %v586
        %v919 = vunpack.c.h.b16 %v586
        %v920 = vunpack.c.l.b16 %v587
        %v921 = vunpack.c.h.b16 %v587
        %v922 = vunpack.c.l.b16 %v588
        %v923 = vunpack.c.h.b16 %v588
        %v924 = vunpack.c.l.b16 %v589
        %v925 = vunpack.c.h.b16 %v589
        %v926 = vunpack.c.l.b16 %v590
        %v927 = vunpack.c.h.b16 %v590
        %v928 = vunpack.c.l.b16 %v591
        %v929 = vunpack.c.h.b16 %v591
        %v930 = vunpack.c.l.b16 %v592
        %v931 = vunpack.c.h.b16 %v592
        %v932 = vunpack.c.l.b16 %v593
        %v933 = vunpack.c.h.b16 %v593
        %v934 = vunpack.c.l.b16 %v594
        %v935 = vunpack.c.h.b16 %v594
        %v936 = vunpack.c.l.b16 %v595
        %v937 = vunpack.c.h.b16 %v595
        %v938 = vunpack.c.l.b16 %v596
        %v939 = vunpack.c.h.b16 %v596
        %v940 = vunpack.c.l.b16 %v597
        %v941 = vunpack.c.h.b16 %v597
        %v942 = vunpack.c.l.b16 %v598
        %v943 = vunpack.c.h.b16 %v598
        %v944 = vunpack.c.l.b16 %v599
        %v945 = vunpack.c.h.b16 %v599
        %v946 = vunpack.c.l.b16 %v600
        %v947 = vunpack.c.h.b16 %v600
        %v948 = vunpack.c.l.b16 %v601
        %v949 = vunpack.c.h.b16 %v601
        %v950 = vunpack.c.l.b16 %v602
        %v951 = vunpack.c.h.b16 %v602
        %v952 = vunpack.c.l.b16 %v603
        %v953 = vunpack.c.h.b16 %v603
        %v954 = vunpack.c.l.b16 %v604
        %v955 = vunpack.c.h.b16 %v604
        %v956 = vunpack.c.l.b16 %v605
        %v957 = vunpack.c.h.b16 %v605
        %v958 = vunpack.c.l.b16 %v606
        %v959 = vunpack.c.h.b16 %v606
        %v960 = vunpack.c.l.b16 %v607
        %v961 = vunpack.c.h.b16 %v607
        %v962 = vunpack.c.l.b16 %v608
        %v963 = vunpack.c.h.b16 %v608
        %v964 = vunpack.c.l.b16 %v609
        %v965 = vunpack.c.h.b16 %v609
        %v966 = vunpack.c.l.b16 %v610
        %v967 = vunpack.c.h.b16 %v610
        %v968 = vunpack.c.l.b16 %v611
        %v969 = vunpack.c.h.b16 %v611
        %v970 = vunpack.c.l.b16 %v612
        %v971 = vunpack.c.h.b16 %v612
        %v972 = vunpack.c.l.b16 %v613
        %v973 = vunpack.c.h.b16 %v613
        %v974 = vunpack.c.l.b16 %v614
        %v975 = vunpack.c.h.b16 %v614
        %v976 = vunpack.c.l.b16 %v615
        %v977 = vunpack.c.h.b16 %v615
        %v978 = vunpack.c.l.b16 %v616
        %v979 = vunpack.c.h.b16 %v616
        %v980 = vunpack.c.l.b16 %v617
        %v981 = vunpack.c.h.b16 %v617
        %v982 = vunpack.c.l.b16 %v618
        %v983 = vunpack.c.h.b16 %v618
        %v984 = vunpack.c.l.b16 %v619
        %v985 = vunpack.c.h.b16 %v619
        %v986 = vunpack.c.l.b16 %v620
        %v987 = vunpack.c.h.b16 %v620
        %v988 = vunpack.c.l.b16 %v621
        %v989 = vunpack.c.h.b16 %v621
        %v990 = vunpack.c.l.b16 %v622
        %v991 = vunpack.c.h.b16 %v622
        %v992 = vunpack.c.l.b16 %v623
        %v993 = vunpack.c.h.b16 %v623
        %v994 = vunpack.c.l.b16 %v624
        %v995 = vunpack.c.h.b16 %v624
        %v996 = vunpack.c.l.b16 %v625
        %v997 = vunpack.c.h.b16 %v625
        %v998 = vunpack.c.l.b16 %v626
        %v999 = vunpack.c.h.b16 %v626
        %v1000 = vunpack.c.l.b16 %v627
        %v1001 = vunpack.c.h.b16 %v627
        %v1002 = vunpack.c.l.b16 %v628
        %v1003 = vunpack.c.h.b16 %v628
        %v1004 = vunpack.c.l.b16 %v629
        %v1005 = vunpack.c.h.b16 %v629
        %v1006 = vunpack.c.l.b16 %v630
        %v1007 = vunpack.c.h.b16 %v630
        %v1008 = vunpack.c.l.b16 %v631
        %v1009 = vunpack.c.h.b16 %v631
        %v1010 = vunpack.c.l.b16 %v632
        %v1011 = vunpack.c.h.b16 %v632
        %v1012 = vunpack.c.l.b16 %v633
        %v1013 = vunpack.c.h.b16 %v633
        %v1014 = vunpack.c.l.b16 %v634
        %v1015 = vunpack.c.h.b16 %v634
        %v1016 = vunpack.c.l.b16 %v635
        %v1017 = vunpack.c.h.b16 %v635
        %v1018 = vunpack.c.l.b16 %v636
        %v1019 = vunpack.c.h.b16 %v636
        %v1020 = vunpack.c.l.b16 %v637
        %v1021 = vunpack.c.h.b16 %v637
        %v1022 = vunpack.c.l.b16 %v638
        %v1023 = vunpack.c.h.b16 %v638
        %v1024 = vunpack.c.l.b16 %v639
        %v1025 = vunpack.c.h.b16 %v639
        %v1026 = vunpack.c.l.b16 %v640
        %v1027 = vunpack.c.h.b16 %v640
        %v1028 = vunpack.c.l.b16 %v641
        %v1029 = vunpack.c.h.b16 %v641
        %v1030 = vunpack.c.l.b16 %v642
        %v1031 = vunpack.c.h.b16 %v642
        %v1032 = vunpack.c.l.b16 %v643
        %v1033 = vunpack.c.h.b16 %v643
        %v1034 = vunpack.c.l.b16 %v644
        %v1035 = vunpack.c.h.b16 %v644
        %v1036 = vunpack.c.l.b16 %v645
        %v1037 = vunpack.c.h.b16 %v645
        %v1038 = vunpack.c.l.b16 %v646
        %v1039 = vunpack.c.h.b16 %v646
        %v1040 = vunpack.c.l.b16 %v647
        %v1041 = vunpack.c.h.b16 %v647
        %v1042 = vunpack.c.l.b16 %v648
        %v1043 = vunpack.c.h.b16 %v648
        %v1044 = vunpack.c.l.b16 %v649
        %v1045 = vunpack.c.h.b16 %v649
        %v1046 = vunpack.c.l.b16 %v650
        %v1047 = vunpack.c.h.b16 %v650
        %v1048 = vpack.c.b16 %v800, %v792
        %v1049 = vpack.c.b16 %v801, %v793
        %v1050 = vpack.c.b16 %v802, %v794
        %v1051 = vpack.c.b16 %v803, %v795
        %v1052 = vpack.c.b16 %v804, %v796
        %v1053 = vpack.c.b16 %v805, %v797
        %v1054 = vpack.c.b16 %v806, %v798
        %v1055 = vpack.c.b16 %v807, %v799
        %v1056 = vpack.c.b16 %v816, %v808
        %v1057 = vpack.c.b16 %v817, %v809
        %v1058 = vpack.c.b16 %v818, %v810
        %v1059 = vpack.c.b16 %v819, %v811
        %v1060 = vpack.c.b16 %v820, %v812
        %v1061 = vpack.c.b16 %v821, %v813
        %v1062 = vpack.c.b16 %v822, %v814
        %v1063 = vpack.c.b16 %v823, %v815
        %v1064 = vpack.c.b16 %v832, %v824
        %v1065 = vpack.c.b16 %v833, %v825
        %v1066 = vpack.c.b16 %v834, %v826
        %v1067 = vpack.c.b16 %v835, %v827
        %v1068 = vpack.c.b16 %v836, %v828
        %v1069 = vpack.c.b16 %v837, %v829
        %v1070 = vpack.c.b16 %v838, %v830
        %v1071 = vpack.c.b16 %v839, %v831
        %v1072 = vpack.c.b16 %v848, %v840
        %v1073 = vpack.c.b16 %v849, %v841
        %v1074 = vpack.c.b16 %v850, %v842
        %v1075 = vpack.c.b16 %v851, %v843
        %v1076 = vpack.c.b16 %v852, %v844
        %v1077 = vpack.c.b16 %v853, %v845
        %v1078 = vpack.c.b16 %v854, %v846
        %v1079 = vpack.c.b16 %v855, %v847
        %v1080 = vpack.c.b16 %v864, %v856
        %v1081 = vpack.c.b16 %v865, %v857
        %v1082 = vpack.c.b16 %v866, %v858
        %v1083 = vpack.c.b16 %v867, %v859
        %v1084 = vpack.c.b16 %v868, %v860
        %v1085 = vpack.c.b16 %v869, %v861
        %v1086 = vpack.c.b16 %v870, %v862
        %v1087 = vpack.c.b16 %v871, %v863
        %v1088 = vpack.c.b16 %v880, %v872
        %v1089 = vpack.c.b16 %v881, %v873
        %v1090 = vpack.c.b16 %v882, %v874
        %v1091 = vpack.c.b16 %v883, %v875
        %v1092 = vpack.c.b16 %v884, %v876
        %v1093 = vpack.c.b16 %v885, %v877
        %v1094 = vpack.c.b16 %v886, %v878
        %v1095 = vpack.c.b16 %v887, %v879
        %v1096 = vpack.c.b16 %v896, %v888
        %v1097 = vpack.c.b16 %v897, %v889
        %v1098 = vpack.c.b16 %v898, %v890
        %v1099 = vpack.c.b16 %v899, %v891
        %v1100 = vpack.c.b16 %v900, %v892
        %v1101 = vpack.c.b16 %v901, %v893
        %v1102 = vpack.c.b16 %v902, %v894
        %v1103 = vpack.c.b16 %v903, %v895
        %v1104 = vpack.c.b16 %v912, %v904
        %v1105 = vpack.c.b16 %v913, %v905
        %v1106 = vpack.c.b16 %v914, %v906
        %v1107 = vpack.c.b16 %v915, %v907
        %v1108 = vpack.c.b16 %v916, %v908
        %v1109 = vpack.c.b16 %v917, %v909
        %v1110 = vpack.c.b16 %v918, %v910
        %v1111 = vpack.c.b16 %v919, %v911
        %v1112 = vpack.c.b16 %v928, %v920
        %v1113 = vpack.c.b16 %v929, %v921
        %v1114 = vpack.c.b16 %v930, %v922
        %v1115 = vpack.c.b16 %v931, %v923
        %v1116 = vpack.c.b16 %v932, %v924
        %v1117 = vpack.c.b16 %v933, %v925
        %v1118 = vpack.c.b16 %v934, %v926
        %v1119 = vpack.c.b16 %v935, %v927
        %v1120 = vpack.c.b16 %v944, %v936
        %v1121 = vpack.c.b16 %v945, %v937
        %v1122 = vpack.c.b16 %v946, %v938
        %v1123 = vpack.c.b16 %v947, %v939
        %v1124 = vpack.c.b16 %v948, %v940
        %v1125 = vpack.c.b16 %v949, %v941
        %v1126 = vpack.c.b16 %v950, %v942
        %v1127 = vpack.c.b16 %v951, %v943
        %v1128 = vpack.c.b16 %v960, %v952
        %v1129 = vpack.c.b16 %v961, %v953
        %v1130 = vpack.c.b16 %v962, %v954
        %v1131 = vpack.c.b16 %v963, %v955
        %v1132 = vpack.c.b16 %v964, %v956
        %v1133 = vpack.c.b16 %v965, %v957
        %v1134 = vpack.c.b16 %v966, %v958
        %v1135 = vpack.c.b16 %v967, %v959
        %v1136 = vpack.c.b16 %v976, %v968
        %v1137 = vpack.c.b16 %v977, %v969
        %v1138 = vpack.c.b16 %v978, %v970
        %v1139 = vpack.c.b16 %v979, %v971
        %v1140 = vpack.c.b16 %v980, %v972
        %v1141 = vpack.c.b16 %v981, %v973
        %v1142 = vpack.c.b16 %v982, %v974
        %v1143 = vpack.c.b16 %v983, %v975
        %v1144 = vpack.c.b16 %v992, %v984
        %v1145 = vpack.c.b16 %v993, %v985
        %v1146 = vpack.c.b16 %v994, %v986
        %v1147 = vpack.c.b16 %v995, %v987
        %v1148 = vpack.c.b16 %v996, %v988
        %v1149 = vpack.c.b16 %v997, %v989
        %v1150 = vpack.c.b16 %v998, %v990
        %v1151 = vpack.c.b16 %v999, %v991
        %v1152 = vpack.c.b16 %v1008, %v1000
        %v1153 = vpack.c.b16 %v1009, %v1001
        %v1154 = vpack.c.b16 %v1010, %v1002
        %v1155 = vpack.c.b16 %v1011, %v1003
        %v1156 = vpack.c.b16 %v1012, %v1004
        %v1157 = vpack.c.b16 %v1013, %v1005
        %v1158 = vpack.c.b16 %v1014, %v1006
        %v1159 = vpack.c.b16 %v1015, %v1007
        %v1160 = vpack.c.b16 %v1024, %v1016
        %v1161 = vpack.c.b16 %v1025, %v1017
        %v1162 = vpack.c.b16 %v1026, %v1018
        %v1163 = vpack.c.b16 %v1027, %v1019
        %v1164 = vpack.c.b16 %v1028, %v1020
        %v1165 = vpack.c.b16 %v1029, %v1021
        %v1166 = vpack.c.b16 %v1030, %v1022
        %v1167 = vpack.c.b16 %v1031, %v1023
        %v1168 = vpack.c.b16 %v1040, %v1032
        %v1169 = vpack.c.b16 %v1041, %v1033
        %v1170 = vpack.c.b16 %v1042, %v1034
        %v1171 = vpack.c.b16 %v1043, %v1035
        %v1172 = vpack.c.b16 %v1044, %v1036
        %v1173 = vpack.c.b16 %v1045, %v1037
        %v1174 = vpack.c.b16 %v1046, %v1038
        %v1175 = vpack.c.b16 %v1047, %v1039
        %1304 = vmatprep.subr.bf16.mxu0 %v1049
        %1305 = vmatpush1.bf16.msra.mxu0 %v1048
        %1306 = vmatprep.subr.bf16.mxu0 %v1057
        %1307 = vmatpush1.bf16.msra.mxu0 %v1056
        %1308 = vmatprep.subr.bf16.mxu0 %v1065
        %1309 = vmatpush1.bf16.msra.mxu0 %v1064
        %1310 = vmatprep.subr.bf16.mxu0 %v1073
        %1311 = vmatpush1.bf16.msra.mxu0 %v1072
        %1312 = vmatprep.subr.bf16.mxu0 %v1081
        %1313 = vmatpush1.bf16.msra.mxu0 %v1080
        %1314 = vmatprep.subr.bf16.mxu0 %v1089
        %1315 = vmatpush1.bf16.msra.mxu0 %v1088
        %1316 = vmatprep.subr.bf16.mxu0 %v1097
        %1317 = vmatpush1.bf16.msra.mxu0 %v1096
        %1318 = vmatprep.subr.bf16.mxu0 %v1105
        %1319 = vmatpush1.bf16.msra.mxu0 %v1104
        %1320 = vmatprep.subr.bf16.mxu0 %v1113
        %1321 = vmatpush1.bf16.msra.mxu0 %v1112
        %1322 = vmatprep.subr.bf16.mxu0 %v1121
        %1323 = vmatpush1.bf16.msra.mxu0 %v1120
        %1324 = vmatprep.subr.bf16.mxu0 %v1129
        %1325 = vmatpush1.bf16.msra.mxu0 %v1128
        %1326 = vmatprep.subr.bf16.mxu0 %v1137
        %1327 = vmatpush1.bf16.msra.mxu0 %v1136
        %1328 = vmatprep.subr.bf16.mxu0 %v1145
        %1329 = vmatpush1.bf16.msra.mxu0 %v1144
        %1330 = vmatprep.subr.bf16.mxu0 %v1153
        %1331 = vmatpush1.bf16.msra.mxu0 %v1152
        %1332 = vmatprep.subr.bf16.mxu0 %v1161
        %1333 = vmatpush1.bf16.msra.mxu0 %v1160
        %1334 = vmatprep.subr.bf16.mxu0 %v1169
        %1335 = vmatpush1.bf16.msra.mxu0 %v1168
        %1336 = vmatprep.mubr.bf16.mxu0 %v661
        %1337 = vmatmul.mubr.bf16.gmra.mrb[0].mxu0 %v660
        %v1338 = vpop.f32.mrb[0].mxu0
        %v1339 = vadd.f32 %v655, %v1338
        %v1340 = vpop.f32.mrb[0].mxu0
        %v1341 = vadd.f32 %v655, %v1340
        %v1342 = vpop.f32.mrb[0].mxu0
        %v1343 = vpop.f32.mrb[0].mxu0
        %1344 = vdwg.mxu0
        %1345 = vmatprep.subr.bf16.mxu0 %v1051
        %1346 = vmatpush1.bf16.msra.mxu0 %v1050
        %1347 = vmatprep.subr.bf16.mxu0 %v1059
        %1348 = vmatpush1.bf16.msra.mxu0 %v1058
        %1349 = vmatprep.subr.bf16.mxu0 %v1067
        %1350 = vmatpush1.bf16.msra.mxu0 %v1066
        %1351 = vmatprep.subr.bf16.mxu0 %v1075
        %1352 = vmatpush1.bf16.msra.mxu0 %v1074
        %1353 = vmatprep.subr.bf16.mxu0 %v1083
        %1354 = vmatpush1.bf16.msra.mxu0 %v1082
        %1355 = vmatprep.subr.bf16.mxu0 %v1091
        %1356 = vmatpush1.bf16.msra.mxu0 %v1090
        %1357 = vmatprep.subr.bf16.mxu0 %v1099
        %1358 = vmatpush1.bf16.msra.mxu0 %v1098
        %1359 = vmatprep.subr.bf16.mxu0 %v1107
        %1360 = vmatpush1.bf16.msra.mxu0 %v1106
        %1361 = vmatprep.subr.bf16.mxu0 %v1115
        %1362 = vmatpush1.bf16.msra.mxu0 %v1114
        %1363 = vmatprep.subr.bf16.mxu0 %v1123
        %1364 = vmatpush1.bf16.msra.mxu0 %v1122
        %1365 = vmatprep.subr.bf16.mxu0 %v1131
        %1366 = vmatpush1.bf16.msra.mxu0 %v1130
        %1367 = vmatprep.subr.bf16.mxu0 %v1139
        %1368 = vmatpush1.bf16.msra.mxu0 %v1138
        %1369 = vmatprep.subr.bf16.mxu0 %v1147
        %1370 = vmatpush1.bf16.msra.mxu0 %v1146
        %1371 = vmatprep.subr.bf16.mxu0 %v1155
        %1372 = vmatpush1.bf16.msra.mxu0 %v1154
        %1373 = vmatprep.subr.bf16.mxu0 %v1163
        %1374 = vmatpush1.bf16.msra.mxu0 %v1162
        %1375 = vmatprep.subr.bf16.mxu0 %v1171
        %1376 = vmatpush1.bf16.msra.mxu0 %v1170
        %1377 = vmatprep.mubr.bf16.mxu0 %v661
        %1378 = vmatmul.mubr.bf16.gmra.mrb[0].mxu0 %v660
        %v1379 = vpop.f32.mrb[0].mxu0
        %v1380 = vadd.f32 %v655, %v1379
        %v1381 = vpop.f32.mrb[0].mxu0
        %v1382 = vadd.f32 %v655, %v1381
        %v1383 = vpop.f32.mrb[0].mxu0
        %v1384 = vpop.f32.mrb[0].mxu0
        %1385 = vdwg.mxu0
        %1386 = vmatprep.subr.bf16.mxu0 %v1053
        %1387 = vmatpush1.bf16.msra.mxu0 %v1052
        %1388 = vmatprep.subr.bf16.mxu0 %v1061
        %1389 = vmatpush1.bf16.msra.mxu0 %v1060
        %1390 = vmatprep.subr.bf16.mxu0 %v1069
        %1391 = vmatpush1.bf16.msra.mxu0 %v1068
        %1392 = vmatprep.subr.bf16.mxu0 %v1077
        %1393 = vmatpush1.bf16.msra.mxu0 %v1076
        %1394 = vmatprep.subr.bf16.mxu0 %v1085
        %1395 = vmatpush1.bf16.msra.mxu0 %v1084
        %1396 = vmatprep.subr.bf16.mxu0 %v1093
        %1397 = vmatpush1.bf16.msra.mxu0 %v1092
        %1398 = vmatprep.subr.bf16.mxu0 %v1101
        %1399 = vmatpush1.bf16.msra.mxu0 %v1100
        %1400 = vmatprep.subr.bf16.mxu0 %v1109
        %1401 = vmatpush1.bf16.msra.mxu0 %v1108
        %1402 = vmatprep.subr.bf16.mxu0 %v1117
        %1403 = vmatpush1.bf16.msra.mxu0 %v1116
        %1404 = vmatprep.subr.bf16.mxu0 %v1125
        %1405 = vmatpush1.bf16.msra.mxu0 %v1124
        %1406 = vmatprep.subr.bf16.mxu0 %v1133
        %1407 = vmatpush1.bf16.msra.mxu0 %v1132
        %1408 = vmatprep.subr.bf16.mxu0 %v1141
        %1409 = vmatpush1.bf16.msra.mxu0 %v1140
        %1410 = vmatprep.subr.bf16.mxu0 %v1149
        %1411 = vmatpush1.bf16.msra.mxu0 %v1148
        %1412 = vmatprep.subr.bf16.mxu0 %v1157
        %1413 = vmatpush1.bf16.msra.mxu0 %v1156
        %1414 = vmatprep.subr.bf16.mxu0 %v1165
        %1415 = vmatpush1.bf16.msra.mxu0 %v1164
        %1416 = vmatprep.subr.bf16.mxu0 %v1173
        %1417 = vmatpush1.bf16.msra.mxu0 %v1172
        %1418 = vmatprep.mubr.bf16.mxu0 %v661
        %1419 = vmatmul.mubr.bf16.gmra.mrb[0].mxu0 %v660
        %v1420 = vpop.f32.mrb[0].mxu0
        %v1421 = vadd.f32 %v655, %v1420
        %v1422 = vpop.f32.mrb[0].mxu0
        %v1423 = vadd.f32 %v655, %v1422
        %v1424 = vpop.f32.mrb[0].mxu0
        %v1425 = vpop.f32.mrb[0].mxu0
        %1426 = vdwg.mxu0
        %1427 = vmatprep.subr.bf16.mxu0 %v1055
        %1428 = vmatpush1.bf16.msra.mxu0 %v1054
        %1429 = vmatprep.subr.bf16.mxu0 %v1063
        %1430 = vmatpush1.bf16.msra.mxu0 %v1062
        %1431 = vmatprep.subr.bf16.mxu0 %v1071
        %1432 = vmatpush1.bf16.msra.mxu0 %v1070
        %1433 = vmatprep.subr.bf16.mxu0 %v1079
        %1434 = vmatpush1.bf16.msra.mxu0 %v1078
        %1435 = vmatprep.subr.bf16.mxu0 %v1087
        %1436 = vmatpush1.bf16.msra.mxu0 %v1086
        %1437 = vmatprep.subr.bf16.mxu0 %v1095
        %1438 = vmatpush1.bf16.msra.mxu0 %v1094
        %1439 = vmatprep.subr.bf16.mxu0 %v1103
        %1440 = vmatpush1.bf16.msra.mxu0 %v1102
        %1441 = vmatprep.subr.bf16.mxu0 %v1111
        %1442 = vmatpush1.bf16.msra.mxu0 %v1110
        %1443 = vmatprep.subr.bf16.mxu0 %v1119
        %1444 = vmatpush1.bf16.msra.mxu0 %v1118
        %1445 = vmatprep.subr.bf16.mxu0 %v1127
        %1446 = vmatpush1.bf16.msra.mxu0 %v1126
        %1447 = vmatprep.subr.bf16.mxu0 %v1135
        %1448 = vmatpush1.bf16.msra.mxu0 %v1134
        %1449 = vmatprep.subr.bf16.mxu0 %v1143
        %1450 = vmatpush1.bf16.msra.mxu0 %v1142
        %1451 = vmatprep.subr.bf16.mxu0 %v1151
        %1452 = vmatpush1.bf16.msra.mxu0 %v1150
        %1453 = vmatprep.subr.bf16.mxu0 %v1159
        %1454 = vmatpush1.bf16.msra.mxu0 %v1158
        %1455 = vmatprep.subr.bf16.mxu0 %v1167
        %1456 = vmatpush1.bf16.msra.mxu0 %v1166
        %1457 = vmatprep.subr.bf16.mxu0 %v1175
        %1458 = vmatpush1.bf16.msra.mxu0 %v1174
        %1459 = vmatprep.mubr.bf16.mxu0 %v661
        %1460 = vmatmul.mubr.bf16.gmra.mrb[0].mxu0 %v660
        %v1461 = vpop.f32.mrb[0].mxu0
        %v1462 = vadd.f32 %v655, %v1461
        %v1463 = vpop.f32.mrb[0].mxu0
        %v1464 = vadd.f32 %v655, %v1463
        %v1465 = vpop.f32.mrb[0].mxu0
        %v1466 = vpop.f32.mrb[0].mxu0
        %1467 = vdwg.mxu0
        %1468 = vst [vmem:[%s512] sm:$0xff] %v1339
        %1469 = vst [vmem:[%s512 + $0x8] sm:$0xff] %v1341
        %1470 = vst [vmem:[%s512 + $0x10] sm:$0xff] %v1380
        %1471 = vst [vmem:[%s512 + $0x18] sm:$0xff] %v1382
        %1472 = vst [vmem:[%s512 + $0x20] sm:$0xff] %v1421
        %1473 = vst [vmem:[%s512 + $0x28] sm:$0xff] %v1423
        %1474 = vst [vmem:[%s512 + $0x30] sm:$0xff] %v1462
        %1475 = vst [vmem:[%s512 + $0x38] sm:$0xff] %v1464
        %v1476 = vadd.f32 %v1339, %v1341
        %v1477 = vadd.f32 %v1476, %v1380
        %v1478 = vadd.f32 %v1477, %v1382
        %v1479 = vadd.f32 %v1478, %v1421
        %v1480 = vadd.f32 %v1479, %v1423
        %v1481 = vadd.f32 %v1480, %v1462
        %v1482 = vadd.f32 %v1481, %v1464
        %1483 = vadd.xlane.f32.xlu0 %v1482
        %v1484 = vpop.xlane.xlu0 %1483
        %v1485 = vmul.f32 %v1339, %v1339
        %v1486 = vmul.f32 %v1341, %v1341
        %v1487 = vmul.f32 %v1380, %v1380
        %v1488 = vmul.f32 %v1382, %v1382
        %v1489 = vmul.f32 %v1421, %v1421
        %v1490 = vmul.f32 %v1423, %v1423
        %v1491 = vmul.f32 %v1462, %v1462
        %v1492 = vmul.f32 %v1464, %v1464
        %v1493 = vadd.f32 %v1485, %v1486
        %v1494 = vadd.f32 %v1493, %v1487
        %v1495 = vadd.f32 %v1494, %v1488
        %v1496 = vadd.f32 %v1495, %v1489
        %v1497 = vadd.f32 %v1496, %v1490
        %v1498 = vadd.f32 %v1497, %v1491
        %v1499 = vadd.f32 %v1498, %v1492
        %1500 = vadd.xlane.f32.xlu0 %v1499
        %v1501 = vpop.xlane.xlu0 %1500
        %1502 = vst [vmem:[%s517] sm:$0xff] %v1484
        %1503 = vst [vmem:[%s521] sm:$0xff] %v1501
        %s1504 = smul.u32 8, %s17
        %p1505 = scmp.lt.s32.totalorder %s1504, 63
        %s1506 = scalar_select %p1505, %s1504, 63
        %s1507 = smul.addr %s1506, 8
        %s1508 = scalar_lea.vmem %s3, %s1507
        %p1509 = scmp.lt.s32.totalorder %s17, 7
        %s1510 = scalar_select %p1509, %s17, 7
        %s1511 = smul.addr %s1510, 8
        %s1512 = scalar_lea.vmem %s4, %s1511
        %p1513 = scmp.lt.s32.totalorder %s17, 7
        %s1514 = scalar_select %p1513, %s17, 7
        %s1515 = smul.addr %s1514, 8
        %s1516 = scalar_lea.vmem %s5, %s1515
        // Predicated region
        $region56: #{double_conv_forward.6} parent=50 // pred_check
          %p1517 = pneg %p103
        $region57: #{double_conv_forward.6} parent=50 // pred_check_branch
          %1519 = sbr.rel (%p1517) target = $region59
        $region58: #{double_conv_forward.6} parent=50 // pred_region
          %s1520 = smul.u32 8, %s17
        $region59: #{double_conv_forward.6} parent=50 // pred_fallthru
          _
        // Predicated region
        $region60: #{double_conv_forward.6} parent=50 // pred_check
          %p1521 = pneg %p129
        $region61: #{double_conv_forward.6} parent=50 // pred_check_branch
          %1523 = sbr.rel (%p1521) target = $region63
        $region62: #{double_conv_forward.6} parent=50 // pred_region
          _
        $region63: #{double_conv_forward.6} parent=50 // pred_fallthru
          _
        // Predicated region
        $region64: #{double_conv_forward.6} parent=50 // pred_check
          %p1524 = pneg %p155
        $region65: #{double_conv_forward.6} parent=50 // pred_check_branch
          %1526 = sbr.rel (%p1524) target = $region67
        $region66: #{double_conv_forward.6} parent=50 // pred_region
          _
        $region67: #{double_conv_forward.6} parent=50 // pred_fallthru
          _
      $region51: #{double_conv_forward.6} parent=5 // pred_fallthru
        _
      %p1527 = scmp.le.s32.totalorder 2, %s12
      // Predicated region
      $region68: #{double_conv_forward.6} parent=5 // pred_check
        %p1528 = pneg %p1527
      $region69: #{double_conv_forward.6} parent=5 // pred_check_branch
        %1530 = sbr.rel (%p1528) target = $region71
      $region70: #{double_conv_forward.6} parent=5 // pred_region
        %s1531 = ssub.s32 %s12, 2
        // Predicated region
        $region72: #{double_conv_forward.6} parent=70 // pred_check
          %p1532 = pneg %p109
        $region73: #{double_conv_forward.6} parent=70 // pred_check_branch
          %1534 = sbr.rel (%p1532) target = $region75
        $region74: #{double_conv_forward.6} parent=70 // pred_region
          %s1535 = smul.u32 8, %s18
          %p1536 = scmp.lt.s32.totalorder %s1535, 63
          %s1537 = scalar_select %p1536, %s1535, 63
          %s1538 = smul.addr %s1537, 8
          %s1539 = scalar_lea.vmem %s3, %s1538
        $region75: #{double_conv_forward.6} parent=70 // pred_fallthru
          _
        // Predicated region
        $region76: #{double_conv_forward.6} parent=70 // pred_check
          %p1540 = pneg %p135
        $region77: #{double_conv_forward.6} parent=70 // pred_check_branch
          %1542 = sbr.rel (%p1540) target = $region79
        $region78: #{double_conv_forward.6} parent=70 // pred_region
          %p1543 = scmp.lt.s32.totalorder %s18, 7
          %s1544 = scalar_select %p1543, %s18, 7
          %s1545 = smul.addr %s1544, 8
          %s1546 = scalar_lea.vmem %s4, %s1545
        $region79: #{double_conv_forward.6} parent=70 // pred_fallthru
          _
        // Predicated region
        $region80: #{double_conv_forward.6} parent=70 // pred_check
          %p1547 = pneg %p161
        $region81: #{double_conv_forward.6} parent=70 // pred_check_branch
          %1549 = sbr.rel (%p1547) target = $region83
        $region82: #{double_conv_forward.6} parent=70 // pred_region
          %p1550 = scmp.lt.s32.totalorder %s18, 7
          %s1551 = scalar_select %p1550, %s18, 7
          %s1552 = smul.addr %s1551, 8
          %s1553 = scalar_lea.vmem %s5, %s1552
        $region83: #{double_conv_forward.6} parent=70 // pred_fallthru
          _
      $region71: #{double_conv_forward.6} parent=5 // pred_fallthru
        _
    $region6: #{double_conv_forward.6} parent=1 // loop_footer
      %s16 = sadd.s32 1, %s12
    $region7: #{double_conv_forward.6} parent=1 // loop_footer_branch
      %11 = sbr.rel target = $region3
    $region8: #{double_conv_forward.6} parent=1 // loop_exit
      _

</llo_original>
